<compile_context>
chip_gen: v5e
topology: v5e:2x2
jax: 0.10.0
libtpu: 0.0.40
codegen_flags: <defaults>
</compile_context>

<pallas_src>
import functools

import jax
import jax.numpy as jnp
from jax.experimental import pallas as pl
from jax.experimental.pallas import tpu as pltpu

block_size = 32
n_embd = 384
num_heads = 6
head_size = n_embd // num_heads  # 64


def _mha_kernel(x_ref, wqkv_ref, wp_ref, bp_ref, o_ref, qkv_ref, *,
                T, C, H, Dh):
    """One batch element per grid step.

    x_ref:    (1, T, C)   bf16
    wqkv_ref: (C, 3C)     bf16  (Q columns pre-scaled by C**-0.5)
    wp_ref:   (C, C)      bf16
    bp_ref:   (1, C)      f32
    o_ref:    (1, T, C)   output dtype
    qkv_ref:  (T, 3C)     bf16 VMEM scratch (fused QKV result)
    """
    x2d = x_ref[0]                                             # (T, C) bf16

    # ---- Fused QKV projection: (T, C) @ (C, 3C), bf16 operands, f32 acc ----
    # Spill straight into a bf16 scratch so the (T, 3C) f32 value does not
    # stay live across the head loop (avoids uncontrolled vreg spill traffic).
    qkv_ref[...] = jnp.dot(
        x2d, wqkv_ref[...],
        preferred_element_type=jnp.float32).astype(jnp.bfloat16)

    # ---- Causal additive bias, built once per grid step ---------------------
    row = jax.lax.broadcasted_iota(jnp.int32, (T, T), 0)
    col = jax.lax.broadcasted_iota(jnp.int32, (T, T), 1)
    bias = jnp.where(col <= row, 0.0, -1e30).astype(jnp.float32)

    # ---- Scores for every head (scale already folded into Q weights) --------
    scores = []
    for h in range(H):
        c0 = h * Dh
        q = qkv_ref[:, c0:c0 + Dh]                             # (T, Dh) bf16
        k = qkv_ref[:, C + c0:C + c0 + Dh]                     # (T, Dh) bf16
        # q @ k^T without materializing a transpose.
        s = jax.lax.dot_general(q, k, (((1,), (1,)), ((), ())),
                                preferred_element_type=jnp.float32)  # (T, T)
        scores.append(s + bias)

    # ---- One batched, numerically stable softmax over all heads -------------
    s_all = jnp.concatenate(scores, axis=0)                    # (H*T, T) f32
    s_all = s_all - jnp.max(s_all, axis=-1, keepdims=True)
    p_all = jnp.exp(s_all)
    p_all = p_all * pl.reciprocal(jnp.sum(p_all, axis=-1, keepdims=True),
                                  approx=True)
    p_all = p_all.astype(jnp.bfloat16)

    # ---- PV + per-head projection slice, accumulated into lane-dense y ------
    y = jnp.zeros((T, C), dtype=jnp.float32)
    for h in range(H):
        c0 = h * Dh
        p = p_all[h * T:(h + 1) * T, :]                        # (T, T)  bf16
        v = qkv_ref[:, 2 * C + c0:2 * C + c0 + Dh]             # (T, Dh) bf16
        out_h = jnp.dot(p, v, preferred_element_type=jnp.float32)   # (T, Dh)
        # Accumulate directly into the projection output (384-lane dense),
        # replacing the concat scratch + final (BT,C)@(C,C) matmul.
        y = y + jnp.dot(out_h.astype(jnp.bfloat16), wp_ref[c0:c0 + Dh, :],
                        preferred_element_type=jnp.float32)    # (T, C)

    y = y + bp_ref[...]                                        # (1, C) -> bcast
    o_ref[...] = y[None].astype(o_ref.dtype)


@jax.jit
def multi_head_attention(x, wq, wk, wv, wp, bp):
    """x: (B, T, C); wq/wk/wv: (H, C, Dh); wp: (C, C); bp: (1, C)."""
    B, T, C = x.shape
    H, _, Dh = wq.shape
    scale = C ** (-0.5)   # NOTE: scales by n_embd (not head_size) — matches ref.

    # Pack per-head QKV weights into one lane-dense (C, 3*C) matrix
    # (columns [0:C)=Q heads, [C:2C)=K heads, [2C:3C)=V heads), and fold the
    # attention scale into the Q columns (free host-side XLA work).
    def pack(w):  # (H, C, Dh) -> (C, H*Dh)
        return jnp.transpose(w, (1, 0, 2)).reshape(C, H * Dh)
    wqkv = jnp.concatenate([pack(wq) * scale, pack(wk), pack(wv)], axis=1)

    kernel = functools.partial(_mha_kernel, T=T, C=C, H=H, Dh=Dh)

    return pl.pallas_call(
        kernel,
        out_shape=jax.ShapeDtypeStruct((B, T, C), x.dtype),
        grid=(B,),
        in_specs=[
            pl.BlockSpec((1, T, C), lambda b: (b, 0, 0)),      # x: per batch
            pl.BlockSpec((C, 3 * C), lambda b: (0, 0)),        # wqkv: resident
            pl.BlockSpec((C, C), lambda b: (0, 0)),            # wp: resident
            pl.BlockSpec((1, C), lambda b: (0, 0)),            # bp: resident
        ],
        out_specs=pl.BlockSpec((1, T, C), lambda b: (b, 0, 0)),
        scratch_shapes=[pltpu.VMEM((T, 3 * C), jnp.bfloat16)],  # fused QKV
        compiler_params=pltpu.CompilerParams(
            dimension_semantics=("parallel",)),                 # megacore/2-TC
    )(x.astype(jnp.bfloat16), wqkv.astype(jnp.bfloat16),
      wp.astype(jnp.bfloat16), bp.astype(jnp.float32))


def _reference(x, wq, wk, wv, wp, bp):
    """Pure-JAX f32 reference mirroring the PyTorch forward (eval mode)."""
    B, T, C = x.shape
    scale = C ** (-0.5)
    mask = jnp.tril(jnp.ones((T, T), dtype=bool))
    outs = []
    for h in range(wq.shape[0]):
        q = x @ wq[h]
        k = x @ wk[h]
        v = x @ wv[h]
        wei = jnp.einsum('btd,bsd->bts', q, k) * scale
        wei = jnp.where(mask[None], wei, -jnp.inf)
        wei = jax.nn.softmax(wei, axis=-1)
        outs.append(wei @ v)
    cat = jnp.concatenate(outs, axis=-1)
    return cat @ wp + bp[0]


if __name__ == "__main__":
    B, T, C, H, Dh = 2, block_size, n_embd, num_heads, head_size

    key = jax.random.PRNGKey(0)
    kx, kq, kk, kv, kp, kb = jax.random.split(key, 6)

    # Deterministic synthetic parameters.
    # Per-head QKV weights stored as (H, C, Dh) == PyTorch Linear.weight.T per head.
    x = jax.random.normal(kx, (B, T, C), dtype=jnp.float32)
    wq = jax.random.normal(kq, (H, C, Dh), dtype=jnp.float32) * 0.02
    wk = jax.random.normal(kk, (H, C, Dh), dtype=jnp.float32) * 0.02
    wv = jax.random.normal(kv, (H, C, Dh), dtype=jnp.float32) * 0.02
    # Projection stored as (C_in, C_out) == PyTorch proj.weight.T
    wp = jax.random.normal(kp, (C, C), dtype=jnp.float32) * 0.02
    bp = (jax.random.normal(kb, (1, C), dtype=jnp.float32) * 0.02)

    out = multi_head_attention(x, wq, wk, wv, wp, bp)
    out = jax.block_until_ready(out)

    ref = _reference(x, wq, wk, wv, wp, bp)
    assert out.shape == (B, T, C)
    # bf16 MXU operands + approx reciprocal -> looser tolerance than pure f32.
    assert jnp.allclose(out, ref, rtol=2e-2, atol=2e-2), (
        f"max abs err = {jnp.max(jnp.abs(out - ref))}")

    print("KERNEL_OK")
</pallas_src>

<mosaic_0001>
module attributes {stable_mosaic.version = 11 : i64} {
  func.func @_mha_kernel(%arg0: i32, %arg1: memref<1x32x384xbf16, #tpu.memory_space<vmem>>, %arg2: memref<384x1152xbf16, #tpu.memory_space<vmem>>, %arg3: memref<384x384xbf16, #tpu.memory_space<vmem>>, %arg4: memref<1x384xf32, #tpu.memory_space<vmem>>, %arg5: memref<1x32x384xf32, #tpu.memory_space<vmem>>, %arg6: memref<32x1152xbf16, #tpu.memory_space<vmem>>) attributes {dimension_semantics = [#tpu.dimension_semantics<parallel>], iteration_bounds = array<i64: 2>, scalar_prefetch = 0 : i64, scratch_operands = 1 : i64, tpu.core_type = #tpu.core_type<tc>, window_params = [{transform_indices = @transform_0, window_bounds = array<i64: 1, 32, 384>}, {pipeline_mode = #tpu.pipeline_mode<synchronous>, transform_indices = @transform_1, window_bounds = array<i64: 384, 1152>}, {pipeline_mode = #tpu.pipeline_mode<synchronous>, transform_indices = @transform_2, window_bounds = array<i64: 384, 384>}, {pipeline_mode = #tpu.pipeline_mode<synchronous>, transform_indices = @transform_3, window_bounds = array<i64: 1, 384>}, {transform_indices = @transform_4, window_bounds = array<i64: 1, 32, 384>}]} {
    %c0 = arith.constant 0 : index
    %c0_0 = arith.constant 0 : index
    %c0_1 = arith.constant 0 : index
    %0 = vector.load %arg1[%c0, %c0_0, %c0_1] : memref<1x32x384xbf16, #tpu.memory_space<vmem>>, vector<1x32x384xbf16>
    %1 = vector.shape_cast %0 : vector<1x32x384xbf16> to vector<32x384xbf16>
    %c0_2 = arith.constant 0 : index
    %c0_3 = arith.constant 0 : index
    %2 = vector.load %arg2[%c0_2, %c0_3] : memref<384x1152xbf16, #tpu.memory_space<vmem>>, vector<384x1152xbf16>
    %cst = arith.constant dense<0.000000e+00> : vector<32x1152xf32>
    %3 = tpu.matmul %1, %2, %cst {dimension_numbers = #tpu.dot_dimension_numbers<[1], [0], [0], [1], [0, 0, 1, 1], [], []>} : vector<32x384xbf16>, vector<384x1152xbf16>, vector<32x1152xf32> -> vector<32x1152xf32>
    %4 = arith.truncf %3 : vector<32x1152xf32> to vector<32x1152xbf16>
    %c0_4 = arith.constant 0 : index
    %c0_5 = arith.constant 0 : index
    %5 = vector.load %arg6[%c0_4, %c0_5] : memref<32x1152xbf16, #tpu.memory_space<vmem>>, vector<32x1152xbf16>
    tpu.vector_store %arg6[%c0_4, %c0_5], %4 {strides = array<i32>} : memref<32x1152xbf16, #tpu.memory_space<vmem>>, vector<32x1152xbf16>,
    %6 = tpu.iota {dimensions = array<i32: 0>} : vector<32x32xi32>
    %7 = tpu.iota {dimensions = array<i32: 1>} : vector<32x32xi32>
    %8 = arith.cmpi sle, %7, %6 : vector<32x32xi32>
    %cst_6 = arith.constant 0.000000e+00 : f32
    %cst_7 = arith.constant -1.000000e+30 : f32
    %9 = vector.broadcast %cst_6 : f32 to vector<32x32xf32>
    %10 = vector.broadcast %cst_7 : f32 to vector<32x32xf32>
    %11 = arith.select %8, %9, %10 : vector<32x32xi1>, vector<32x32xf32>
    %c0_8 = arith.constant 0 : index
    %c0_9 = arith.constant 0 : index
    %12 = vector.load %arg6[%c0_8, %c0_9] : memref<32x1152xbf16, #tpu.memory_space<vmem>>, vector<32x64xbf16>
    %c0_10 = arith.constant 0 : index
    %c384 = arith.constant 384 : index
    %13 = vector.load %arg6[%c0_10, %c384] : memref<32x1152xbf16, #tpu.memory_space<vmem>>, vector<32x64xbf16>
    %cst_11 = arith.constant dense<0.000000e+00> : vector<32x32xf32>
    %14 = tpu.matmul %12, %13, %cst_11 {dimension_numbers = #tpu.dot_dimension_numbers<[1], [1], [0], [0], [0, 0, 1, 0], [], []>} : vector<32x64xbf16>, vector<32x64xbf16>, vector<32x32xf32> -> vector<32x32xf32>
    %15 = arith.addf %14, %11 : vector<32x32xf32>
    %c0_12 = arith.constant 0 : index
    %c64 = arith.constant 64 : index
    %16 = vector.load %arg6[%c0_12, %c64] : memref<32x1152xbf16, #tpu.memory_space<vmem>>, vector<32x64xbf16>
    %c0_13 = arith.constant 0 : index
    %c448 = arith.constant 448 : index
    %17 = vector.load %arg6[%c0_13, %c448] : memref<32x1152xbf16, #tpu.memory_space<vmem>>, vector<32x64xbf16>
    %cst_14 = arith.constant dense<0.000000e+00> : vector<32x32xf32>
    %18 = tpu.matmul %16, %17, %cst_14 {dimension_numbers = #tpu.dot_dimension_numbers<[1], [1], [0], [0], [0, 0, 1, 0], [], []>} : vector<32x64xbf16>, vector<32x64xbf16>, vector<32x32xf32> -> vector<32x32xf32>
    %19 = arith.addf %18, %11 : vector<32x32xf32>
    %c0_15 = arith.constant 0 : index
    %c128 = arith.constant 128 : index
    %20 = vector.load %arg6[%c0_15, %c128] : memref<32x1152xbf16, #tpu.memory_space<vmem>>, vector<32x64xbf16>
    %c0_16 = arith.constant 0 : index
    %c512 = arith.constant 512 : index
    %21 = vector.load %arg6[%c0_16, %c512] : memref<32x1152xbf16, #tpu.memory_space<vmem>>, vector<32x64xbf16>
    %cst_17 = arith.constant dense<0.000000e+00> : vector<32x32xf32>
    %22 = tpu.matmul %20, %21, %cst_17 {dimension_numbers = #tpu.dot_dimension_numbers<[1], [1], [0], [0], [0, 0, 1, 0], [], []>} : vector<32x64xbf16>, vector<32x64xbf16>, vector<32x32xf32> -> vector<32x32xf32>
    %23 = arith.addf %22, %11 : vector<32x32xf32>
    %c0_18 = arith.constant 0 : index
    %c192 = arith.constant 192 : index
    %24 = vector.load %arg6[%c0_18, %c192] : memref<32x1152xbf16, #tpu.memory_space<vmem>>, vector<32x64xbf16>
    %c0_19 = arith.constant 0 : index
    %c576 = arith.constant 576 : index
    %25 = vector.load %arg6[%c0_19, %c576] : memref<32x1152xbf16, #tpu.memory_space<vmem>>, vector<32x64xbf16>
    %cst_20 = arith.constant dense<0.000000e+00> : vector<32x32xf32>
    %26 = tpu.matmul %24, %25, %cst_20 {dimension_numbers = #tpu.dot_dimension_numbers<[1], [1], [0], [0], [0, 0, 1, 0], [], []>} : vector<32x64xbf16>, vector<32x64xbf16>, vector<32x32xf32> -> vector<32x32xf32>
    %27 = arith.addf %26, %11 : vector<32x32xf32>
    %c0_21 = arith.constant 0 : index
    %c256 = arith.constant 256 : index
    %28 = vector.load %arg6[%c0_21, %c256] : memref<32x1152xbf16, #tpu.memory_space<vmem>>, vector<32x64xbf16>
    %c0_22 = arith.constant 0 : index
    %c640 = arith.constant 640 : index
    %29 = vector.load %arg6[%c0_22, %c640] : memref<32x1152xbf16, #tpu.memory_space<vmem>>, vector<32x64xbf16>
    %cst_23 = arith.constant dense<0.000000e+00> : vector<32x32xf32>
    %30 = tpu.matmul %28, %29, %cst_23 {dimension_numbers = #tpu.dot_dimension_numbers<[1], [1], [0], [0], [0, 0, 1, 0], [], []>} : vector<32x64xbf16>, vector<32x64xbf16>, vector<32x32xf32> -> vector<32x32xf32>
    %31 = arith.addf %30, %11 : vector<32x32xf32>
    %c0_24 = arith.constant 0 : index
    %c320 = arith.constant 320 : index
    %32 = vector.load %arg6[%c0_24, %c320] : memref<32x1152xbf16, #tpu.memory_space<vmem>>, vector<32x64xbf16>
    %c0_25 = arith.constant 0 : index
    %c704 = arith.constant 704 : index
    %33 = vector.load %arg6[%c0_25, %c704] : memref<32x1152xbf16, #tpu.memory_space<vmem>>, vector<32x64xbf16>
    %cst_26 = arith.constant dense<0.000000e+00> : vector<32x32xf32>
    %34 = tpu.matmul %32, %33, %cst_26 {dimension_numbers = #tpu.dot_dimension_numbers<[1], [1], [0], [0], [0, 0, 1, 0], [], []>} : vector<32x64xbf16>, vector<32x64xbf16>, vector<32x32xf32> -> vector<32x32xf32>
    %35 = arith.addf %34, %11 : vector<32x32xf32>
    %36 = tpu.concatenate %15, %19, %23, %27, %31, %35 in 0 : vector<32x32xf32>, vector<32x32xf32>, vector<32x32xf32>, vector<32x32xf32>, vector<32x32xf32>, vector<32x32xf32> -> vector<192x32xf32>
    %cst_27 = arith.constant dense<0xFF800000> : vector<192xf32>
    %37 = vector.multi_reduction <maximumf>, %36, %cst_27 [1] : vector<192x32xf32> to vector<192xf32>
    %38 = vector.shape_cast %37 : vector<192xf32> to vector<192x1xf32>
    %39 = vector.broadcast %38 : vector<192x1xf32> to vector<192x32xf32>
    %40 = arith.subf %36, %39 : vector<192x32xf32>
    %41 = math.exp %40 : vector<192x32xf32>
    %cst_28 = arith.constant dense<0.000000e+00> : vector<192xf32>
    %42 = vector.multi_reduction <add>, %41, %cst_28 [1] : vector<192x32xf32> to vector<192xf32>
    %43 = vector.shape_cast %42 : vector<192xf32> to vector<192x1xf32>
    %44 = tpu.reciprocal %43 {approx = true} : vector<192x1xf32> -> vector<192x1xf32>
    %45 = vector.broadcast %44 : vector<192x1xf32> to vector<192x32xf32>
    %46 = arith.mulf %41, %45 : vector<192x32xf32>
    %47 = arith.truncf %46 : vector<192x32xf32> to vector<192x32xbf16>
    %cst_29 = arith.constant 0.000000e+00 : f32
    %48 = vector.broadcast %cst_29 : f32 to vector<32x384xf32>
    %49 = vector.extract_strided_slice %47 {offsets = [0, 0], sizes = [32, 32], strides = [1, 1]} : vector<192x32xbf16> to vector<32x32xbf16>
    %c0_30 = arith.constant 0 : index
    %c768 = arith.constant 768 : index
    %50 = vector.load %arg6[%c0_30, %c768] : memref<32x1152xbf16, #tpu.memory_space<vmem>>, vector<32x64xbf16>
    %cst_31 = arith.constant dense<0.000000e+00> : vector<32x64xf32>
    %51 = tpu.matmul %49, %50, %cst_31 {dimension_numbers = #tpu.dot_dimension_numbers<[1], [0], [0], [1], [0, 0, 1, 1], [], []>} : vector<32x32xbf16>, vector<32x64xbf16>, vector<32x64xf32> -> vector<32x64xf32>
    %52 = arith.truncf %51 : vector<32x64xf32> to vector<32x64xbf16>
    %c0_32 = arith.constant 0 : index
    %c0_33 = arith.constant 0 : index
    %53 = vector.load %arg3[%c0_32, %c0_33] : memref<384x384xbf16, #tpu.memory_space<vmem>>, vector<64x384xbf16>
    %cst_34 = arith.constant dense<0.000000e+00> : vector<32x384xf32>
    %54 = tpu.matmul %52, %53, %cst_34 {dimension_numbers = #tpu.dot_dimension_numbers<[1], [0], [0], [1], [0, 0, 1, 1], [], []>} : vector<32x64xbf16>, vector<64x384xbf16>, vector<32x384xf32> -> vector<32x384xf32>
    %55 = arith.addf %48, %54 : vector<32x384xf32>
    %56 = vector.extract_strided_slice %47 {offsets = [32, 0], sizes = [32, 32], strides = [1, 1]} : vector<192x32xbf16> to vector<32x32xbf16>
    %c0_35 = arith.constant 0 : index
    %c832 = arith.constant 832 : index
    %57 = vector.load %arg6[%c0_35, %c832] : memref<32x1152xbf16, #tpu.memory_space<vmem>>, vector<32x64xbf16>
    %cst_36 = arith.constant dense<0.000000e+00> : vector<32x64xf32>
    %58 = tpu.matmul %56, %57, %cst_36 {dimension_numbers = #tpu.dot_dimension_numbers<[1], [0], [0], [1], [0, 0, 1, 1], [], []>} : vector<32x32xbf16>, vector<32x64xbf16>, vector<32x64xf32> -> vector<32x64xf32>
    %59 = arith.truncf %58 : vector<32x64xf32> to vector<32x64xbf16>
    %c64_37 = arith.constant 64 : index
    %c0_38 = arith.constant 0 : index
    %60 = vector.load %arg3[%c64_37, %c0_38] : memref<384x384xbf16, #tpu.memory_space<vmem>>, vector<64x384xbf16>
    %cst_39 = arith.constant dense<0.000000e+00> : vector<32x384xf32>
    %61 = tpu.matmul %59, %60, %cst_39 {dimension_numbers = #tpu.dot_dimension_numbers<[1], [0], [0], [1], [0, 0, 1, 1], [], []>} : vector<32x64xbf16>, vector<64x384xbf16>, vector<32x384xf32> -> vector<32x384xf32>
    %62 = arith.addf %55, %61 : vector<32x384xf32>
    %63 = vector.extract_strided_slice %47 {offsets = [64, 0], sizes = [32, 32], strides = [1, 1]} : vector<192x32xbf16> to vector<32x32xbf16>
    %c0_40 = arith.constant 0 : index
    %c896 = arith.constant 896 : index
    %64 = vector.load %arg6[%c0_40, %c896] : memref<32x1152xbf16, #tpu.memory_space<vmem>>, vector<32x64xbf16>
    %cst_41 = arith.constant dense<0.000000e+00> : vector<32x64xf32>
    %65 = tpu.matmul %63, %64, %cst_41 {dimension_numbers = #tpu.dot_dimension_numbers<[1], [0], [0], [1], [0, 0, 1, 1], [], []>} : vector<32x32xbf16>, vector<32x64xbf16>, vector<32x64xf32> -> vector<32x64xf32>
    %66 = arith.truncf %65 : vector<32x64xf32> to vector<32x64xbf16>
    %c128_42 = arith.constant 128 : index
    %c0_43 = arith.constant 0 : index
    %67 = vector.load %arg3[%c128_42, %c0_43] : memref<384x384xbf16, #tpu.memory_space<vmem>>, vector<64x384xbf16>
    %cst_44 = arith.constant dense<0.000000e+00> : vector<32x384xf32>
    %68 = tpu.matmul %66, %67, %cst_44 {dimension_numbers = #tpu.dot_dimension_numbers<[1], [0], [0], [1], [0, 0, 1, 1], [], []>} : vector<32x64xbf16>, vector<64x384xbf16>, vector<32x384xf32> -> vector<32x384xf32>
    %69 = arith.addf %62, %68 : vector<32x384xf32>
    %70 = vector.extract_strided_slice %47 {offsets = [96, 0], sizes = [32, 32], strides = [1, 1]} : vector<192x32xbf16> to vector<32x32xbf16>
    %c0_45 = arith.constant 0 : index
    %c960 = arith.constant 960 : index
    %71 = vector.load %arg6[%c0_45, %c960] : memref<32x1152xbf16, #tpu.memory_space<vmem>>, vector<32x64xbf16>
    %cst_46 = arith.constant dense<0.000000e+00> : vector<32x64xf32>
    %72 = tpu.matmul %70, %71, %cst_46 {dimension_numbers = #tpu.dot_dimension_numbers<[1], [0], [0], [1], [0, 0, 1, 1], [], []>} : vector<32x32xbf16>, vector<32x64xbf16>, vector<32x64xf32> -> vector<32x64xf32>
    %73 = arith.truncf %72 : vector<32x64xf32> to vector<32x64xbf16>
    %c192_47 = arith.constant 192 : index
    %c0_48 = arith.constant 0 : index
    %74 = vector.load %arg3[%c192_47, %c0_48] : memref<384x384xbf16, #tpu.memory_space<vmem>>, vector<64x384xbf16>
    %cst_49 = arith.constant dense<0.000000e+00> : vector<32x384xf32>
    %75 = tpu.matmul %73, %74, %cst_49 {dimension_numbers = #tpu.dot_dimension_numbers<[1], [0], [0], [1], [0, 0, 1, 1], [], []>} : vector<32x64xbf16>, vector<64x384xbf16>, vector<32x384xf32> -> vector<32x384xf32>
    %76 = arith.addf %69, %75 : vector<32x384xf32>
    %77 = vector.extract_strided_slice %47 {offsets = [128, 0], sizes = [32, 32], strides = [1, 1]} : vector<192x32xbf16> to vector<32x32xbf16>
    %c0_50 = arith.constant 0 : index
    %c1024 = arith.constant 1024 : index
    %78 = vector.load %arg6[%c0_50, %c1024] : memref<32x1152xbf16, #tpu.memory_space<vmem>>, vector<32x64xbf16>
    %cst_51 = arith.constant dense<0.000000e+00> : vector<32x64xf32>
    %79 = tpu.matmul %77, %78, %cst_51 {dimension_numbers = #tpu.dot_dimension_numbers<[1], [0], [0], [1], [0, 0, 1, 1], [], []>} : vector<32x32xbf16>, vector<32x64xbf16>, vector<32x64xf32> -> vector<32x64xf32>
    %80 = arith.truncf %79 : vector<32x64xf32> to vector<32x64xbf16>
    %c256_52 = arith.constant 256 : index
    %c0_53 = arith.constant 0 : index
    %81 = vector.load %arg3[%c256_52, %c0_53] : memref<384x384xbf16, #tpu.memory_space<vmem>>, vector<64x384xbf16>
    %cst_54 = arith.constant dense<0.000000e+00> : vector<32x384xf32>
    %82 = tpu.matmul %80, %81, %cst_54 {dimension_numbers = #tpu.dot_dimension_numbers<[1], [0], [0], [1], [0, 0, 1, 1], [], []>} : vector<32x64xbf16>, vector<64x384xbf16>, vector<32x384xf32> -> vector<32x384xf32>
    %83 = arith.addf %76, %82 : vector<32x384xf32>
    %84 = vector.extract_strided_slice %47 {offsets = [160, 0], sizes = [32, 32], strides = [1, 1]} : vector<192x32xbf16> to vector<32x32xbf16>
    %c0_55 = arith.constant 0 : index
    %c1088 = arith.constant 1088 : index
    %85 = vector.load %arg6[%c0_55, %c1088] : memref<32x1152xbf16, #tpu.memory_space<vmem>>, vector<32x64xbf16>
    %cst_56 = arith.constant dense<0.000000e+00> : vector<32x64xf32>
    %86 = tpu.matmul %84, %85, %cst_56 {dimension_numbers = #tpu.dot_dimension_numbers<[1], [0], [0], [1], [0, 0, 1, 1], [], []>} : vector<32x32xbf16>, vector<32x64xbf16>, vector<32x64xf32> -> vector<32x64xf32>
    %87 = arith.truncf %86 : vector<32x64xf32> to vector<32x64xbf16>
    %c320_57 = arith.constant 320 : index
    %c0_58 = arith.constant 0 : index
    %88 = vector.load %arg3[%c320_57, %c0_58] : memref<384x384xbf16, #tpu.memory_space<vmem>>, vector<64x384xbf16>
    %cst_59 = arith.constant dense<0.000000e+00> : vector<32x384xf32>
    %89 = tpu.matmul %87, %88, %cst_59 {dimension_numbers = #tpu.dot_dimension_numbers<[1], [0], [0], [1], [0, 0, 1, 1], [], []>} : vector<32x64xbf16>, vector<64x384xbf16>, vector<32x384xf32> -> vector<32x384xf32>
    %90 = arith.addf %83, %89 : vector<32x384xf32>
    %c0_60 = arith.constant 0 : index
    %c0_61 = arith.constant 0 : index
    %91 = vector.load %arg4[%c0_60, %c0_61] : memref<1x384xf32, #tpu.memory_space<vmem>>, vector<1x384xf32>
    %92 = vector.broadcast %91 : vector<1x384xf32> to vector<32x384xf32>
    %93 = arith.addf %90, %92 : vector<32x384xf32>
    %94 = vector.shape_cast %93 : vector<32x384xf32> to vector<1x32x384xf32>
    %c0_62 = arith.constant 0 : index
    %c0_63 = arith.constant 0 : index
    %c0_64 = arith.constant 0 : index
    %95 = vector.load %arg5[%c0_62, %c0_63, %c0_64] : memref<1x32x384xf32, #tpu.memory_space<vmem>>, vector<1x32x384xf32>
    tpu.vector_store %arg5[%c0_62, %c0_63, %c0_64], %94 {strides = array<i32>} : memref<1x32x384xf32, #tpu.memory_space<vmem>>, vector<1x32x384xf32>,
    return
  }
  func.func @transform_0(%arg0: i32) -> (i32, i32, i32) {
    %c0_i32 = arith.constant 0 : i32
    %c0_i32_0 = arith.constant 0 : i32
    %c0_i32_1 = arith.constant 0 : i32
    return %arg0, %c0_i32, %c0_i32_0 : i32, i32, i32
  }
  func.func @transform_1(%arg0: i32) -> (i32, i32) {
    %c0_i32 = arith.constant 0 : i32
    %c0_i32_0 = arith.constant 0 : i32
    %c0_i32_1 = arith.constant 0 : i32
    return %c0_i32, %c0_i32_0 : i32, i32
  }
  func.func @transform_2(%arg0: i32) -> (i32, i32) {
    %c0_i32 = arith.constant 0 : i32
    %c0_i32_0 = arith.constant 0 : i32
    %c0_i32_1 = arith.constant 0 : i32
    return %c0_i32, %c0_i32_0 : i32, i32
  }
  func.func @transform_3(%arg0: i32) -> (i32, i32) {
    %c0_i32 = arith.constant 0 : i32
    %c0_i32_0 = arith.constant 0 : i32
    %c0_i32_1 = arith.constant 0 : i32
    return %c0_i32, %c0_i32_0 : i32, i32
  }
  func.func @transform_4(%arg0: i32) -> (i32, i32, i32) {
    %c0_i32 = arith.constant 0 : i32
    %c0_i32_0 = arith.constant 0 : i32
    %c0_i32_1 = arith.constant 0 : i32
    return %arg0, %c0_i32, %c0_i32_0 : i32, i32, i32
  }
}

</mosaic_0001>

<llo_original>
// kernel: multi_head_attention.1
$region0: #{multi_head_attention.1}
  #allocation0 [shape = 'u32[]', space=smem, size = 0x4, offset = 0x4, fixed_abs, tag = 'smem constant byte address 0x4 - core index']
  #allocation1 [shape = 'u32[72,128]{1,0:T(1,128)}', space=vmem, size = 0x9000, scoped, tag = 'internal scratch']
  #allocation2 [shape = 'bf16[32,1152]{1,0:T(8,128)(2,1)}', space=vmem, size = 0x12000, scoped, tag = 'scratch operand']
  %s0 = inlined_call_operand.vmem [shape: bf16[2,32,384], index: 0, kind: input, shape index: {}]
  %s1 = inlined_call_operand.vmem [shape: bf16[384,1152], index: 1, kind: input, shape index: {}]
  %s2 = inlined_call_operand.vmem [shape: bf16[384,384], index: 2, kind: input, shape index: {}]
  %s3 = inlined_call_operand.vmem [shape: f32[1,384], index: 3, kind: input, shape index: {}]
  %s4 = inlined_call_operand.hbm [shape: f32[2,32,384], index: 4, kind: output, shape index: {}]
  %s5 = sld [smem:[#allocation0]]
  $region49: #{multi_head_attention.1} parent=0
    _
  %s7 = ssub.s32 1, %s5
  %s8 = scalar_select 0, %s7, %s5
  $region1: #{multi_head_attention.1} parent=0
    #allocation3 [shape = 'u8[98304]{0}', space=vmem, size = 0x18000, scoped, tag = 'output window, operand 0']
    #allocation4 [shape = 's32[2]{0}', space=sflag, size = 0x8, scoped, tag = 'scoped memory for multi_head_attention.1']
    %9 = vsyncpa [#allocation4], 0
    %s10 = scalar_lea.sflag [#allocation4], 1
    %11 = vsyncpa %s10, 0
    loop: start=0, step=1, limit=4
    $region2: #{multi_head_attention.1} parent=1 // loop_pre_header
      _
    $region3: #{multi_head_attention.1} parent=1 // loop_header
      %s13 = sphi 0, %s17
      %p14 = scmp.ge.s32.totalorder %s13, 4
      %s23 = sphi 0, %s25
      %s26 = sphi 0, %s23
      %s27 = sphi 0, %s26
      %s43 = sphi 0, %s27
      %s47 = sphi 0, %s47
      %s49 = sphi 0, %s47
      %s50 = sphi 0, %s49
      %s64 = sphi 0, %s50
      %s68 = sphi 0, %s68
      %s70 = sphi 0, %s68
      %s71 = sphi 0, %s70
      %s85 = sphi 0, %s71
      %s89 = sphi 0, %s89
      %s91 = sphi 0, %s89
      %s92 = sphi 0, %s91
      %s106 = sphi 0, %s92
      %s112 = sphi 0, %s114
      %s115 = sphi 0, %s112
      %s116 = sphi 0, %s115
      %s132 = sphi 0, %s116
    $region4: #{multi_head_attention.1} parent=1 // loop_header_branch
      %16 = sbr.rel (%p14) target = $region8
    $region5: #{multi_head_attention.1} parent=1 // loop_body
      %s18 = ssub.s32 %s13, 1
      %s19 = ssub.s32 %s13, 2
      %s20 = sadd.s32 %s13, 1
      %s21 = ssub.s32 %s13, %s20
      %p22 = scmp.eq.s32.totalorder %s21, 0
      %s24 = sadd.s32 %s23, 1
      %s25 = scalar_select %p22, %s23, %s24
      %p28 = pneg %p22
      %p29 = scmp.eq.s32.totalorder %s13, 1
      %p30 = por %p28, %p29
      %p31 = scmp.ne.s32.totalorder %s23, %s26
      %p32 = scmp.eq.s32.totalorder %s13, 0
      %p33 = por %p31, %p32
      %p34 = scmp.ne.s32.totalorder %s23, %s26
      %p35 = scmp.eq.s32.totalorder %s18, 1
      %p36 = por %p34, %p35
      %p37 = scmp.ne.s32.totalorder %s26, %s27
      %p38 = scmp.eq.s32.totalorder %s18, 0
      %p39 = por %p37, %p38
      %p40 = scmp.ne.s32.totalorder %s26, %s27
      %p41 = scmp.eq.s32.totalorder %s19, 1
      %p42 = por %p40, %p41
      %p44 = scmp.ne.s32.totalorder %s27, %s43
      %p45 = scmp.eq.s32.totalorder %s19, 0
      %p46 = por %p44, %p45
      %s48 = sadd.s32 %s47, 1
      %p51 = scmp.eq.s32.totalorder %s13, 1
      %p52 = scmp.ne.s32.totalorder %s47, %s49
      %p53 = scmp.eq.s32.totalorder %s13, 0
      %p54 = por %p52, %p53
      %p55 = scmp.ne.s32.totalorder %s47, %s49
      %p56 = scmp.eq.s32.totalorder %s18, 1
      %p57 = por %p55, %p56
      %p58 = scmp.ne.s32.totalorder %s49, %s50
      %p59 = scmp.eq.s32.totalorder %s18, 0
      %p60 = por %p58, %p59
      %p61 = scmp.ne.s32.totalorder %s49, %s50
      %p62 = scmp.eq.s32.totalorder %s19, 1
      %p63 = por %p61, %p62
      %p65 = scmp.ne.s32.totalorder %s50, %s64
      %p66 = scmp.eq.s32.totalorder %s19, 0
      %p67 = por %p65, %p66
      %s69 = sadd.s32 %s68, 1
      %p72 = scmp.eq.s32.totalorder %s13, 1
      %p73 = scmp.ne.s32.totalorder %s68, %s70
      %p74 = scmp.eq.s32.totalorder %s13, 0
      %p75 = por %p73, %p74
      %p76 = scmp.ne.s32.totalorder %s68, %s70
      %p77 = scmp.eq.s32.totalorder %s18, 1
      %p78 = por %p76, %p77
      %p79 = scmp.ne.s32.totalorder %s70, %s71
      %p80 = scmp.eq.s32.totalorder %s18, 0
      %p81 = por %p79, %p80
      %p82 = scmp.ne.s32.totalorder %s70, %s71
      %p83 = scmp.eq.s32.totalorder %s19, 1
      %p84 = por %p82, %p83
      %p86 = scmp.ne.s32.totalorder %s71, %s85
      %p87 = scmp.eq.s32.totalorder %s19, 0
      %p88 = por %p86, %p87
      %s90 = sadd.s32 %s89, 1
      %p93 = scmp.eq.s32.totalorder %s13, 1
      %p94 = scmp.ne.s32.totalorder %s89, %s91
      %p95 = scmp.eq.s32.totalorder %s13, 0
      %p96 = por %p94, %p95
      %p97 = scmp.ne.s32.totalorder %s89, %s91
      %p98 = scmp.eq.s32.totalorder %s18, 1
      %p99 = por %p97, %p98
      %p100 = scmp.ne.s32.totalorder %s91, %s92
      %p101 = scmp.eq.s32.totalorder %s18, 0
      %p102 = por %p100, %p101
      %p103 = scmp.ne.s32.totalorder %s91, %s92
      %p104 = scmp.eq.s32.totalorder %s19, 1
      %p105 = por %p103, %p104
      %p107 = scmp.ne.s32.totalorder %s92, %s106
      %p108 = scmp.eq.s32.totalorder %s19, 0
      %p109 = por %p107, %p108
      %s110 = ssub.s32 %s13, %s20
      %p111 = scmp.eq.s32.totalorder %s110, 0
      %s113 = sadd.s32 %s112, 1
      %s114 = scalar_select %p111, %s112, %s113
      %p117 = pneg %p111
      %p118 = scmp.eq.s32.totalorder %s13, 1
      %p119 = por %p117, %p118
      %p120 = scmp.ne.s32.totalorder %s112, %s115
      %p121 = scmp.eq.s32.totalorder %s13, 0
      %p122 = por %p120, %p121
      %p123 = scmp.ne.s32.totalorder %s112, %s115
      %p124 = scmp.eq.s32.totalorder %s18, 1
      %p125 = por %p123, %p124
      %p126 = scmp.ne.s32.totalorder %s115, %s116
      %p127 = scmp.eq.s32.totalorder %s18, 0
      %p128 = por %p126, %p127
      %p129 = scmp.ne.s32.totalorder %s115, %s116
      %p130 = scmp.eq.s32.totalorder %s19, 1
      %p131 = por %p129, %p130
      %p133 = scmp.ne.s32.totalorder %s116, %s132
      %p134 = scmp.eq.s32.totalorder %s19, 0
      %p135 = por %p133, %p134
      %p136 = scmp.le.s32.totalorder 1, %s13
      %p137 = scmp.lt.s32.totalorder %s13, 3
      %p138 = pnand %p136, %p137
      %p139 = pneg %p138
      // Predicated region
      $region9: #{multi_head_attention.1} parent=5 // pred_check
        _
      $region10: #{multi_head_attention.1} parent=5 // pred_check_branch
        %141 = sbr.rel (%p138) target = $region12
      $region11: #{multi_head_attention.1} parent=5 // pred_region
        %s142 = ssub.s32 %s13, 1
        // Predicated region
        $region13: #{multi_head_attention.1} parent=11 // pred_check
          %p143 = pneg %p60
        $region14: #{multi_head_attention.1} parent=11 // pred_check_branch
          %145 = sbr.rel (%p143) target = $region16
        $region15: #{multi_head_attention.1} parent=11 // pred_region
          _
        $region16: #{multi_head_attention.1} parent=11 // pred_fallthru
          _
        // Predicated region
        $region17: #{multi_head_attention.1} parent=11 // pred_check
          %p146 = pneg %p81
        $region18: #{multi_head_attention.1} parent=11 // pred_check_branch
          %148 = sbr.rel (%p146) target = $region20
        $region19: #{multi_head_attention.1} parent=11 // pred_region
          _
        $region20: #{multi_head_attention.1} parent=11 // pred_fallthru
          _
        // Predicated region
        $region21: #{multi_head_attention.1} parent=11 // pred_check
          %p149 = pneg %p102
        $region22: #{multi_head_attention.1} parent=11 // pred_check_branch
          %151 = sbr.rel (%p149) target = $region24
        $region23: #{multi_head_attention.1} parent=11 // pred_region
          _
        $region24: #{multi_head_attention.1} parent=11 // pred_fallthru
          _
      $region12: #{multi_head_attention.1} parent=5 // pred_fallthru
        _
      %p152 = scmp.lt.s32.totalorder %s13, 2
      // Predicated region
      $region25: #{multi_head_attention.1} parent=5 // pred_check
        %p153 = pneg %p152
      $region26: #{multi_head_attention.1} parent=5 // pred_check_branch
        %155 = sbr.rel (%p153) target = $region28
      $region27: #{multi_head_attention.1} parent=5 // pred_region
        // Predicated region
        $region29: #{multi_head_attention.1} parent=27 // pred_check
          %p156 = pneg %p33
        $region30: #{multi_head_attention.1} parent=27 // pred_check_branch
          %158 = sbr.rel (%p156) target = $region32
        $region31: #{multi_head_attention.1} parent=27 // pred_region
          %p159 = scmp.lt.s32.totalorder %s13, 1
          %s160 = scalar_select %p159, %s13, 1
          %s161 = smul.addr %s160, 12
          %s162 = smul.addr %s161, 4
          %s163 = scalar_lea.vmem %s0, %s162
        $region32: #{multi_head_attention.1} parent=27 // pred_fallthru
          _
      $region28: #{multi_head_attention.1} parent=5 // pred_fallthru
        _
      %p164 = scmp.le.s32.totalorder 1, %s13
      %p165 = scmp.lt.s32.totalorder %s13, 3
      %p166 = pnand %p164, %p165
      %p167 = pneg %p166
      // Predicated region
      $region33: #{multi_head_attention.1} parent=5 // pred_check
        _
      $region34: #{multi_head_attention.1} parent=5 // pred_check_branch
        %169 = sbr.rel (%p166) target = $region36
      $region35: #{multi_head_attention.1} parent=5 // pred_region
        %s170 = ssub.s32 %s13, 1
        %p171 = scmp.lt.s32.totalorder %s18, 1
        %s172 = scalar_select %p171, %s18, 1
        %s173 = smul.addr %s172, 12
        %s174 = smul.addr %s173, 4
        %s175 = scalar_lea.vmem %s0, %s174
        %p176 = pneg %p39
        %p177 = pneg %p36
        %p178 = pneg %p60
        %p179 = pneg %p57
        %p180 = pneg %p81
        %p181 = pneg %p78
        %p182 = pneg %p102
        %p183 = pneg %p99
        %p184 = pneg %p128
        %p185 = pneg %p125
        %s186 = sand.u32 %s115, 1
        %s187 = scalar_lea.sflag [#allocation4], %s186
        %s188 = sand.u32 %s115, 1
        %s189 = smul.addr %s188, 96
        %s190 = scalar_lea.vmem [#allocation3], %s189
        %p191 = scmp.lt.s32.totalorder %s18, 1
        %s192 = scalar_select %p191, %s18, 1
        %s193 = smul.addr %s192, 12
        %s194 = smul.addr %s193, 4
        %s195 = scalar_lea.vmem %s0, %s194
        %v197 = vld [vmem:[%s195] sm:$0xff]
        %v198 = vld [vmem:[%s195 + $0x8] sm:$0xf]
        %v199 = vld [vmem:[%s195 + $0xc] sm:$0xff]
        %v200 = vld [vmem:[%s195 + $0x14] sm:$0xf]
        %v201 = vld [vmem:[%s195 + $0x18] sm:$0xff]
        %v202 = vld [vmem:[%s195 + $0x20] sm:$0xf]
        %v203 = vld [vmem:[%s195 + $0x24] sm:$0xff]
        %v204 = vld [vmem:[%s195 + $0x2c] sm:$0xf]
        %v205 = vld [vmem:[%s1] sm:$0xff]
        %v206 = vld [vmem:[%s1 + $0x8] sm:$0xff]
        %v207 = vld [vmem:[%s1 + $0x10] sm:$0xff]
        %v208 = vld [vmem:[%s1 + $0x18] sm:$0xff]
        %v209 = vld [vmem:[%s1 + $0x20] sm:$0xf]
        %v210 = vld [vmem:[%s1 + $0x24] sm:$0xff]
        %v211 = vld [vmem:[%s1 + $0x2c] sm:$0xff]
        %v212 = vld [vmem:[%s1 + $0x34] sm:$0xff]
        %v213 = vld [vmem:[%s1 + $0x3c] sm:$0xff]
        %v214 = vld [vmem:[%s1 + $0x44] sm:$0xf]
        %v215 = vld [vmem:[%s1 + $0x48] sm:$0xff]
        %v216 = vld [vmem:[%s1 + $0x50] sm:$0xff]
        %v217 = vld [vmem:[%s1 + $0x58] sm:$0xff]
        %v218 = vld [vmem:[%s1 + $0x60] sm:$0xff]
        %v219 = vld [vmem:[%s1 + $0x68] sm:$0xf]
        %v220 = vld [vmem:[%s1 + $0x6c] sm:$0xff]
        %v221 = vld [vmem:[%s1 + $0x74] sm:$0xff]
        %v222 = vld [vmem:[%s1 + $0x7c] sm:$0xff]
        %v223 = vld [vmem:[%s1 + $0x84] sm:$0xff]
        %v224 = vld [vmem:[%s1 + $0x8c] sm:$0xf]
        %v225 = vld [vmem:[%s1 + $0x90] sm:$0xff]
        %v226 = vld [vmem:[%s1 + $0x98] sm:$0xff]
        %v227 = vld [vmem:[%s1 + $0xa0] sm:$0xff]
        %v228 = vld [vmem:[%s1 + $0xa8] sm:$0xff]
        %v229 = vld [vmem:[%s1 + $0xb0] sm:$0xf]
        %v230 = vld [vmem:[%s1 + $0xb4] sm:$0xff]
        %v231 = vld [vmem:[%s1 + $0xbc] sm:$0xff]
        %v232 = vld [vmem:[%s1 + $0xc4] sm:$0xff]
        %v233 = vld [vmem:[%s1 + $0xcc] sm:$0xff]
        %v234 = vld [vmem:[%s1 + $0xd4] sm:$0xf]
        %v235 = vld [vmem:[%s1 + $0xd8] sm:$0xff]
        %v236 = vld [vmem:[%s1 + $0xe0] sm:$0xff]
        %v237 = vld [vmem:[%s1 + $0xe8] sm:$0xff]
        %v238 = vld [vmem:[%s1 + $0xf0] sm:$0xff]
        %v239 = vld [vmem:[%s1 + $0xf8] sm:$0xf]
        %v240 = vld [vmem:[%s1 + $0xfc] sm:$0xff]
        %v241 = vld [vmem:[%s1 + $0x104] sm:$0xff]
        %v242 = vld [vmem:[%s1 + $0x10c] sm:$0xff]
        %v243 = vld [vmem:[%s1 + $0x114] sm:$0xff]
        %v244 = vld [vmem:[%s1 + $0x11c] sm:$0xf]
        %v245 = vld [vmem:[%s1 + $0x120] sm:$0xff]
        %v246 = vld [vmem:[%s1 + $0x128] sm:$0xff]
        %v247 = vld [vmem:[%s1 + $0x130] sm:$0xff]
        %v248 = vld [vmem:[%s1 + $0x138] sm:$0xff]
        %v249 = vld [vmem:[%s1 + $0x140] sm:$0xf]
        %v250 = vld [vmem:[%s1 + $0x144] sm:$0xff]
        %v251 = vld [vmem:[%s1 + $0x14c] sm:$0xff]
        %v252 = vld [vmem:[%s1 + $0x154] sm:$0xff]
        %v253 = vld [vmem:[%s1 + $0x15c] sm:$0xff]
        %v254 = vld [vmem:[%s1 + $0x164] sm:$0xf]
        %v255 = vld [vmem:[%s1 + $0x168] sm:$0xff]
        %v256 = vld [vmem:[%s1 + $0x170] sm:$0xff]
        %v257 = vld [vmem:[%s1 + $0x178] sm:$0xff]
        %v258 = vld [vmem:[%s1 + $0x180] sm:$0xff]
        %v259 = vld [vmem:[%s1 + $0x188] sm:$0xf]
        %v260 = vld [vmem:[%s1 + $0x18c] sm:$0xff]
        %v261 = vld [vmem:[%s1 + $0x194] sm:$0xff]
        %v262 = vld [vmem:[%s1 + $0x19c] sm:$0xff]
        %v263 = vld [vmem:[%s1 + $0x1a4] sm:$0xff]
        %v264 = vld [vmem:[%s1 + $0x1ac] sm:$0xf]
        %v265 = vld [vmem:[%s1 + $0x1b0] sm:$0xff]
        %v266 = vld [vmem:[%s1 + $0x1b8] sm:$0xff]
        %v267 = vld [vmem:[%s1 + $0x1c0] sm:$0xff]
        %v268 = vld [vmem:[%s1 + $0x1c8] sm:$0xff]
        %v269 = vld [vmem:[%s1 + $0x1d0] sm:$0xf]
        %v270 = vld [vmem:[%s1 + $0x1d4] sm:$0xff]
        %v271 = vld [vmem:[%s1 + $0x1dc] sm:$0xff]
        %v272 = vld [vmem:[%s1 + $0x1e4] sm:$0xff]
        %v273 = vld [vmem:[%s1 + $0x1ec] sm:$0xff]
        %v274 = vld [vmem:[%s1 + $0x1f4] sm:$0xf]
        %v275 = vld [vmem:[%s1 + $0x1f8] sm:$0xff]
        %v276 = vld [vmem:[%s1 + $0x200] sm:$0xff]
        %v277 = vld [vmem:[%s1 + $0x208] sm:$0xff]
        %v278 = vld [vmem:[%s1 + $0x210] sm:$0xff]
        %v279 = vld [vmem:[%s1 + $0x218] sm:$0xf]
        %v280 = vld [vmem:[%s1 + $0x21c] sm:$0xff]
        %v281 = vld [vmem:[%s1 + $0x224] sm:$0xff]
        %v282 = vld [vmem:[%s1 + $0x22c] sm:$0xff]
        %v283 = vld [vmem:[%s1 + $0x234] sm:$0xff]
        %v284 = vld [vmem:[%s1 + $0x23c] sm:$0xf]
        %v285 = vld [vmem:[%s1 + $0x240] sm:$0xff]
        %v286 = vld [vmem:[%s1 + $0x248] sm:$0xff]
        %v287 = vld [vmem:[%s1 + $0x250] sm:$0xff]
        %v288 = vld [vmem:[%s1 + $0x258] sm:$0xff]
        %v289 = vld [vmem:[%s1 + $0x260] sm:$0xf]
        %v290 = vld [vmem:[%s1 + $0x264] sm:$0xff]
        %v291 = vld [vmem:[%s1 + $0x26c] sm:$0xff]
        %v292 = vld [vmem:[%s1 + $0x274] sm:$0xff]
        %v293 = vld [vmem:[%s1 + $0x27c] sm:$0xff]
        %v294 = vld [vmem:[%s1 + $0x284] sm:$0xf]
        %v295 = vld [vmem:[%s1 + $0x288] sm:$0xff]
        %v296 = vld [vmem:[%s1 + $0x290] sm:$0xff]
        %v297 = vld [vmem:[%s1 + $0x298] sm:$0xff]
        %v298 = vld [vmem:[%s1 + $0x2a0] sm:$0xff]
        %v299 = vld [vmem:[%s1 + $0x2a8] sm:$0xf]
        %v300 = vld [vmem:[%s1 + $0x2ac] sm:$0xff]
        %v301 = vld [vmem:[%s1 + $0x2b4] sm:$0xff]
        %v302 = vld [vmem:[%s1 + $0x2bc] sm:$0xff]
        %v303 = vld [vmem:[%s1 + $0x2c4] sm:$0xff]
        %v304 = vld [vmem:[%s1 + $0x2cc] sm:$0xf]
        %v305 = vld [vmem:[%s1 + $0x2d0] sm:$0xff]
        %v306 = vld [vmem:[%s1 + $0x2d8] sm:$0xff]
        %v307 = vld [vmem:[%s1 + $0x2e0] sm:$0xff]
        %v308 = vld [vmem:[%s1 + $0x2e8] sm:$0xff]
        %v309 = vld [vmem:[%s1 + $0x2f0] sm:$0xf]
        %v310 = vld [vmem:[%s1 + $0x2f4] sm:$0xff]
        %v311 = vld [vmem:[%s1 + $0x2fc] sm:$0xff]
        %v312 = vld [vmem:[%s1 + $0x304] sm:$0xff]
        %v313 = vld [vmem:[%s1 + $0x30c] sm:$0xff]
        %v314 = vld [vmem:[%s1 + $0x314] sm:$0xf]
        %v315 = vld [vmem:[%s1 + $0x318] sm:$0xff]
        %v316 = vld [vmem:[%s1 + $0x320] sm:$0xff]
        %v317 = vld [vmem:[%s1 + $0x328] sm:$0xff]
        %v318 = vld [vmem:[%s1 + $0x330] sm:$0xff]
        %v319 = vld [vmem:[%s1 + $0x338] sm:$0xf]
        %v320 = vld [vmem:[%s1 + $0x33c] sm:$0xff]
        %v321 = vld [vmem:[%s1 + $0x344] sm:$0xff]
        %v322 = vld [vmem:[%s1 + $0x34c] sm:$0xff]
        %v323 = vld [vmem:[%s1 + $0x354] sm:$0xff]
        %v324 = vld [vmem:[%s1 + $0x35c] sm:$0xf]
        %v325 = vld [vmem:[%s1 + $0x360] sm:$0xff]
        %v326 = vld [vmem:[%s1 + $0x368] sm:$0xff]
        %v327 = vld [vmem:[%s1 + $0x370] sm:$0xff]
        %v328 = vld [vmem:[%s1 + $0x378] sm:$0xff]
        %v329 = vld [vmem:[%s1 + $0x380] sm:$0xf]
        %v330 = vld [vmem:[%s1 + $0x384] sm:$0xff]
        %v331 = vld [vmem:[%s1 + $0x38c] sm:$0xff]
        %v332 = vld [vmem:[%s1 + $0x394] sm:$0xff]
        %v333 = vld [vmem:[%s1 + $0x39c] sm:$0xff]
        %v334 = vld [vmem:[%s1 + $0x3a4] sm:$0xf]
        %v335 = vld [vmem:[%s1 + $0x3a8] sm:$0xff]
        %v336 = vld [vmem:[%s1 + $0x3b0] sm:$0xff]
        %v337 = vld [vmem:[%s1 + $0x3b8] sm:$0xff]
        %v338 = vld [vmem:[%s1 + $0x3c0] sm:$0xff]
        %v339 = vld [vmem:[%s1 + $0x3c8] sm:$0xf]
        %v340 = vld [vmem:[%s1 + $0x3cc] sm:$0xff]
        %v341 = vld [vmem:[%s1 + $0x3d4] sm:$0xff]
        %v342 = vld [vmem:[%s1 + $0x3dc] sm:$0xff]
        %v343 = vld [vmem:[%s1 + $0x3e4] sm:$0xff]
        %v344 = vld [vmem:[%s1 + $0x3ec] sm:$0xf]
        %v345 = vld [vmem:[%s1 + $0x3f0] sm:$0xff]
        %v346 = vld [vmem:[%s1 + $0x3f8] sm:$0xff]
        %v347 = vld [vmem:[%s1 + $0x400] sm:$0xff]
        %v348 = vld [vmem:[%s1 + $0x408] sm:$0xff]
        %v349 = vld [vmem:[%s1 + $0x410] sm:$0xf]
        %v350 = vld [vmem:[%s1 + $0x414] sm:$0xff]
        %v351 = vld [vmem:[%s1 + $0x41c] sm:$0xff]
        %v352 = vld [vmem:[%s1 + $0x424] sm:$0xff]
        %v353 = vld [vmem:[%s1 + $0x42c] sm:$0xff]
        %v354 = vld [vmem:[%s1 + $0x434] sm:$0xf]
        %v355 = vld [vmem:[%s1 + $0x438] sm:$0xff]
        %v356 = vld [vmem:[%s1 + $0x440] sm:$0xff]
        %v357 = vld [vmem:[%s1 + $0x448] sm:$0xff]
        %v358 = vld [vmem:[%s1 + $0x450] sm:$0xff]
        %v359 = vld [vmem:[%s1 + $0x458] sm:$0xf]
        %v360 = vld [vmem:[%s1 + $0x45c] sm:$0xff]
        %v361 = vld [vmem:[%s1 + $0x464] sm:$0xff]
        %v362 = vld [vmem:[%s1 + $0x46c] sm:$0xff]
        %v363 = vld [vmem:[%s1 + $0x474] sm:$0xff]
        %v364 = vld [vmem:[%s1 + $0x47c] sm:$0xf]
        %v365 = vld [vmem:[%s1 + $0x480] sm:$0xff]
        %v366 = vld [vmem:[%s1 + $0x488] sm:$0xff]
        %v367 = vld [vmem:[%s1 + $0x490] sm:$0xff]
        %v368 = vld [vmem:[%s1 + $0x498] sm:$0xff]
        %v369 = vld [vmem:[%s1 + $0x4a0] sm:$0xf]
        %v370 = vld [vmem:[%s1 + $0x4a4] sm:$0xff]
        %v371 = vld [vmem:[%s1 + $0x4ac] sm:$0xff]
        %v372 = vld [vmem:[%s1 + $0x4b4] sm:$0xff]
        %v373 = vld [vmem:[%s1 + $0x4bc] sm:$0xff]
        %v374 = vld [vmem:[%s1 + $0x4c4] sm:$0xf]
        %v375 = vld [vmem:[%s1 + $0x4c8] sm:$0xff]
        %v376 = vld [vmem:[%s1 + $0x4d0] sm:$0xff]
        %v377 = vld [vmem:[%s1 + $0x4d8] sm:$0xff]
        %v378 = vld [vmem:[%s1 + $0x4e0] sm:$0xff]
        %v379 = vld [vmem:[%s1 + $0x4e8] sm:$0xf]
        %v380 = vld [vmem:[%s1 + $0x4ec] sm:$0xff]
        %v381 = vld [vmem:[%s1 + $0x4f4] sm:$0xff]
        %v382 = vld [vmem:[%s1 + $0x4fc] sm:$0xff]
        %v383 = vld [vmem:[%s1 + $0x504] sm:$0xff]
        %v384 = vld [vmem:[%s1 + $0x50c] sm:$0xf]
        %v385 = vld [vmem:[%s1 + $0x510] sm:$0xff]
        %v386 = vld [vmem:[%s1 + $0x518] sm:$0xff]
        %v387 = vld [vmem:[%s1 + $0x520] sm:$0xff]
        %v388 = vld [vmem:[%s1 + $0x528] sm:$0xff]
        %v389 = vld [vmem:[%s1 + $0x530] sm:$0xf]
        %v390 = vld [vmem:[%s1 + $0x534] sm:$0xff]
        %v391 = vld [vmem:[%s1 + $0x53c] sm:$0xff]
        %v392 = vld [vmem:[%s1 + $0x544] sm:$0xff]
        %v393 = vld [vmem:[%s1 + $0x54c] sm:$0xff]
        %v394 = vld [vmem:[%s1 + $0x554] sm:$0xf]
        %v395 = vld [vmem:[%s1 + $0x558] sm:$0xff]
        %v396 = vld [vmem:[%s1 + $0x560] sm:$0xff]
        %v397 = vld [vmem:[%s1 + $0x568] sm:$0xff]
        %v398 = vld [vmem:[%s1 + $0x570] sm:$0xff]
        %v399 = vld [vmem:[%s1 + $0x578] sm:$0xf]
        %v400 = vld [vmem:[%s1 + $0x57c] sm:$0xff]
        %v401 = vld [vmem:[%s1 + $0x584] sm:$0xff]
        %v402 = vld [vmem:[%s1 + $0x58c] sm:$0xff]
        %v403 = vld [vmem:[%s1 + $0x594] sm:$0xff]
        %v404 = vld [vmem:[%s1 + $0x59c] sm:$0xf]
        %v405 = vld [vmem:[%s1 + $0x5a0] sm:$0xff]
        %v406 = vld [vmem:[%s1 + $0x5a8] sm:$0xff]
        %v407 = vld [vmem:[%s1 + $0x5b0] sm:$0xff]
        %v408 = vld [vmem:[%s1 + $0x5b8] sm:$0xff]
        %v409 = vld [vmem:[%s1 + $0x5c0] sm:$0xf]
        %v410 = vld [vmem:[%s1 + $0x5c4] sm:$0xff]
        %v411 = vld [vmem:[%s1 + $0x5cc] sm:$0xff]
        %v412 = vld [vmem:[%s1 + $0x5d4] sm:$0xff]
        %v413 = vld [vmem:[%s1 + $0x5dc] sm:$0xff]
        %v414 = vld [vmem:[%s1 + $0x5e4] sm:$0xf]
        %v415 = vld [vmem:[%s1 + $0x5e8] sm:$0xff]
        %v416 = vld [vmem:[%s1 + $0x5f0] sm:$0xff]
        %v417 = vld [vmem:[%s1 + $0x5f8] sm:$0xff]
        %v418 = vld [vmem:[%s1 + $0x600] sm:$0xff]
        %v419 = vld [vmem:[%s1 + $0x608] sm:$0xf]
        %v420 = vld [vmem:[%s1 + $0x60c] sm:$0xff]
        %v421 = vld [vmem:[%s1 + $0x614] sm:$0xff]
        %v422 = vld [vmem:[%s1 + $0x61c] sm:$0xff]
        %v423 = vld [vmem:[%s1 + $0x624] sm:$0xff]
        %v424 = vld [vmem:[%s1 + $0x62c] sm:$0xf]
        %v425 = vld [vmem:[%s1 + $0x630] sm:$0xff]
        %v426 = vld [vmem:[%s1 + $0x638] sm:$0xff]
        %v427 = vld [vmem:[%s1 + $0x640] sm:$0xff]
        %v428 = vld [vmem:[%s1 + $0x648] sm:$0xff]
        %v429 = vld [vmem:[%s1 + $0x650] sm:$0xf]
        %v430 = vld [vmem:[%s1 + $0x654] sm:$0xff]
        %v431 = vld [vmem:[%s1 + $0x65c] sm:$0xff]
        %v432 = vld [vmem:[%s1 + $0x664] sm:$0xff]
        %v433 = vld [vmem:[%s1 + $0x66c] sm:$0xff]
        %v434 = vld [vmem:[%s1 + $0x674] sm:$0xf]
        %v435 = vld [vmem:[%s1 + $0x678] sm:$0xff]
        %v436 = vld [vmem:[%s1 + $0x680] sm:$0xff]
        %v437 = vld [vmem:[%s1 + $0x688] sm:$0xff]
        %v438 = vld [vmem:[%s1 + $0x690] sm:$0xff]
        %v439 = vld [vmem:[%s1 + $0x698] sm:$0xf]
        %v440 = vld [vmem:[%s1 + $0x69c] sm:$0xff]
        %v441 = vld [vmem:[%s1 + $0x6a4] sm:$0xff]
        %v442 = vld [vmem:[%s1 + $0x6ac] sm:$0xff]
        %v443 = vld [vmem:[%s1 + $0x6b4] sm:$0xff]
        %v444 = vld [vmem:[%s1 + $0x6bc] sm:$0xf]
        %v453 = vunpack.c.l.b16 %v197
        %v454 = vunpack.c.h.b16 %v197
        %v455 = vunpack.c.l.b16 %v198
        %v456 = vunpack.c.l.b16 %v199
        %v457 = vunpack.c.h.b16 %v199
        %v458 = vunpack.c.l.b16 %v200
        %v459 = vunpack.c.l.b16 %v201
        %v460 = vunpack.c.h.b16 %v201
        %v461 = vunpack.c.l.b16 %v202
        %v462 = vunpack.c.l.b16 %v203
        %v463 = vunpack.c.h.b16 %v203
        %v464 = vunpack.c.l.b16 %v204
        %v465 = vpack.c.b16 %v456, %v453
        %v466 = vpack.c.b16 %v457, %v454
        %v467 = vpack.c.b16 %v458, %v455
        %v468 = vpack.c.b16 %v462, %v459
        %v469 = vpack.c.b16 %v463, %v460
        %v470 = vpack.c.b16 %v464, %v461
        %v717 = vunpack.c.l.b16 %v205
        %v718 = vunpack.c.h.b16 %v205
        %v719 = vunpack.c.l.b16 %v206
        %v720 = vunpack.c.h.b16 %v206
        %v721 = vunpack.c.l.b16 %v207
        %v722 = vunpack.c.h.b16 %v207
        %v723 = vunpack.c.l.b16 %v208
        %v724 = vunpack.c.h.b16 %v208
        %v725 = vunpack.c.l.b16 %v209
        %v726 = vunpack.c.l.b16 %v210
        %v727 = vunpack.c.h.b16 %v210
        %v728 = vunpack.c.l.b16 %v211
        %v729 = vunpack.c.h.b16 %v211
        %v730 = vunpack.c.l.b16 %v212
        %v731 = vunpack.c.h.b16 %v212
        %v732 = vunpack.c.l.b16 %v213
        %v733 = vunpack.c.h.b16 %v213
        %v734 = vunpack.c.l.b16 %v214
        %v735 = vunpack.c.l.b16 %v215
        %v736 = vunpack.c.h.b16 %v215
        %v737 = vunpack.c.l.b16 %v216
        %v738 = vunpack.c.h.b16 %v216
        %v739 = vunpack.c.l.b16 %v217
        %v740 = vunpack.c.h.b16 %v217
        %v741 = vunpack.c.l.b16 %v218
        %v742 = vunpack.c.h.b16 %v218
        %v743 = vunpack.c.l.b16 %v219
        %v744 = vunpack.c.l.b16 %v220
        %v745 = vunpack.c.h.b16 %v220
        %v746 = vunpack.c.l.b16 %v221
        %v747 = vunpack.c.h.b16 %v221
        %v748 = vunpack.c.l.b16 %v222
        %v749 = vunpack.c.h.b16 %v222
        %v750 = vunpack.c.l.b16 %v223
        %v751 = vunpack.c.h.b16 %v223
        %v752 = vunpack.c.l.b16 %v224
        %v753 = vunpack.c.l.b16 %v225
        %v754 = vunpack.c.h.b16 %v225
        %v755 = vunpack.c.l.b16 %v226
        %v756 = vunpack.c.h.b16 %v226
        %v757 = vunpack.c.l.b16 %v227
        %v758 = vunpack.c.h.b16 %v227
        %v759 = vunpack.c.l.b16 %v228
        %v760 = vunpack.c.h.b16 %v228
        %v761 = vunpack.c.l.b16 %v229
        %v762 = vunpack.c.l.b16 %v230
        %v763 = vunpack.c.h.b16 %v230
        %v764 = vunpack.c.l.b16 %v231
        %v765 = vunpack.c.h.b16 %v231
        %v766 = vunpack.c.l.b16 %v232
        %v767 = vunpack.c.h.b16 %v232
        %v768 = vunpack.c.l.b16 %v233
        %v769 = vunpack.c.h.b16 %v233
        %v770 = vunpack.c.l.b16 %v234
        %v771 = vunpack.c.l.b16 %v235
        %v772 = vunpack.c.h.b16 %v235
        %v773 = vunpack.c.l.b16 %v236
        %v774 = vunpack.c.h.b16 %v236
        %v775 = vunpack.c.l.b16 %v237
        %v776 = vunpack.c.h.b16 %v237
        %v777 = vunpack.c.l.b16 %v238
        %v778 = vunpack.c.h.b16 %v238
        %v779 = vunpack.c.l.b16 %v239
        %v780 = vunpack.c.l.b16 %v240
        %v781 = vunpack.c.h.b16 %v240
        %v782 = vunpack.c.l.b16 %v241
        %v783 = vunpack.c.h.b16 %v241
        %v784 = vunpack.c.l.b16 %v242
        %v785 = vunpack.c.h.b16 %v242
        %v786 = vunpack.c.l.b16 %v243
        %v787 = vunpack.c.h.b16 %v243
        %v788 = vunpack.c.l.b16 %v244
        %v789 = vunpack.c.l.b16 %v245
        %v790 = vunpack.c.h.b16 %v245
        %v791 = vunpack.c.l.b16 %v246
        %v792 = vunpack.c.h.b16 %v246
        %v793 = vunpack.c.l.b16 %v247
        %v794 = vunpack.c.h.b16 %v247
        %v795 = vunpack.c.l.b16 %v248
        %v796 = vunpack.c.h.b16 %v248
        %v797 = vunpack.c.l.b16 %v249
        %v798 = vunpack.c.l.b16 %v250
        %v799 = vunpack.c.h.b16 %v250
        %v800 = vunpack.c.l.b16 %v251
        %v801 = vunpack.c.h.b16 %v251
        %v802 = vunpack.c.l.b16 %v252
        %v803 = vunpack.c.h.b16 %v252
        %v804 = vunpack.c.l.b16 %v253
        %v805 = vunpack.c.h.b16 %v253
        %v806 = vunpack.c.l.b16 %v254
        %v807 = vunpack.c.l.b16 %v255
        %v808 = vunpack.c.h.b16 %v255
        %v809 = vunpack.c.l.b16 %v256
        %v810 = vunpack.c.h.b16 %v256
        %v811 = vunpack.c.l.b16 %v257
        %v812 = vunpack.c.h.b16 %v257
        %v813 = vunpack.c.l.b16 %v258
        %v814 = vunpack.c.h.b16 %v258
        %v815 = vunpack.c.l.b16 %v259
        %v816 = vunpack.c.l.b16 %v260
        %v817 = vunpack.c.h.b16 %v260
        %v818 = vunpack.c.l.b16 %v261
        %v819 = vunpack.c.h.b16 %v261
        %v820 = vunpack.c.l.b16 %v262
        %v821 = vunpack.c.h.b16 %v262
        %v822 = vunpack.c.l.b16 %v263
        %v823 = vunpack.c.h.b16 %v263
        %v824 = vunpack.c.l.b16 %v264
        %v825 = vunpack.c.l.b16 %v265
        %v826 = vunpack.c.h.b16 %v265
        %v827 = vunpack.c.l.b16 %v266
        %v828 = vunpack.c.h.b16 %v266
        %v829 = vunpack.c.l.b16 %v267
        %v830 = vunpack.c.h.b16 %v267
        %v831 = vunpack.c.l.b16 %v268
        %v832 = vunpack.c.h.b16 %v268
        %v833 = vunpack.c.l.b16 %v269
        %v834 = vunpack.c.l.b16 %v270
        %v835 = vunpack.c.h.b16 %v270
        %v836 = vunpack.c.l.b16 %v271
        %v837 = vunpack.c.h.b16 %v271
        %v838 = vunpack.c.l.b16 %v272
        %v839 = vunpack.c.h.b16 %v272
        %v840 = vunpack.c.l.b16 %v273
        %v841 = vunpack.c.h.b16 %v273
        %v842 = vunpack.c.l.b16 %v274
        %v843 = vunpack.c.l.b16 %v275
        %v844 = vunpack.c.h.b16 %v275
        %v845 = vunpack.c.l.b16 %v276
        %v846 = vunpack.c.h.b16 %v276
        %v847 = vunpack.c.l.b16 %v277
        %v848 = vunpack.c.h.b16 %v277
        %v849 = vunpack.c.l.b16 %v278
        %v850 = vunpack.c.h.b16 %v278
        %v851 = vunpack.c.l.b16 %v279
        %v852 = vunpack.c.l.b16 %v280
        %v853 = vunpack.c.h.b16 %v280
        %v854 = vunpack.c.l.b16 %v281
        %v855 = vunpack.c.h.b16 %v281
        %v856 = vunpack.c.l.b16 %v282
        %v857 = vunpack.c.h.b16 %v282
        %v858 = vunpack.c.l.b16 %v283
        %v859 = vunpack.c.h.b16 %v283
        %v860 = vunpack.c.l.b16 %v284
        %v861 = vunpack.c.l.b16 %v285
        %v862 = vunpack.c.h.b16 %v285
        %v863 = vunpack.c.l.b16 %v286
        %v864 = vunpack.c.h.b16 %v286
        %v865 = vunpack.c.l.b16 %v287
        %v866 = vunpack.c.h.b16 %v287
        %v867 = vunpack.c.l.b16 %v288
        %v868 = vunpack.c.h.b16 %v288
        %v869 = vunpack.c.l.b16 %v289
        %v870 = vunpack.c.l.b16 %v290
        %v871 = vunpack.c.h.b16 %v290
        %v872 = vunpack.c.l.b16 %v291
        %v873 = vunpack.c.h.b16 %v291
        %v874 = vunpack.c.l.b16 %v292
        %v875 = vunpack.c.h.b16 %v292
        %v876 = vunpack.c.l.b16 %v293
        %v877 = vunpack.c.h.b16 %v293
        %v878 = vunpack.c.l.b16 %v294
        %v879 = vunpack.c.l.b16 %v295
        %v880 = vunpack.c.h.b16 %v295
        %v881 = vunpack.c.l.b16 %v296
        %v882 = vunpack.c.h.b16 %v296
        %v883 = vunpack.c.l.b16 %v297
        %v884 = vunpack.c.h.b16 %v297
        %v885 = vunpack.c.l.b16 %v298
        %v886 = vunpack.c.h.b16 %v298
        %v887 = vunpack.c.l.b16 %v299
        %v888 = vunpack.c.l.b16 %v300
        %v889 = vunpack.c.h.b16 %v300
        %v890 = vunpack.c.l.b16 %v301
        %v891 = vunpack.c.h.b16 %v301
        %v892 = vunpack.c.l.b16 %v302
        %v893 = vunpack.c.h.b16 %v302
        %v894 = vunpack.c.l.b16 %v303
        %v895 = vunpack.c.h.b16 %v303
        %v896 = vunpack.c.l.b16 %v304
        %v897 = vunpack.c.l.b16 %v305
        %v898 = vunpack.c.h.b16 %v305
        %v899 = vunpack.c.l.b16 %v306
        %v900 = vunpack.c.h.b16 %v306
        %v901 = vunpack.c.l.b16 %v307
        %v902 = vunpack.c.h.b16 %v307
        %v903 = vunpack.c.l.b16 %v308
        %v904 = vunpack.c.h.b16 %v308
        %v905 = vunpack.c.l.b16 %v309
        %v906 = vunpack.c.l.b16 %v310
        %v907 = vunpack.c.h.b16 %v310
        %v908 = vunpack.c.l.b16 %v311
        %v909 = vunpack.c.h.b16 %v311
        %v910 = vunpack.c.l.b16 %v312
        %v911 = vunpack.c.h.b16 %v312
        %v912 = vunpack.c.l.b16 %v313
        %v913 = vunpack.c.h.b16 %v313
        %v914 = vunpack.c.l.b16 %v314
        %v915 = vunpack.c.l.b16 %v315
        %v916 = vunpack.c.h.b16 %v315
        %v917 = vunpack.c.l.b16 %v316
        %v918 = vunpack.c.h.b16 %v316
        %v919 = vunpack.c.l.b16 %v317
        %v920 = vunpack.c.h.b16 %v317
        %v921 = vunpack.c.l.b16 %v318
        %v922 = vunpack.c.h.b16 %v318
        %v923 = vunpack.c.l.b16 %v319
        %v924 = vunpack.c.l.b16 %v320
        %v925 = vunpack.c.h.b16 %v320
        %v926 = vunpack.c.l.b16 %v321
        %v927 = vunpack.c.h.b16 %v321
        %v928 = vunpack.c.l.b16 %v322
        %v929 = vunpack.c.h.b16 %v322
        %v930 = vunpack.c.l.b16 %v323
        %v931 = vunpack.c.h.b16 %v323
        %v932 = vunpack.c.l.b16 %v324
        %v933 = vunpack.c.l.b16 %v325
        %v934 = vunpack.c.h.b16 %v325
        %v935 = vunpack.c.l.b16 %v326
        %v936 = vunpack.c.h.b16 %v326
        %v937 = vunpack.c.l.b16 %v327
        %v938 = vunpack.c.h.b16 %v327
        %v939 = vunpack.c.l.b16 %v328
        %v940 = vunpack.c.h.b16 %v328
        %v941 = vunpack.c.l.b16 %v329
        %v942 = vunpack.c.l.b16 %v330
        %v943 = vunpack.c.h.b16 %v330
        %v944 = vunpack.c.l.b16 %v331
        %v945 = vunpack.c.h.b16 %v331
        %v946 = vunpack.c.l.b16 %v332
        %v947 = vunpack.c.h.b16 %v332
        %v948 = vunpack.c.l.b16 %v333
        %v949 = vunpack.c.h.b16 %v333
        %v950 = vunpack.c.l.b16 %v334
        %v951 = vunpack.c.l.b16 %v335
        %v952 = vunpack.c.h.b16 %v335
        %v953 = vunpack.c.l.b16 %v336
        %v954 = vunpack.c.h.b16 %v336
        %v955 = vunpack.c.l.b16 %v337
        %v956 = vunpack.c.h.b16 %v337
        %v957 = vunpack.c.l.b16 %v338
        %v958 = vunpack.c.h.b16 %v338
        %v959 = vunpack.c.l.b16 %v339
        %v960 = vunpack.c.l.b16 %v340
        %v961 = vunpack.c.h.b16 %v340
        %v962 = vunpack.c.l.b16 %v341
        %v963 = vunpack.c.h.b16 %v341
        %v964 = vunpack.c.l.b16 %v342
        %v965 = vunpack.c.h.b16 %v342
        %v966 = vunpack.c.l.b16 %v343
        %v967 = vunpack.c.h.b16 %v343
        %v968 = vunpack.c.l.b16 %v344
        %v969 = vunpack.c.l.b16 %v345
        %v970 = vunpack.c.h.b16 %v345
        %v971 = vunpack.c.l.b16 %v346
        %v972 = vunpack.c.h.b16 %v346
        %v973 = vunpack.c.l.b16 %v347
        %v974 = vunpack.c.h.b16 %v347
        %v975 = vunpack.c.l.b16 %v348
        %v976 = vunpack.c.h.b16 %v348
        %v977 = vunpack.c.l.b16 %v349
        %v978 = vunpack.c.l.b16 %v350
        %v979 = vunpack.c.h.b16 %v350
        %v980 = vunpack.c.l.b16 %v351
        %v981 = vunpack.c.h.b16 %v351
        %v982 = vunpack.c.l.b16 %v352
        %v983 = vunpack.c.h.b16 %v352
        %v984 = vunpack.c.l.b16 %v353
        %v985 = vunpack.c.h.b16 %v353
        %v986 = vunpack.c.l.b16 %v354
        %v987 = vunpack.c.l.b16 %v355
        %v988 = vunpack.c.h.b16 %v355
        %v989 = vunpack.c.l.b16 %v356
        %v990 = vunpack.c.h.b16 %v356
        %v991 = vunpack.c.l.b16 %v357
        %v992 = vunpack.c.h.b16 %v357
        %v993 = vunpack.c.l.b16 %v358
        %v994 = vunpack.c.h.b16 %v358
        %v995 = vunpack.c.l.b16 %v359
        %v996 = vunpack.c.l.b16 %v360
        %v997 = vunpack.c.h.b16 %v360
        %v998 = vunpack.c.l.b16 %v361
        %v999 = vunpack.c.h.b16 %v361
        %v1000 = vunpack.c.l.b16 %v362
        %v1001 = vunpack.c.h.b16 %v362
        %v1002 = vunpack.c.l.b16 %v363
        %v1003 = vunpack.c.h.b16 %v363
        %v1004 = vunpack.c.l.b16 %v364
        %v1005 = vunpack.c.l.b16 %v365
        %v1006 = vunpack.c.h.b16 %v365
        %v1007 = vunpack.c.l.b16 %v366
        %v1008 = vunpack.c.h.b16 %v366
        %v1009 = vunpack.c.l.b16 %v367
        %v1010 = vunpack.c.h.b16 %v367
        %v1011 = vunpack.c.l.b16 %v368
        %v1012 = vunpack.c.h.b16 %v368
        %v1013 = vunpack.c.l.b16 %v369
        %v1014 = vunpack.c.l.b16 %v370
        %v1015 = vunpack.c.h.b16 %v370
        %v1016 = vunpack.c.l.b16 %v371
        %v1017 = vunpack.c.h.b16 %v371
        %v1018 = vunpack.c.l.b16 %v372
        %v1019 = vunpack.c.h.b16 %v372
        %v1020 = vunpack.c.l.b16 %v373
        %v1021 = vunpack.c.h.b16 %v373
        %v1022 = vunpack.c.l.b16 %v374
        %v1023 = vunpack.c.l.b16 %v375
        %v1024 = vunpack.c.h.b16 %v375
        %v1025 = vunpack.c.l.b16 %v376
        %v1026 = vunpack.c.h.b16 %v376
        %v1027 = vunpack.c.l.b16 %v377
        %v1028 = vunpack.c.h.b16 %v377
        %v1029 = vunpack.c.l.b16 %v378
        %v1030 = vunpack.c.h.b16 %v378
        %v1031 = vunpack.c.l.b16 %v379
        %v1032 = vunpack.c.l.b16 %v380
        %v1033 = vunpack.c.h.b16 %v380
        %v1034 = vunpack.c.l.b16 %v381
        %v1035 = vunpack.c.h.b16 %v381
        %v1036 = vunpack.c.l.b16 %v382
        %v1037 = vunpack.c.h.b16 %v382
        %v1038 = vunpack.c.l.b16 %v383
        %v1039 = vunpack.c.h.b16 %v383
        %v1040 = vunpack.c.l.b16 %v384
        %v1041 = vunpack.c.l.b16 %v385
        %v1042 = vunpack.c.h.b16 %v385
        %v1043 = vunpack.c.l.b16 %v386
        %v1044 = vunpack.c.h.b16 %v386
        %v1045 = vunpack.c.l.b16 %v387
        %v1046 = vunpack.c.h.b16 %v387
        %v1047 = vunpack.c.l.b16 %v388
        %v1048 = vunpack.c.h.b16 %v388
        %v1049 = vunpack.c.l.b16 %v389
        %v1050 = vunpack.c.l.b16 %v390
        %v1051 = vunpack.c.h.b16 %v390
        %v1052 = vunpack.c.l.b16 %v391
        %v1053 = vunpack.c.h.b16 %v391
        %v1054 = vunpack.c.l.b16 %v392
        %v1055 = vunpack.c.h.b16 %v392
        %v1056 = vunpack.c.l.b16 %v393
        %v1057 = vunpack.c.h.b16 %v393
        %v1058 = vunpack.c.l.b16 %v394
        %v1059 = vunpack.c.l.b16 %v395
        %v1060 = vunpack.c.h.b16 %v395
        %v1061 = vunpack.c.l.b16 %v396
        %v1062 = vunpack.c.h.b16 %v396
        %v1063 = vunpack.c.l.b16 %v397
        %v1064 = vunpack.c.h.b16 %v397
        %v1065 = vunpack.c.l.b16 %v398
        %v1066 = vunpack.c.h.b16 %v398
        %v1067 = vunpack.c.l.b16 %v399
        %v1068 = vunpack.c.l.b16 %v400
        %v1069 = vunpack.c.h.b16 %v400
        %v1070 = vunpack.c.l.b16 %v401
        %v1071 = vunpack.c.h.b16 %v401
        %v1072 = vunpack.c.l.b16 %v402
        %v1073 = vunpack.c.h.b16 %v402
        %v1074 = vunpack.c.l.b16 %v403
        %v1075 = vunpack.c.h.b16 %v403
        %v1076 = vunpack.c.l.b16 %v404
        %v1077 = vunpack.c.l.b16 %v405
        %v1078 = vunpack.c.h.b16 %v405
        %v1079 = vunpack.c.l.b16 %v406
        %v1080 = vunpack.c.h.b16 %v406
        %v1081 = vunpack.c.l.b16 %v407
        %v1082 = vunpack.c.h.b16 %v407
        %v1083 = vunpack.c.l.b16 %v408
        %v1084 = vunpack.c.h.b16 %v408
        %v1085 = vunpack.c.l.b16 %v409
        %v1086 = vunpack.c.l.b16 %v410
        %v1087 = vunpack.c.h.b16 %v410
        %v1088 = vunpack.c.l.b16 %v411
        %v1089 = vunpack.c.h.b16 %v411
        %v1090 = vunpack.c.l.b16 %v412
        %v1091 = vunpack.c.h.b16 %v412
        %v1092 = vunpack.c.l.b16 %v413
        %v1093 = vunpack.c.h.b16 %v413
        %v1094 = vunpack.c.l.b16 %v414
        %v1095 = vunpack.c.l.b16 %v415
        %v1096 = vunpack.c.h.b16 %v415
        %v1097 = vunpack.c.l.b16 %v416
        %v1098 = vunpack.c.h.b16 %v416
        %v1099 = vunpack.c.l.b16 %v417
        %v1100 = vunpack.c.h.b16 %v417
        %v1101 = vunpack.c.l.b16 %v418
        %v1102 = vunpack.c.h.b16 %v418
        %v1103 = vunpack.c.l.b16 %v419
        %v1104 = vunpack.c.l.b16 %v420
        %v1105 = vunpack.c.h.b16 %v420
        %v1106 = vunpack.c.l.b16 %v421
        %v1107 = vunpack.c.h.b16 %v421
        %v1108 = vunpack.c.l.b16 %v422
        %v1109 = vunpack.c.h.b16 %v422
        %v1110 = vunpack.c.l.b16 %v423
        %v1111 = vunpack.c.h.b16 %v423
        %v1112 = vunpack.c.l.b16 %v424
        %v1113 = vunpack.c.l.b16 %v425
        %v1114 = vunpack.c.h.b16 %v425
        %v1115 = vunpack.c.l.b16 %v426
        %v1116 = vunpack.c.h.b16 %v426
        %v1117 = vunpack.c.l.b16 %v427
        %v1118 = vunpack.c.h.b16 %v427
        %v1119 = vunpack.c.l.b16 %v428
        %v1120 = vunpack.c.h.b16 %v428
        %v1121 = vunpack.c.l.b16 %v429
        %v1122 = vunpack.c.l.b16 %v430
        %v1123 = vunpack.c.h.b16 %v430
        %v1124 = vunpack.c.l.b16 %v431
        %v1125 = vunpack.c.h.b16 %v431
        %v1126 = vunpack.c.l.b16 %v432
        %v1127 = vunpack.c.h.b16 %v432
        %v1128 = vunpack.c.l.b16 %v433
        %v1129 = vunpack.c.h.b16 %v433
        %v1130 = vunpack.c.l.b16 %v434
        %v1131 = vunpack.c.l.b16 %v435
        %v1132 = vunpack.c.h.b16 %v435
        %v1133 = vunpack.c.l.b16 %v436
        %v1134 = vunpack.c.h.b16 %v436
        %v1135 = vunpack.c.l.b16 %v437
        %v1136 = vunpack.c.h.b16 %v437
        %v1137 = vunpack.c.l.b16 %v438
        %v1138 = vunpack.c.h.b16 %v438
        %v1139 = vunpack.c.l.b16 %v439
        %v1140 = vunpack.c.l.b16 %v440
        %v1141 = vunpack.c.h.b16 %v440
        %v1142 = vunpack.c.l.b16 %v441
        %v1143 = vunpack.c.h.b16 %v441
        %v1144 = vunpack.c.l.b16 %v442
        %v1145 = vunpack.c.h.b16 %v442
        %v1146 = vunpack.c.l.b16 %v443
        %v1147 = vunpack.c.h.b16 %v443
        %v1148 = vunpack.c.l.b16 %v444
        %v1149 = vpack.c.b16 %v726, %v717
        %v1150 = vpack.c.b16 %v727, %v718
        %v1151 = vpack.c.b16 %v728, %v719
        %v1152 = vpack.c.b16 %v729, %v720
        %v1153 = vpack.c.b16 %v730, %v721
        %v1154 = vpack.c.b16 %v731, %v722
        %v1155 = vpack.c.b16 %v732, %v723
        %v1156 = vpack.c.b16 %v733, %v724
        %v1157 = vpack.c.b16 %v734, %v725
        %v1158 = vpack.c.b16 %v744, %v735
        %v1159 = vpack.c.b16 %v745, %v736
        %v1160 = vpack.c.b16 %v746, %v737
        %v1161 = vpack.c.b16 %v747, %v738
        %v1162 = vpack.c.b16 %v748, %v739
        %v1163 = vpack.c.b16 %v749, %v740
        %v1164 = vpack.c.b16 %v750, %v741
        %v1165 = vpack.c.b16 %v751, %v742
        %v1166 = vpack.c.b16 %v752, %v743
        %v1167 = vpack.c.b16 %v762, %v753
        %v1168 = vpack.c.b16 %v763, %v754
        %v1169 = vpack.c.b16 %v764, %v755
        %v1170 = vpack.c.b16 %v765, %v756
        %v1171 = vpack.c.b16 %v766, %v757
        %v1172 = vpack.c.b16 %v767, %v758
        %v1173 = vpack.c.b16 %v768, %v759
        %v1174 = vpack.c.b16 %v769, %v760
        %v1175 = vpack.c.b16 %v770, %v761
        %v1176 = vpack.c.b16 %v780, %v771
        %v1177 = vpack.c.b16 %v781, %v772
        %v1178 = vpack.c.b16 %v782, %v773
        %v1179 = vpack.c.b16 %v783, %v774
        %v1180 = vpack.c.b16 %v784, %v775
        %v1181 = vpack.c.b16 %v785, %v776
        %v1182 = vpack.c.b16 %v786, %v777
        %v1183 = vpack.c.b16 %v787, %v778
        %v1184 = vpack.c.b16 %v788, %v779
        %v1185 = vpack.c.b16 %v798, %v789
        %v1186 = vpack.c.b16 %v799, %v790
        %v1187 = vpack.c.b16 %v800, %v791
        %v1188 = vpack.c.b16 %v801, %v792
        %v1189 = vpack.c.b16 %v802, %v793
        %v1190 = vpack.c.b16 %v803, %v794
        %v1191 = vpack.c.b16 %v804, %v795
        %v1192 = vpack.c.b16 %v805, %v796
        %v1193 = vpack.c.b16 %v806, %v797
        %v1194 = vpack.c.b16 %v816, %v807
        %v1195 = vpack.c.b16 %v817, %v808
        %v1196 = vpack.c.b16 %v818, %v809
        %v1197 = vpack.c.b16 %v819, %v810
        %v1198 = vpack.c.b16 %v820, %v811
        %v1199 = vpack.c.b16 %v821, %v812
        %v1200 = vpack.c.b16 %v822, %v813
        %v1201 = vpack.c.b16 %v823, %v814
        %v1202 = vpack.c.b16 %v824, %v815
        %v1203 = vpack.c.b16 %v834, %v825
        %v1204 = vpack.c.b16 %v835, %v826
        %v1205 = vpack.c.b16 %v836, %v827
        %v1206 = vpack.c.b16 %v837, %v828
        %v1207 = vpack.c.b16 %v838, %v829
        %v1208 = vpack.c.b16 %v839, %v830
        %v1209 = vpack.c.b16 %v840, %v831
        %v1210 = vpack.c.b16 %v841, %v832
        %v1211 = vpack.c.b16 %v842, %v833
        %v1212 = vpack.c.b16 %v852, %v843
        %v1213 = vpack.c.b16 %v853, %v844
        %v1214 = vpack.c.b16 %v854, %v845
        %v1215 = vpack.c.b16 %v855, %v846
        %v1216 = vpack.c.b16 %v856, %v847
        %v1217 = vpack.c.b16 %v857, %v848
        %v1218 = vpack.c.b16 %v858, %v849
        %v1219 = vpack.c.b16 %v859, %v850
        %v1220 = vpack.c.b16 %v860, %v851
        %v1221 = vpack.c.b16 %v870, %v861
        %v1222 = vpack.c.b16 %v871, %v862
        %v1223 = vpack.c.b16 %v872, %v863
        %v1224 = vpack.c.b16 %v873, %v864
        %v1225 = vpack.c.b16 %v874, %v865
        %v1226 = vpack.c.b16 %v875, %v866
        %v1227 = vpack.c.b16 %v876, %v867
        %v1228 = vpack.c.b16 %v877, %v868
        %v1229 = vpack.c.b16 %v878, %v869
        %v1230 = vpack.c.b16 %v888, %v879
        %v1231 = vpack.c.b16 %v889, %v880
        %v1232 = vpack.c.b16 %v890, %v881
        %v1233 = vpack.c.b16 %v891, %v882
        %v1234 = vpack.c.b16 %v892, %v883
        %v1235 = vpack.c.b16 %v893, %v884
        %v1236 = vpack.c.b16 %v894, %v885
        %v1237 = vpack.c.b16 %v895, %v886
        %v1238 = vpack.c.b16 %v896, %v887
        %v1239 = vpack.c.b16 %v906, %v897
        %v1240 = vpack.c.b16 %v907, %v898
        %v1241 = vpack.c.b16 %v908, %v899
        %v1242 = vpack.c.b16 %v909, %v900
        %v1243 = vpack.c.b16 %v910, %v901
        %v1244 = vpack.c.b16 %v911, %v902
        %v1245 = vpack.c.b16 %v912, %v903
        %v1246 = vpack.c.b16 %v913, %v904
        %v1247 = vpack.c.b16 %v914, %v905
        %v1248 = vpack.c.b16 %v924, %v915
        %v1249 = vpack.c.b16 %v925, %v916
        %v1250 = vpack.c.b16 %v926, %v917
        %v1251 = vpack.c.b16 %v927, %v918
        %v1252 = vpack.c.b16 %v928, %v919
        %v1253 = vpack.c.b16 %v929, %v920
        %v1254 = vpack.c.b16 %v930, %v921
        %v1255 = vpack.c.b16 %v931, %v922
        %v1256 = vpack.c.b16 %v932, %v923
        %v1257 = vpack.c.b16 %v942, %v933
        %v1258 = vpack.c.b16 %v943, %v934
        %v1259 = vpack.c.b16 %v944, %v935
        %v1260 = vpack.c.b16 %v945, %v936
        %v1261 = vpack.c.b16 %v946, %v937
        %v1262 = vpack.c.b16 %v947, %v938
        %v1263 = vpack.c.b16 %v948, %v939
        %v1264 = vpack.c.b16 %v949, %v940
        %v1265 = vpack.c.b16 %v950, %v941
        %v1266 = vpack.c.b16 %v960, %v951
        %v1267 = vpack.c.b16 %v961, %v952
        %v1268 = vpack.c.b16 %v962, %v953
        %v1269 = vpack.c.b16 %v963, %v954
        %v1270 = vpack.c.b16 %v964, %v955
        %v1271 = vpack.c.b16 %v965, %v956
        %v1272 = vpack.c.b16 %v966, %v957
        %v1273 = vpack.c.b16 %v967, %v958
        %v1274 = vpack.c.b16 %v968, %v959
        %v1275 = vpack.c.b16 %v978, %v969
        %v1276 = vpack.c.b16 %v979, %v970
        %v1277 = vpack.c.b16 %v980, %v971
        %v1278 = vpack.c.b16 %v981, %v972
        %v1279 = vpack.c.b16 %v982, %v973
        %v1280 = vpack.c.b16 %v983, %v974
        %v1281 = vpack.c.b16 %v984, %v975
        %v1282 = vpack.c.b16 %v985, %v976
        %v1283 = vpack.c.b16 %v986, %v977
        %v1284 = vpack.c.b16 %v996, %v987
        %v1285 = vpack.c.b16 %v997, %v988
        %v1286 = vpack.c.b16 %v998, %v989
        %v1287 = vpack.c.b16 %v999, %v990
        %v1288 = vpack.c.b16 %v1000, %v991
        %v1289 = vpack.c.b16 %v1001, %v992
        %v1290 = vpack.c.b16 %v1002, %v993
        %v1291 = vpack.c.b16 %v1003, %v994
        %v1292 = vpack.c.b16 %v1004, %v995
        %v1293 = vpack.c.b16 %v1014, %v1005
        %v1294 = vpack.c.b16 %v1015, %v1006
        %v1295 = vpack.c.b16 %v1016, %v1007
        %v1296 = vpack.c.b16 %v1017, %v1008
        %v1297 = vpack.c.b16 %v1018, %v1009
        %v1298 = vpack.c.b16 %v1019, %v1010
        %v1299 = vpack.c.b16 %v1020, %v1011
        %v1300 = vpack.c.b16 %v1021, %v1012
        %v1301 = vpack.c.b16 %v1022, %v1013
        %v1302 = vpack.c.b16 %v1032, %v1023
        %v1303 = vpack.c.b16 %v1033, %v1024
        %v1304 = vpack.c.b16 %v1034, %v1025
        %v1305 = vpack.c.b16 %v1035, %v1026
        %v1306 = vpack.c.b16 %v1036, %v1027
        %v1307 = vpack.c.b16 %v1037, %v1028
        %v1308 = vpack.c.b16 %v1038, %v1029
        %v1309 = vpack.c.b16 %v1039, %v1030
        %v1310 = vpack.c.b16 %v1040, %v1031
        %v1311 = vpack.c.b16 %v1050, %v1041
        %v1312 = vpack.c.b16 %v1051, %v1042
        %v1313 = vpack.c.b16 %v1052, %v1043
        %v1314 = vpack.c.b16 %v1053, %v1044
        %v1315 = vpack.c.b16 %v1054, %v1045
        %v1316 = vpack.c.b16 %v1055, %v1046
        %v1317 = vpack.c.b16 %v1056, %v1047
        %v1318 = vpack.c.b16 %v1057, %v1048
        %v1319 = vpack.c.b16 %v1058, %v1049
        %v1320 = vpack.c.b16 %v1068, %v1059
        %v1321 = vpack.c.b16 %v1069, %v1060
        %v1322 = vpack.c.b16 %v1070, %v1061
        %v1323 = vpack.c.b16 %v1071, %v1062
        %v1324 = vpack.c.b16 %v1072, %v1063
        %v1325 = vpack.c.b16 %v1073, %v1064
        %v1326 = vpack.c.b16 %v1074, %v1065
        %v1327 = vpack.c.b16 %v1075, %v1066
        %v1328 = vpack.c.b16 %v1076, %v1067
        %v1329 = vpack.c.b16 %v1086, %v1077
        %v1330 = vpack.c.b16 %v1087, %v1078
        %v1331 = vpack.c.b16 %v1088, %v1079
        %v1332 = vpack.c.b16 %v1089, %v1080
        %v1333 = vpack.c.b16 %v1090, %v1081
        %v1334 = vpack.c.b16 %v1091, %v1082
        %v1335 = vpack.c.b16 %v1092, %v1083
        %v1336 = vpack.c.b16 %v1093, %v1084
        %v1337 = vpack.c.b16 %v1094, %v1085
        %v1338 = vpack.c.b16 %v1104, %v1095
        %v1339 = vpack.c.b16 %v1105, %v1096
        %v1340 = vpack.c.b16 %v1106, %v1097
        %v1341 = vpack.c.b16 %v1107, %v1098
        %v1342 = vpack.c.b16 %v1108, %v1099
        %v1343 = vpack.c.b16 %v1109, %v1100
        %v1344 = vpack.c.b16 %v1110, %v1101
        %v1345 = vpack.c.b16 %v1111, %v1102
        %v1346 = vpack.c.b16 %v1112, %v1103
        %v1347 = vpack.c.b16 %v1122, %v1113
        %v1348 = vpack.c.b16 %v1123, %v1114
        %v1349 = vpack.c.b16 %v1124, %v1115
        %v1350 = vpack.c.b16 %v1125, %v1116
        %v1351 = vpack.c.b16 %v1126, %v1117
        %v1352 = vpack.c.b16 %v1127, %v1118
        %v1353 = vpack.c.b16 %v1128, %v1119
        %v1354 = vpack.c.b16 %v1129, %v1120
        %v1355 = vpack.c.b16 %v1130, %v1121
        %v1356 = vpack.c.b16 %v1140, %v1131
        %v1357 = vpack.c.b16 %v1141, %v1132
        %v1358 = vpack.c.b16 %v1142, %v1133
        %v1359 = vpack.c.b16 %v1143, %v1134
        %v1360 = vpack.c.b16 %v1144, %v1135
        %v1361 = vpack.c.b16 %v1145, %v1136
        %v1362 = vpack.c.b16 %v1146, %v1137
        %v1363 = vpack.c.b16 %v1147, %v1138
        %v1364 = vpack.c.b16 %v1148, %v1139
        %1581 = vmatpush.bf16.msra.mxu0 %v1212
        %1582 = vmatpush.bf16.msra.mxu0 %v1203
        %1583 = vmatpush.bf16.msra.mxu0 %v1194
        %1584 = vmatpush.bf16.msra.mxu0 %v1185
        %1585 = vmatpush.bf16.msra.mxu0 %v1176
        %1586 = vmatpush.bf16.msra.mxu0 %v1167
        %1587 = vmatpush.bf16.msra.mxu0 %v1158
        %1588 = vmatpush.bf16.msra.mxu0 %v1149
        %1589 = vmatmul.bf16.gmra.mxu0 %v465
        %v1590 = vpop.f32.mrf.mxu0
        %v1591 = vadd.f32 0.0, %v1590
        %v1592 = vpop.f32.mrf.mxu0
        %v1593 = vadd.f32 0.0, %v1592
        %1594 = vmatmul.bf16.gmra.mxu0 %v468
        %v1595 = vpop.f32.mrf.mxu0
        %v1596 = vadd.f32 0.0, %v1595
        %v1597 = vpop.f32.mrf.mxu0
        %v1598 = vadd.f32 0.0, %v1597
        %1599 = vdwg.mxu0
        %1600 = vmatpush.bf16.msra.mxu0 %v1284
        %1601 = vmatpush.bf16.msra.mxu0 %v1275
        %1602 = vmatpush.bf16.msra.mxu0 %v1266
        %1603 = vmatpush.bf16.msra.mxu0 %v1257
        %1604 = vmatpush.bf16.msra.mxu0 %v1248
        %1605 = vmatpush.bf16.msra.mxu0 %v1239
        %1606 = vmatpush.bf16.msra.mxu0 %v1230
        %1607 = vmatpush.bf16.msra.mxu0 %v1221
        %1608 = vmatmul.bf16.gmra.mxu0 %v466
        %v1609 = vpop.f32.mrf.mxu0
        %v1610 = vadd.f32 %v1591, %v1609
        %v1611 = vpop.f32.mrf.mxu0
        %v1612 = vadd.f32 %v1593, %v1611
        %1613 = vmatmul.bf16.gmra.mxu0 %v469
        %v1614 = vpop.f32.mrf.mxu0
        %v1615 = vadd.f32 %v1596, %v1614
        %v1616 = vpop.f32.mrf.mxu0
        %v1617 = vadd.f32 %v1598, %v1616
        %1618 = vdwg.mxu0
        %1619 = vmatpush.bf16.msra.mxu0 %v1356
        %1620 = vmatpush.bf16.msra.mxu0 %v1347
        %1621 = vmatpush.bf16.msra.mxu0 %v1338
        %1622 = vmatpush.bf16.msra.mxu0 %v1329
        %1623 = vmatpush.bf16.msra.mxu0 %v1320
        %1624 = vmatpush.bf16.msra.mxu0 %v1311
        %1625 = vmatpush.bf16.msra.mxu0 %v1302
        %1626 = vmatpush.bf16.msra.mxu0 %v1293
        %1627 = vmatmul.bf16.gmra.mxu0 %v467
        %v1628 = vpop.f32.mrf.mxu0
        %v1629 = vadd.f32 %v1610, %v1628
        %v1630 = vpop.f32.mrf.mxu0
        %v1631 = vadd.f32 %v1612, %v1630
        %1632 = vmatmul.bf16.gmra.mxu0 %v470
        %v1633 = vpop.f32.mrf.mxu0
        %v1634 = vadd.f32 %v1615, %v1633
        %v1635 = vpop.f32.mrf.mxu0
        %v1636 = vadd.f32 %v1617, %v1635
        %1637 = vdwg.mxu0
        %1638 = vmatpush.bf16.msra.mxu0 %v1213
        %1639 = vmatpush.bf16.msra.mxu0 %v1204
        %1640 = vmatpush.bf16.msra.mxu0 %v1195
        %1641 = vmatpush.bf16.msra.mxu0 %v1186
        %1642 = vmatpush.bf16.msra.mxu0 %v1177
        %1643 = vmatpush.bf16.msra.mxu0 %v1168
        %1644 = vmatpush.bf16.msra.mxu0 %v1159
        %1645 = vmatpush.bf16.msra.mxu0 %v1150
        %1646 = vmatmul.bf16.gmra.mxu0 %v465
        %v1647 = vpop.f32.mrf.mxu0
        %v1648 = vadd.f32 0.0, %v1647
        %v1649 = vpop.f32.mrf.mxu0
        %v1650 = vadd.f32 0.0, %v1649
        %1651 = vmatmul.bf16.gmra.mxu0 %v468
        %v1652 = vpop.f32.mrf.mxu0
        %v1653 = vadd.f32 0.0, %v1652
        %v1654 = vpop.f32.mrf.mxu0
        %v1655 = vadd.f32 0.0, %v1654
        %1656 = vdwg.mxu0
        %1657 = vmatpush.bf16.msra.mxu0 %v1285
        %1658 = vmatpush.bf16.msra.mxu0 %v1276
        %1659 = vmatpush.bf16.msra.mxu0 %v1267
        %1660 = vmatpush.bf16.msra.mxu0 %v1258
        %1661 = vmatpush.bf16.msra.mxu0 %v1249
        %1662 = vmatpush.bf16.msra.mxu0 %v1240
        %1663 = vmatpush.bf16.msra.mxu0 %v1231
        %1664 = vmatpush.bf16.msra.mxu0 %v1222
        %1665 = vmatmul.bf16.gmra.mxu0 %v466
        %v1666 = vpop.f32.mrf.mxu0
        %v1667 = vadd.f32 %v1648, %v1666
        %v1668 = vpop.f32.mrf.mxu0
        %v1669 = vadd.f32 %v1650, %v1668
        %1670 = vmatmul.bf16.gmra.mxu0 %v469
        %v1671 = vpop.f32.mrf.mxu0
        %v1672 = vadd.f32 %v1653, %v1671
        %v1673 = vpop.f32.mrf.mxu0
        %v1674 = vadd.f32 %v1655, %v1673
        %1675 = vdwg.mxu0
        %1676 = vmatpush.bf16.msra.mxu0 %v1357
        %1677 = vmatpush.bf16.msra.mxu0 %v1348
        %1678 = vmatpush.bf16.msra.mxu0 %v1339
        %1679 = vmatpush.bf16.msra.mxu0 %v1330
        %1680 = vmatpush.bf16.msra.mxu0 %v1321
        %1681 = vmatpush.bf16.msra.mxu0 %v1312
        %1682 = vmatpush.bf16.msra.mxu0 %v1303
        %1683 = vmatpush.bf16.msra.mxu0 %v1294
        %1684 = vmatmul.bf16.gmra.mxu0 %v467
        %v1685 = vpop.f32.mrf.mxu0
        %v1686 = vadd.f32 %v1667, %v1685
        %v1687 = vpop.f32.mrf.mxu0
        %v1688 = vadd.f32 %v1669, %v1687
        %1689 = vmatmul.bf16.gmra.mxu0 %v470
        %v1690 = vpop.f32.mrf.mxu0
        %v1691 = vadd.f32 %v1672, %v1690
        %v1692 = vpop.f32.mrf.mxu0
        %v1693 = vadd.f32 %v1674, %v1692
        %1694 = vdwg.mxu0
        %1695 = vmatpush.bf16.msra.mxu0 %v1214
        %1696 = vmatpush.bf16.msra.mxu0 %v1205
        %1697 = vmatpush.bf16.msra.mxu0 %v1196
        %1698 = vmatpush.bf16.msra.mxu0 %v1187
        %1699 = vmatpush.bf16.msra.mxu0 %v1178
        %1700 = vmatpush.bf16.msra.mxu0 %v1169
        %1701 = vmatpush.bf16.msra.mxu0 %v1160
        %1702 = vmatpush.bf16.msra.mxu0 %v1151
        %1703 = vmatmul.bf16.gmra.mxu0 %v465
        %v1704 = vpop.f32.mrf.mxu0
        %v1705 = vadd.f32 0.0, %v1704
        %v1706 = vpop.f32.mrf.mxu0
        %v1707 = vadd.f32 0.0, %v1706
        %1708 = vmatmul.bf16.gmra.mxu0 %v468
        %v1709 = vpop.f32.mrf.mxu0
        %v1710 = vadd.f32 0.0, %v1709
        %v1711 = vpop.f32.mrf.mxu0
        %v1712 = vadd.f32 0.0, %v1711
        %1713 = vdwg.mxu0
        %1714 = vmatpush.bf16.msra.mxu0 %v1286
        %1715 = vmatpush.bf16.msra.mxu0 %v1277
        %1716 = vmatpush.bf16.msra.mxu0 %v1268
        %1717 = vmatpush.bf16.msra.mxu0 %v1259
        %1718 = vmatpush.bf16.msra.mxu0 %v1250
        %1719 = vmatpush.bf16.msra.mxu0 %v1241
        %1720 = vmatpush.bf16.msra.mxu0 %v1232
        %1721 = vmatpush.bf16.msra.mxu0 %v1223
        %1722 = vmatmul.bf16.gmra.mxu0 %v466
        %v1723 = vpop.f32.mrf.mxu0
        %v1724 = vadd.f32 %v1705, %v1723
        %v1725 = vpop.f32.mrf.mxu0
        %v1726 = vadd.f32 %v1707, %v1725
        %1727 = vmatmul.bf16.gmra.mxu0 %v469
        %v1728 = vpop.f32.mrf.mxu0
        %v1729 = vadd.f32 %v1710, %v1728
        %v1730 = vpop.f32.mrf.mxu0
        %v1731 = vadd.f32 %v1712, %v1730
        %1732 = vdwg.mxu0
        %1733 = vmatpush.bf16.msra.mxu0 %v1358
        %1734 = vmatpush.bf16.msra.mxu0 %v1349
        %1735 = vmatpush.bf16.msra.mxu0 %v1340
        %1736 = vmatpush.bf16.msra.mxu0 %v1331
        %1737 = vmatpush.bf16.msra.mxu0 %v1322
        %1738 = vmatpush.bf16.msra.mxu0 %v1313
        %1739 = vmatpush.bf16.msra.mxu0 %v1304
        %1740 = vmatpush.bf16.msra.mxu0 %v1295
        %1741 = vmatmul.bf16.gmra.mxu0 %v467
        %v1742 = vpop.f32.mrf.mxu0
        %v1743 = vadd.f32 %v1724, %v1742
        %v1744 = vpop.f32.mrf.mxu0
        %v1745 = vadd.f32 %v1726, %v1744
        %1746 = vmatmul.bf16.gmra.mxu0 %v470
        %v1747 = vpop.f32.mrf.mxu0
        %v1748 = vadd.f32 %v1729, %v1747
        %v1749 = vpop.f32.mrf.mxu0
        %v1750 = vadd.f32 %v1731, %v1749
        %1751 = vdwg.mxu0
        %1752 = vmatpush.bf16.msra.mxu0 %v1215
        %1753 = vmatpush.bf16.msra.mxu0 %v1206
        %1754 = vmatpush.bf16.msra.mxu0 %v1197
        %1755 = vmatpush.bf16.msra.mxu0 %v1188
        %1756 = vmatpush.bf16.msra.mxu0 %v1179
        %1757 = vmatpush.bf16.msra.mxu0 %v1170
        %1758 = vmatpush.bf16.msra.mxu0 %v1161
        %1759 = vmatpush.bf16.msra.mxu0 %v1152
        %1760 = vmatmul.bf16.gmra.mxu0 %v465
        %v1761 = vpop.f32.mrf.mxu0
        %v1762 = vadd.f32 0.0, %v1761
        %v1763 = vpop.f32.mrf.mxu0
        %v1764 = vadd.f32 0.0, %v1763
        %1765 = vmatmul.bf16.gmra.mxu0 %v468
        %v1766 = vpop.f32.mrf.mxu0
        %v1767 = vadd.f32 0.0, %v1766
        %v1768 = vpop.f32.mrf.mxu0
        %v1769 = vadd.f32 0.0, %v1768
        %1770 = vdwg.mxu0
        %1771 = vmatpush.bf16.msra.mxu0 %v1287
        %1772 = vmatpush.bf16.msra.mxu0 %v1278
        %1773 = vmatpush.bf16.msra.mxu0 %v1269
        %1774 = vmatpush.bf16.msra.mxu0 %v1260
        %1775 = vmatpush.bf16.msra.mxu0 %v1251
        %1776 = vmatpush.bf16.msra.mxu0 %v1242
        %1777 = vmatpush.bf16.msra.mxu0 %v1233
        %1778 = vmatpush.bf16.msra.mxu0 %v1224
        %1779 = vmatmul.bf16.gmra.mxu0 %v466
        %v1780 = vpop.f32.mrf.mxu0
        %v1781 = vadd.f32 %v1762, %v1780
        %v1782 = vpop.f32.mrf.mxu0
        %v1783 = vadd.f32 %v1764, %v1782
        %1784 = vmatmul.bf16.gmra.mxu0 %v469
        %v1785 = vpop.f32.mrf.mxu0
        %v1786 = vadd.f32 %v1767, %v1785
        %v1787 = vpop.f32.mrf.mxu0
        %v1788 = vadd.f32 %v1769, %v1787
        %1789 = vdwg.mxu0
        %1790 = vmatpush.bf16.msra.mxu0 %v1359
        %1791 = vmatpush.bf16.msra.mxu0 %v1350
        %1792 = vmatpush.bf16.msra.mxu0 %v1341
        %1793 = vmatpush.bf16.msra.mxu0 %v1332
        %1794 = vmatpush.bf16.msra.mxu0 %v1323
        %1795 = vmatpush.bf16.msra.mxu0 %v1314
        %1796 = vmatpush.bf16.msra.mxu0 %v1305
        %1797 = vmatpush.bf16.msra.mxu0 %v1296
        %1798 = vmatmul.bf16.gmra.mxu0 %v467
        %v1799 = vpop.f32.mrf.mxu0
        %v1800 = vadd.f32 %v1781, %v1799
        %v1801 = vpop.f32.mrf.mxu0
        %v1802 = vadd.f32 %v1783, %v1801
        %1803 = vmatmul.bf16.gmra.mxu0 %v470
        %v1804 = vpop.f32.mrf.mxu0
        %v1805 = vadd.f32 %v1786, %v1804
        %v1806 = vpop.f32.mrf.mxu0
        %v1807 = vadd.f32 %v1788, %v1806
        %1808 = vdwg.mxu0
        %1809 = vmatpush.bf16.msra.mxu0 %v1216
        %1810 = vmatpush.bf16.msra.mxu0 %v1207
        %1811 = vmatpush.bf16.msra.mxu0 %v1198
        %1812 = vmatpush.bf16.msra.mxu0 %v1189
        %1813 = vmatpush.bf16.msra.mxu0 %v1180
        %1814 = vmatpush.bf16.msra.mxu0 %v1171
        %1815 = vmatpush.bf16.msra.mxu0 %v1162
        %1816 = vmatpush.bf16.msra.mxu0 %v1153
        %1817 = vmatmul.bf16.gmra.mxu0 %v465
        %v1818 = vpop.f32.mrf.mxu0
        %v1819 = vadd.f32 0.0, %v1818
        %v1820 = vpop.f32.mrf.mxu0
        %v1821 = vadd.f32 0.0, %v1820
        %1822 = vmatmul.bf16.gmra.mxu0 %v468
        %v1823 = vpop.f32.mrf.mxu0
        %v1824 = vadd.f32 0.0, %v1823
        %v1825 = vpop.f32.mrf.mxu0
        %v1826 = vadd.f32 0.0, %v1825
        %1827 = vdwg.mxu0
        %1828 = vmatpush.bf16.msra.mxu0 %v1288
        %1829 = vmatpush.bf16.msra.mxu0 %v1279
        %1830 = vmatpush.bf16.msra.mxu0 %v1270
        %1831 = vmatpush.bf16.msra.mxu0 %v1261
        %1832 = vmatpush.bf16.msra.mxu0 %v1252
        %1833 = vmatpush.bf16.msra.mxu0 %v1243
        %1834 = vmatpush.bf16.msra.mxu0 %v1234
        %1835 = vmatpush.bf16.msra.mxu0 %v1225
        %1836 = vmatmul.bf16.gmra.mxu0 %v466
        %v1837 = vpop.f32.mrf.mxu0
        %v1838 = vadd.f32 %v1819, %v1837
        %v1839 = vpop.f32.mrf.mxu0
        %v1840 = vadd.f32 %v1821, %v1839
        %1841 = vmatmul.bf16.gmra.mxu0 %v469
        %v1842 = vpop.f32.mrf.mxu0
        %v1843 = vadd.f32 %v1824, %v1842
        %v1844 = vpop.f32.mrf.mxu0
        %v1845 = vadd.f32 %v1826, %v1844
        %1846 = vdwg.mxu0
        %1847 = vmatpush.bf16.msra.mxu0 %v1360
        %1848 = vmatpush.bf16.msra.mxu0 %v1351
        %1849 = vmatpush.bf16.msra.mxu0 %v1342
        %1850 = vmatpush.bf16.msra.mxu0 %v1333
        %1851 = vmatpush.bf16.msra.mxu0 %v1324
        %1852 = vmatpush.bf16.msra.mxu0 %v1315
        %1853 = vmatpush.bf16.msra.mxu0 %v1306
        %1854 = vmatpush.bf16.msra.mxu0 %v1297
        %1855 = vmatmul.bf16.gmra.mxu0 %v467
        %v1856 = vpop.f32.mrf.mxu0
        %v1857 = vadd.f32 %v1838, %v1856
        %v1858 = vpop.f32.mrf.mxu0
        %v1859 = vadd.f32 %v1840, %v1858
        %1860 = vmatmul.bf16.gmra.mxu0 %v470
        %v1861 = vpop.f32.mrf.mxu0
        %v1862 = vadd.f32 %v1843, %v1861
        %v1863 = vpop.f32.mrf.mxu0
        %v1864 = vadd.f32 %v1845, %v1863
        %1865 = vdwg.mxu0
        %1866 = vmatpush.bf16.msra.mxu0 %v1217
        %1867 = vmatpush.bf16.msra.mxu0 %v1208
        %1868 = vmatpush.bf16.msra.mxu0 %v1199
        %1869 = vmatpush.bf16.msra.mxu0 %v1190
        %1870 = vmatpush.bf16.msra.mxu0 %v1181
        %1871 = vmatpush.bf16.msra.mxu0 %v1172
        %1872 = vmatpush.bf16.msra.mxu0 %v1163
        %1873 = vmatpush.bf16.msra.mxu0 %v1154
        %1874 = vmatmul.bf16.gmra.mxu0 %v465
        %v1875 = vpop.f32.mrf.mxu0
        %v1876 = vadd.f32 0.0, %v1875
        %v1877 = vpop.f32.mrf.mxu0
        %v1878 = vadd.f32 0.0, %v1877
        %1879 = vmatmul.bf16.gmra.mxu0 %v468
        %v1880 = vpop.f32.mrf.mxu0
        %v1881 = vadd.f32 0.0, %v1880
        %v1882 = vpop.f32.mrf.mxu0
        %v1883 = vadd.f32 0.0, %v1882
        %1884 = vdwg.mxu0
        %1885 = vmatpush.bf16.msra.mxu0 %v1289
        %1886 = vmatpush.bf16.msra.mxu0 %v1280
        %1887 = vmatpush.bf16.msra.mxu0 %v1271
        %1888 = vmatpush.bf16.msra.mxu0 %v1262
        %1889 = vmatpush.bf16.msra.mxu0 %v1253
        %1890 = vmatpush.bf16.msra.mxu0 %v1244
        %1891 = vmatpush.bf16.msra.mxu0 %v1235
        %1892 = vmatpush.bf16.msra.mxu0 %v1226
        %1893 = vmatmul.bf16.gmra.mxu0 %v466
        %v1894 = vpop.f32.mrf.mxu0
        %v1895 = vadd.f32 %v1876, %v1894
        %v1896 = vpop.f32.mrf.mxu0
        %v1897 = vadd.f32 %v1878, %v1896
        %1898 = vmatmul.bf16.gmra.mxu0 %v469
        %v1899 = vpop.f32.mrf.mxu0
        %v1900 = vadd.f32 %v1881, %v1899
        %v1901 = vpop.f32.mrf.mxu0
        %v1902 = vadd.f32 %v1883, %v1901
        %1903 = vdwg.mxu0
        %1904 = vmatpush.bf16.msra.mxu0 %v1361
        %1905 = vmatpush.bf16.msra.mxu0 %v1352
        %1906 = vmatpush.bf16.msra.mxu0 %v1343
        %1907 = vmatpush.bf16.msra.mxu0 %v1334
        %1908 = vmatpush.bf16.msra.mxu0 %v1325
        %1909 = vmatpush.bf16.msra.mxu0 %v1316
        %1910 = vmatpush.bf16.msra.mxu0 %v1307
        %1911 = vmatpush.bf16.msra.mxu0 %v1298
        %1912 = vmatmul.bf16.gmra.mxu0 %v467
        %v1913 = vpop.f32.mrf.mxu0
        %v1914 = vadd.f32 %v1895, %v1913
        %v1915 = vpop.f32.mrf.mxu0
        %v1916 = vadd.f32 %v1897, %v1915
        %1917 = vmatmul.bf16.gmra.mxu0 %v470
        %v1918 = vpop.f32.mrf.mxu0
        %v1919 = vadd.f32 %v1900, %v1918
        %v1920 = vpop.f32.mrf.mxu0
        %v1921 = vadd.f32 %v1902, %v1920
        %1922 = vdwg.mxu0
        %1923 = vmatpush.bf16.msra.mxu0 %v1218
        %1924 = vmatpush.bf16.msra.mxu0 %v1209
        %1925 = vmatpush.bf16.msra.mxu0 %v1200
        %1926 = vmatpush.bf16.msra.mxu0 %v1191
        %1927 = vmatpush.bf16.msra.mxu0 %v1182
        %1928 = vmatpush.bf16.msra.mxu0 %v1173
        %1929 = vmatpush.bf16.msra.mxu0 %v1164
        %1930 = vmatpush.bf16.msra.mxu0 %v1155
        %1931 = vmatmul.bf16.gmra.mxu0 %v465
        %v1932 = vpop.f32.mrf.mxu0
        %v1933 = vadd.f32 0.0, %v1932
        %v1934 = vpop.f32.mrf.mxu0
        %v1935 = vadd.f32 0.0, %v1934
        %1936 = vmatmul.bf16.gmra.mxu0 %v468
        %v1937 = vpop.f32.mrf.mxu0
        %v1938 = vadd.f32 0.0, %v1937
        %v1939 = vpop.f32.mrf.mxu0
        %v1940 = vadd.f32 0.0, %v1939
        %1941 = vdwg.mxu0
        %1942 = vmatpush.bf16.msra.mxu0 %v1290
        %1943 = vmatpush.bf16.msra.mxu0 %v1281
        %1944 = vmatpush.bf16.msra.mxu0 %v1272
        %1945 = vmatpush.bf16.msra.mxu0 %v1263
        %1946 = vmatpush.bf16.msra.mxu0 %v1254
        %1947 = vmatpush.bf16.msra.mxu0 %v1245
        %1948 = vmatpush.bf16.msra.mxu0 %v1236
        %1949 = vmatpush.bf16.msra.mxu0 %v1227
        %1950 = vmatmul.bf16.gmra.mxu0 %v466
        %v1951 = vpop.f32.mrf.mxu0
        %v1952 = vadd.f32 %v1933, %v1951
        %v1953 = vpop.f32.mrf.mxu0
        %v1954 = vadd.f32 %v1935, %v1953
        %1955 = vmatmul.bf16.gmra.mxu0 %v469
        %v1956 = vpop.f32.mrf.mxu0
        %v1957 = vadd.f32 %v1938, %v1956
        %v1958 = vpop.f32.mrf.mxu0
        %v1959 = vadd.f32 %v1940, %v1958
        %1960 = vdwg.mxu0
        %1961 = vmatpush.bf16.msra.mxu0 %v1362
        %1962 = vmatpush.bf16.msra.mxu0 %v1353
        %1963 = vmatpush.bf16.msra.mxu0 %v1344
        %1964 = vmatpush.bf16.msra.mxu0 %v1335
        %1965 = vmatpush.bf16.msra.mxu0 %v1326
        %1966 = vmatpush.bf16.msra.mxu0 %v1317
        %1967 = vmatpush.bf16.msra.mxu0 %v1308
        %1968 = vmatpush.bf16.msra.mxu0 %v1299
        %1969 = vmatmul.bf16.gmra.mxu0 %v467
        %v1970 = vpop.f32.mrf.mxu0
        %v1971 = vadd.f32 %v1952, %v1970
        %v1972 = vpop.f32.mrf.mxu0
        %v1973 = vadd.f32 %v1954, %v1972
        %1974 = vmatmul.bf16.gmra.mxu0 %v470
        %v1975 = vpop.f32.mrf.mxu0
        %v1976 = vadd.f32 %v1957, %v1975
        %v1977 = vpop.f32.mrf.mxu0
        %v1978 = vadd.f32 %v1959, %v1977
        %1979 = vdwg.mxu0
        %1980 = vmatpush.bf16.msra.mxu0 %v1219
        %1981 = vmatpush.bf16.msra.mxu0 %v1210
        %1982 = vmatpush.bf16.msra.mxu0 %v1201
        %1983 = vmatpush.bf16.msra.mxu0 %v1192
        %1984 = vmatpush.bf16.msra.mxu0 %v1183
        %1985 = vmatpush.bf16.msra.mxu0 %v1174
        %1986 = vmatpush.bf16.msra.mxu0 %v1165
        %1987 = vmatpush.bf16.msra.mxu0 %v1156
        %1988 = vmatmul.bf16.gmra.mxu0 %v465
        %v1989 = vpop.f32.mrf.mxu0
        %v1990 = vadd.f32 0.0, %v1989
        %v1991 = vpop.f32.mrf.mxu0
        %v1992 = vadd.f32 0.0, %v1991
        %1993 = vmatmul.bf16.gmra.mxu0 %v468
        %v1994 = vpop.f32.mrf.mxu0
        %v1995 = vadd.f32 0.0, %v1994
        %v1996 = vpop.f32.mrf.mxu0
        %v1997 = vadd.f32 0.0, %v1996
        %1998 = vdwg.mxu0
        %1999 = vmatpush.bf16.msra.mxu0 %v1291
        %2000 = vmatpush.bf16.msra.mxu0 %v1282
        %2001 = vmatpush.bf16.msra.mxu0 %v1273
        %2002 = vmatpush.bf16.msra.mxu0 %v1264
        %2003 = vmatpush.bf16.msra.mxu0 %v1255
        %2004 = vmatpush.bf16.msra.mxu0 %v1246
        %2005 = vmatpush.bf16.msra.mxu0 %v1237
        %2006 = vmatpush.bf16.msra.mxu0 %v1228
        %2007 = vmatmul.bf16.gmra.mxu0 %v466
        %v2008 = vpop.f32.mrf.mxu0
        %v2009 = vadd.f32 %v1990, %v2008
        %v2010 = vpop.f32.mrf.mxu0
        %v2011 = vadd.f32 %v1992, %v2010
        %2012 = vmatmul.bf16.gmra.mxu0 %v469
        %v2013 = vpop.f32.mrf.mxu0
        %v2014 = vadd.f32 %v1995, %v2013
        %v2015 = vpop.f32.mrf.mxu0
        %v2016 = vadd.f32 %v1997, %v2015
        %2017 = vdwg.mxu0
        %2018 = vmatpush.bf16.msra.mxu0 %v1363
        %2019 = vmatpush.bf16.msra.mxu0 %v1354
        %2020 = vmatpush.bf16.msra.mxu0 %v1345
        %2021 = vmatpush.bf16.msra.mxu0 %v1336
        %2022 = vmatpush.bf16.msra.mxu0 %v1327
        %2023 = vmatpush.bf16.msra.mxu0 %v1318
        %2024 = vmatpush.bf16.msra.mxu0 %v1309
        %2025 = vmatpush.bf16.msra.mxu0 %v1300
        %2026 = vmatmul.bf16.gmra.mxu0 %v467
        %v2027 = vpop.f32.mrf.mxu0
        %v2028 = vadd.f32 %v2009, %v2027
        %v2029 = vpop.f32.mrf.mxu0
        %v2030 = vadd.f32 %v2011, %v2029
        %2031 = vmatmul.bf16.gmra.mxu0 %v470
        %v2032 = vpop.f32.mrf.mxu0
        %v2033 = vadd.f32 %v2014, %v2032
        %v2034 = vpop.f32.mrf.mxu0
        %v2035 = vadd.f32 %v2016, %v2034
        %2036 = vdwg.mxu0
        %2037 = vmatpush.bf16.msra.mxu0 %v1220
        %2038 = vmatpush.bf16.msra.mxu0 %v1211
        %2039 = vmatpush.bf16.msra.mxu0 %v1202
        %2040 = vmatpush.bf16.msra.mxu0 %v1193
        %2041 = vmatpush.bf16.msra.mxu0 %v1184
        %2042 = vmatpush.bf16.msra.mxu0 %v1175
        %2043 = vmatpush.bf16.msra.mxu0 %v1166
        %2044 = vmatpush.bf16.msra.mxu0 %v1157
        %2045 = vmatmul.bf16.gmra.mxu0 %v465
        %v2046 = vpop.f32.mrf.mxu0
        %v2047 = vadd.f32 0.0, %v2046
        %v2048 = vpop.f32.mrf.mxu0
        %v2049 = vadd.f32 0.0, %v2048
        %2050 = vmatmul.bf16.gmra.mxu0 %v468
        %v2051 = vpop.f32.mrf.mxu0
        %v2052 = vadd.f32 0.0, %v2051
        %v2053 = vpop.f32.mrf.mxu0
        %v2054 = vadd.f32 0.0, %v2053
        %2055 = vdwg.mxu0
        %2056 = vmatpush.bf16.msra.mxu0 %v1292
        %2057 = vmatpush.bf16.msra.mxu0 %v1283
        %2058 = vmatpush.bf16.msra.mxu0 %v1274
        %2059 = vmatpush.bf16.msra.mxu0 %v1265
        %2060 = vmatpush.bf16.msra.mxu0 %v1256
        %2061 = vmatpush.bf16.msra.mxu0 %v1247
        %2062 = vmatpush.bf16.msra.mxu0 %v1238
        %2063 = vmatpush.bf16.msra.mxu0 %v1229
        %2064 = vmatmul.bf16.gmra.mxu0 %v466
        %v2065 = vpop.f32.mrf.mxu0
        %v2066 = vadd.f32 %v2047, %v2065
        %v2067 = vpop.f32.mrf.mxu0
        %v2068 = vadd.f32 %v2049, %v2067
        %2069 = vmatmul.bf16.gmra.mxu0 %v469
        %v2070 = vpop.f32.mrf.mxu0
        %v2071 = vadd.f32 %v2052, %v2070
        %v2072 = vpop.f32.mrf.mxu0
        %v2073 = vadd.f32 %v2054, %v2072
        %2074 = vdwg.mxu0
        %2075 = vmatpush.bf16.msra.mxu0 %v1364
        %2076 = vmatpush.bf16.msra.mxu0 %v1355
        %2077 = vmatpush.bf16.msra.mxu0 %v1346
        %2078 = vmatpush.bf16.msra.mxu0 %v1337
        %2079 = vmatpush.bf16.msra.mxu0 %v1328
        %2080 = vmatpush.bf16.msra.mxu0 %v1319
        %2081 = vmatpush.bf16.msra.mxu0 %v1310
        %2082 = vmatpush.bf16.msra.mxu0 %v1301
        %2083 = vmatmul.bf16.gmra.mxu0 %v467
        %v2084 = vpop.f32.mrf.mxu0
        %v2085 = vadd.f32 %v2066, %v2084
        %v2086 = vpop.f32.mrf.mxu0
        %v2087 = vadd.f32 %v2068, %v2086
        %2088 = vmatmul.bf16.gmra.mxu0 %v470
        %v2089 = vpop.f32.mrf.mxu0
        %v2090 = vadd.f32 %v2071, %v2089
        %v2091 = vpop.f32.mrf.mxu0
        %v2092 = vadd.f32 %v2073, %v2091
        %2093 = vdwg.mxu0
        %v2094 = vpack.c.bf16 %v1686, %v1629
        %v2095 = vpack.c.bf16 %v1800, %v1743
        %v2096 = vpack.c.bf16 %v1914, %v1857
        %v2097 = vpack.c.bf16 %v2028, %v1971
        %v2098 = vpack.c.bf16 %v2085, %v2085
        %v2099 = vpack.c.bf16 %v1688, %v1631
        %v2100 = vpack.c.bf16 %v1802, %v1745
        %v2101 = vpack.c.bf16 %v1916, %v1859
        %v2102 = vpack.c.bf16 %v2030, %v1973
        %v2103 = vpack.c.bf16 %v2087, %v2087
        %v2104 = vpack.c.bf16 %v1691, %v1634
        %v2105 = vpack.c.bf16 %v1805, %v1748
        %v2106 = vpack.c.bf16 %v1919, %v1862
        %v2107 = vpack.c.bf16 %v2033, %v1976
        %v2108 = vpack.c.bf16 %v2090, %v2090
        %v2109 = vpack.c.bf16 %v1693, %v1636
        %v2110 = vpack.c.bf16 %v1807, %v1750
        %v2111 = vpack.c.bf16 %v1921, %v1864
        %v2112 = vpack.c.bf16 %v2035, %v1978
        %v2113 = vpack.c.bf16 %v2092, %v2092
        %2114 = vst [vmem:[#allocation2] sm:$0xff] %v2094
        %2115 = vst [vmem:[#allocation2 + $0x8] sm:$0xff] %v2095
        %2116 = vst [vmem:[#allocation2 + $0x10] sm:$0xff] %v2096
        %2117 = vst [vmem:[#allocation2 + $0x18] sm:$0xff] %v2097
        %2118 = vst [vmem:[#allocation2 + $0x20] sm:$0xf] %v2098
        %2119 = vst [vmem:[#allocation2 + $0x24] sm:$0xff] %v2099
        %2120 = vst [vmem:[#allocation2 + $0x2c] sm:$0xff] %v2100
        %2121 = vst [vmem:[#allocation2 + $0x34] sm:$0xff] %v2101
        %2122 = vst [vmem:[#allocation2 + $0x3c] sm:$0xff] %v2102
        %2123 = vst [vmem:[#allocation2 + $0x44] sm:$0xf] %v2103
        %2124 = vst [vmem:[#allocation2 + $0x48] sm:$0xff] %v2104
        %2125 = vst [vmem:[#allocation2 + $0x50] sm:$0xff] %v2105
        %2126 = vst [vmem:[#allocation2 + $0x58] sm:$0xff] %v2106
        %2127 = vst [vmem:[#allocation2 + $0x60] sm:$0xff] %v2107
        %2128 = vst [vmem:[#allocation2 + $0x68] sm:$0xf] %v2108
        %2129 = vst [vmem:[#allocation2 + $0x6c] sm:$0xff] %v2109
        %2130 = vst [vmem:[#allocation2 + $0x74] sm:$0xff] %v2110
        %2131 = vst [vmem:[#allocation2 + $0x7c] sm:$0xff] %v2111
        %2132 = vst [vmem:[#allocation2 + $0x84] sm:$0xff] %v2112
        %2133 = vst [vmem:[#allocation2 + $0x8c] sm:$0xf] %v2113
        %v2134 = vlaneseq
        %v2135 = vshrl.u32 %v2134, 7
        %v2136 = vadd.s32 %v2135, 8
        %v2137 = vadd.s32 %v2135, 16
        %v2138 = vadd.s32 %v2135, 24
        %v2139 = vlaneseq
        %v2140 = vand.u32 %v2139, 127
        %vm2141 = vcmp.le.s32.totalorder %v2140, %v2135
        %vm2142 = vcmp.le.s32.totalorder %v2140, %v2136
        %vm2143 = vcmp.le.s32.totalorder %v2140, %v2137
        %vm2144 = vcmp.le.s32.totalorder %v2140, %v2138
        %v2145 = vsel %vm2141, 0.0, -1e+30
        %v2146 = vsel %vm2142, 0.0, -1e+30
        %v2147 = vsel %vm2143, 0.0, -1e+30
        %v2148 = vsel %vm2144, 0.0, -1e+30
        %v2149 = vld [vmem:[#allocation2] sm:$0xf]
        %v2150 = vld [vmem:[#allocation2 + $0x24] sm:$0xf]
        %v2151 = vld [vmem:[#allocation2 + $0x48] sm:$0xf]
        %v2152 = vld [vmem:[#allocation2 + $0x6c] sm:$0xf]
        %v2153 = vld [vmem:[#allocation2 + $0xc] sm:$0xf]
        %v2154 = vld [vmem:[#allocation2 + $0x30] sm:$0xf]
        %v2155 = vld [vmem:[#allocation2 + $0x54] sm:$0xf]
        %v2156 = vld [vmem:[#allocation2 + $0x78] sm:$0xf]
        %v2161 = vunpack.c.l.b16 %v2149
        %v2162 = vunpack.c.l.b16 %v2150
        %v2163 = vunpack.c.l.b16 %v2151
        %v2164 = vunpack.c.l.b16 %v2152
        %v2165 = vpack.c.b16 %v2162, %v2161
        %v2166 = vpack.c.b16 %v2164, %v2163
        %v2171 = vunpack.c.l.b16 %v2153
        %v2172 = vunpack.c.l.b16 %v2154
        %v2173 = vunpack.c.l.b16 %v2155
        %v2174 = vunpack.c.l.b16 %v2156
        %v2175 = vpack.c.b16 %v2172, %v2171
        %v2176 = vpack.c.b16 %v2174, %v2173
        %vm2177 = vcmask 523264
        %v2179 = vsel %vm2177, %v2165, 0
        %v2182 = vsel %vm2177, %v2166, 0
        %v2185 = vsel %vm2177, %v2175, 0
        %v2188 = vsel %vm2177, %v2176, 0
        %2190 = vmatpush.bf16.xpose.msra.mxu0 0
        %2191 = vmatpush.bf16.xpose.msra.mxu0 0
        %2192 = vmatpush.bf16.xpose.msra.mxu0 0
        %2193 = vmatpush.bf16.xpose.msra.mxu0 0
        %2194 = vmatpush.bf16.xpose.msra.mxu0 0
        %2195 = vmatpush.bf16.xpose.msra.mxu0 0
        %2196 = vmatpush.bf16.xpose.msra.mxu0 %v2188
        %2197 = vmatpush.bf16.xpose.msra.mxu0 %v2185
        %2198 = vmatmul.bf16.gmra.mxu0 %v2179
        %v2199 = vpop.f32.mrf.mxu0
        %v2200 = vadd.f32 %v2145, %v2199
        %v2201 = vpop.f32.mrf.mxu0
        %v2202 = vadd.f32 %v2146, %v2201
        %2203 = vmatmul.bf16.gmra.mxu0 %v2182
        %v2204 = vpop.f32.mrf.mxu0
        %v2205 = vadd.f32 %v2147, %v2204
        %v2206 = vpop.f32.mrf.mxu0
        %v2207 = vadd.f32 %v2148, %v2206
        %2208 = vdwg.mxu0
        %2209 = vrot.lane.b32.xlu0 %v2165, 64
        %v2210 = vpop.permute.xlu0 %2209
        %2211 = vrot.lane.b32.xlu0 %v2166, 64
        %v2212 = vpop.permute.xlu0 %2211
        %2213 = vrot.lane.b32.xlu0 %v2175, 64
        %v2214 = vpop.permute.xlu0 %2213
        %2215 = vrot.lane.b32.xlu0 %v2176, 64
        %v2216 = vpop.permute.xlu0 %2215
        %v2218 = vsel %vm2177, %v2210, 0
        %v2221 = vsel %vm2177, %v2212, 0
        %v2224 = vsel %vm2177, %v2214, 0
        %v2227 = vsel %vm2177, %v2216, 0
        %2229 = vmatpush.bf16.xpose.msra.mxu0 0
        %2230 = vmatpush.bf16.xpose.msra.mxu0 0
        %2231 = vmatpush.bf16.xpose.msra.mxu0 0
        %2232 = vmatpush.bf16.xpose.msra.mxu0 0
        %2233 = vmatpush.bf16.xpose.msra.mxu0 0
        %2234 = vmatpush.bf16.xpose.msra.mxu0 0
        %2235 = vmatpush.bf16.xpose.msra.mxu0 %v2227
        %2236 = vmatpush.bf16.xpose.msra.mxu0 %v2224
        %2237 = vmatmul.bf16.gmra.mxu0 %v2218
        %v2238 = vpop.f32.mrf.mxu0
        %v2239 = vadd.f32 %v2145, %v2238
        %v2240 = vpop.f32.mrf.mxu0
        %v2241 = vadd.f32 %v2146, %v2240
        %2242 = vmatmul.bf16.gmra.mxu0 %v2221
        %v2243 = vpop.f32.mrf.mxu0
        %v2244 = vadd.f32 %v2147, %v2243
        %v2245 = vpop.f32.mrf.mxu0
        %v2246 = vadd.f32 %v2148, %v2245
        %2247 = vdwg.mxu0
        %v2248 = vld [vmem:[#allocation2 + $0x4] sm:$0xf]
        %v2249 = vld [vmem:[#allocation2 + $0x28] sm:$0xf]
        %v2250 = vld [vmem:[#allocation2 + $0x4c] sm:$0xf]
        %v2251 = vld [vmem:[#allocation2 + $0x70] sm:$0xf]
        %v2252 = vld [vmem:[#allocation2 + $0x10] sm:$0xf]
        %v2253 = vld [vmem:[#allocation2 + $0x34] sm:$0xf]
        %v2254 = vld [vmem:[#allocation2 + $0x58] sm:$0xf]
        %v2255 = vld [vmem:[#allocation2 + $0x7c] sm:$0xf]
        %v2260 = vunpack.c.l.b16 %v2248
        %v2261 = vunpack.c.l.b16 %v2249
        %v2262 = vunpack.c.l.b16 %v2250
        %v2263 = vunpack.c.l.b16 %v2251
        %v2264 = vpack.c.b16 %v2261, %v2260
        %v2265 = vpack.c.b16 %v2263, %v2262
        %v2270 = vunpack.c.l.b16 %v2252
        %v2271 = vunpack.c.l.b16 %v2253
        %v2272 = vunpack.c.l.b16 %v2254
        %v2273 = vunpack.c.l.b16 %v2255
        %v2274 = vpack.c.b16 %v2271, %v2270
        %v2275 = vpack.c.b16 %v2273, %v2272
        %v2277 = vsel %vm2177, %v2264, 0
        %v2280 = vsel %vm2177, %v2265, 0
        %v2283 = vsel %vm2177, %v2274, 0
        %v2286 = vsel %vm2177, %v2275, 0
        %2288 = vmatpush.bf16.xpose.msra.mxu0 0
        %2289 = vmatpush.bf16.xpose.msra.mxu0 0
        %2290 = vmatpush.bf16.xpose.msra.mxu0 0
        %2291 = vmatpush.bf16.xpose.msra.mxu0 0
        %2292 = vmatpush.bf16.xpose.msra.mxu0 0
        %2293 = vmatpush.bf16.xpose.msra.mxu0 0
        %2294 = vmatpush.bf16.xpose.msra.mxu0 %v2286
        %2295 = vmatpush.bf16.xpose.msra.mxu0 %v2283
        %2296 = vmatmul.bf16.gmra.mxu0 %v2277
        %v2297 = vpop.f32.mrf.mxu0
        %v2298 = vadd.f32 %v2145, %v2297
        %v2299 = vpop.f32.mrf.mxu0
        %v2300 = vadd.f32 %v2146, %v2299
        %2301 = vmatmul.bf16.gmra.mxu0 %v2280
        %v2302 = vpop.f32.mrf.mxu0
        %v2303 = vadd.f32 %v2147, %v2302
        %v2304 = vpop.f32.mrf.mxu0
        %v2305 = vadd.f32 %v2148, %v2304
        %2306 = vdwg.mxu0
        %2307 = vrot.lane.b32.xlu0 %v2264, 64
        %v2308 = vpop.permute.xlu0 %2307
        %2309 = vrot.lane.b32.xlu0 %v2265, 64
        %v2310 = vpop.permute.xlu0 %2309
        %2311 = vrot.lane.b32.xlu0 %v2274, 64
        %v2312 = vpop.permute.xlu0 %2311
        %2313 = vrot.lane.b32.xlu0 %v2275, 64
        %v2314 = vpop.permute.xlu0 %2313
        %v2316 = vsel %vm2177, %v2308, 0
        %v2319 = vsel %vm2177, %v2310, 0
        %v2322 = vsel %vm2177, %v2312, 0
        %v2325 = vsel %vm2177, %v2314, 0
        %2327 = vmatpush.bf16.xpose.msra.mxu0 0
        %2328 = vmatpush.bf16.xpose.msra.mxu0 0
        %2329 = vmatpush.bf16.xpose.msra.mxu0 0
        %2330 = vmatpush.bf16.xpose.msra.mxu0 0
        %2331 = vmatpush.bf16.xpose.msra.mxu0 0
        %2332 = vmatpush.bf16.xpose.msra.mxu0 0
        %2333 = vmatpush.bf16.xpose.msra.mxu0 %v2325
        %2334 = vmatpush.bf16.xpose.msra.mxu0 %v2322
        %2335 = vmatmul.bf16.gmra.mxu0 %v2316
        %v2336 = vpop.f32.mrf.mxu0
        %v2337 = vadd.f32 %v2145, %v2336
        %v2338 = vpop.f32.mrf.mxu0
        %v2339 = vadd.f32 %v2146, %v2338
        %2340 = vmatmul.bf16.gmra.mxu0 %v2319
        %v2341 = vpop.f32.mrf.mxu0
        %v2342 = vadd.f32 %v2147, %v2341
        %v2343 = vpop.f32.mrf.mxu0
        %v2344 = vadd.f32 %v2148, %v2343
        %2345 = vdwg.mxu0
        %v2346 = vld [vmem:[#allocation2 + $0x8] sm:$0xf]
        %v2347 = vld [vmem:[#allocation2 + $0x2c] sm:$0xf]
        %v2348 = vld [vmem:[#allocation2 + $0x50] sm:$0xf]
        %v2349 = vld [vmem:[#allocation2 + $0x74] sm:$0xf]
        %v2350 = vld [vmem:[#allocation2 + $0x14] sm:$0xf]
        %v2351 = vld [vmem:[#allocation2 + $0x38] sm:$0xf]
        %v2352 = vld [vmem:[#allocation2 + $0x5c] sm:$0xf]
        %v2353 = vld [vmem:[#allocation2 + $0x80] sm:$0xf]
        %v2358 = vunpack.c.l.b16 %v2346
        %v2359 = vunpack.c.l.b16 %v2347
        %v2360 = vunpack.c.l.b16 %v2348
        %v2361 = vunpack.c.l.b16 %v2349
        %v2362 = vpack.c.b16 %v2359, %v2358
        %v2363 = vpack.c.b16 %v2361, %v2360
        %v2368 = vunpack.c.l.b16 %v2350
        %v2369 = vunpack.c.l.b16 %v2351
        %v2370 = vunpack.c.l.b16 %v2352
        %v2371 = vunpack.c.l.b16 %v2353
        %v2372 = vpack.c.b16 %v2369, %v2368
        %v2373 = vpack.c.b16 %v2371, %v2370
        %v2375 = vsel %vm2177, %v2362, 0
        %v2378 = vsel %vm2177, %v2363, 0
        %v2381 = vsel %vm2177, %v2372, 0
        %v2384 = vsel %vm2177, %v2373, 0
        %2386 = vmatpush.bf16.xpose.msra.mxu0 0
        %2387 = vmatpush.bf16.xpose.msra.mxu0 0
        %2388 = vmatpush.bf16.xpose.msra.mxu0 0
        %2389 = vmatpush.bf16.xpose.msra.mxu0 0
        %2390 = vmatpush.bf16.xpose.msra.mxu0 0
        %2391 = vmatpush.bf16.xpose.msra.mxu0 0
        %2392 = vmatpush.bf16.xpose.msra.mxu0 %v2384
        %2393 = vmatpush.bf16.xpose.msra.mxu0 %v2381
        %2394 = vmatmul.bf16.gmra.mxu0 %v2375
        %v2395 = vpop.f32.mrf.mxu0
        %v2396 = vadd.f32 %v2145, %v2395
        %v2397 = vpop.f32.mrf.mxu0
        %v2398 = vadd.f32 %v2146, %v2397
        %2399 = vmatmul.bf16.gmra.mxu0 %v2378
        %v2400 = vpop.f32.mrf.mxu0
        %v2401 = vadd.f32 %v2147, %v2400
        %v2402 = vpop.f32.mrf.mxu0
        %v2403 = vadd.f32 %v2148, %v2402
        %2404 = vdwg.mxu0
        %2405 = vrot.lane.b32.xlu0 %v2362, 64
        %v2406 = vpop.permute.xlu0 %2405
        %2407 = vrot.lane.b32.xlu0 %v2363, 64
        %v2408 = vpop.permute.xlu0 %2407
        %2409 = vrot.lane.b32.xlu0 %v2372, 64
        %v2410 = vpop.permute.xlu0 %2409
        %2411 = vrot.lane.b32.xlu0 %v2373, 64
        %v2412 = vpop.permute.xlu0 %2411
        %v2414 = vsel %vm2177, %v2406, 0
        %v2417 = vsel %vm2177, %v2408, 0
        %v2420 = vsel %vm2177, %v2410, 0
        %v2423 = vsel %vm2177, %v2412, 0
        %2425 = vmatpush.bf16.xpose.msra.mxu0 0
        %2426 = vmatpush.bf16.xpose.msra.mxu0 0
        %2427 = vmatpush.bf16.xpose.msra.mxu0 0
        %2428 = vmatpush.bf16.xpose.msra.mxu0 0
        %2429 = vmatpush.bf16.xpose.msra.mxu0 0
        %2430 = vmatpush.bf16.xpose.msra.mxu0 0
        %2431 = vmatpush.bf16.xpose.msra.mxu0 %v2423
        %2432 = vmatpush.bf16.xpose.msra.mxu0 %v2420
        %2433 = vmatmul.bf16.gmra.mxu0 %v2414
        %v2434 = vpop.f32.mrf.mxu0
        %v2435 = vadd.f32 %v2145, %v2434
        %v2436 = vpop.f32.mrf.mxu0
        %v2437 = vadd.f32 %v2146, %v2436
        %2438 = vmatmul.bf16.gmra.mxu0 %v2417
        %v2439 = vpop.f32.mrf.mxu0
        %v2440 = vadd.f32 %v2147, %v2439
        %v2441 = vpop.f32.mrf.mxu0
        %v2442 = vadd.f32 %v2148, %v2441
        %2443 = vdwg.mxu0
        %vm2444 = vcmask 261120
        %v2445 = vsel %vm2444, %v2200, -inf
        %2446 = vmax.xlane.f32.xlu0 %v2445
        %v2447 = vpop.xlane.xlu0 %2446
        %v2448 = vsel %vm2444, %v2202, -inf
        %2449 = vmax.xlane.f32.xlu0 %v2448
        %v2450 = vpop.xlane.xlu0 %2449
        %v2451 = vsel %vm2444, %v2205, -inf
        %2452 = vmax.xlane.f32.xlu0 %v2451
        %v2453 = vpop.xlane.xlu0 %2452
        %v2454 = vsel %vm2444, %v2207, -inf
        %2455 = vmax.xlane.f32.xlu0 %v2454
        %v2456 = vpop.xlane.xlu0 %2455
        %v2457 = vsel %vm2444, %v2239, -inf
        %2458 = vmax.xlane.f32.xlu0 %v2457
        %v2459 = vpop.xlane.xlu0 %2458
        %v2460 = vsel %vm2444, %v2241, -inf
        %2461 = vmax.xlane.f32.xlu0 %v2460
        %v2462 = vpop.xlane.xlu0 %2461
        %v2463 = vsel %vm2444, %v2244, -inf
        %2464 = vmax.xlane.f32.xlu0 %v2463
        %v2465 = vpop.xlane.xlu0 %2464
        %v2466 = vsel %vm2444, %v2246, -inf
        %2467 = vmax.xlane.f32.xlu0 %v2466
        %v2468 = vpop.xlane.xlu0 %2467
        %v2469 = vsel %vm2444, %v2298, -inf
        %2470 = vmax.xlane.f32.xlu0 %v2469
        %v2471 = vpop.xlane.xlu0 %2470
        %v2472 = vsel %vm2444, %v2300, -inf
        %2473 = vmax.xlane.f32.xlu0 %v2472
        %v2474 = vpop.xlane.xlu0 %2473
        %v2475 = vsel %vm2444, %v2303, -inf
        %2476 = vmax.xlane.f32.xlu0 %v2475
        %v2477 = vpop.xlane.xlu0 %2476
        %v2478 = vsel %vm2444, %v2305, -inf
        %2479 = vmax.xlane.f32.xlu0 %v2478
        %v2480 = vpop.xlane.xlu0 %2479
        %v2481 = vsel %vm2444, %v2337, -inf
        %2482 = vmax.xlane.f32.xlu0 %v2481
        %v2483 = vpop.xlane.xlu0 %2482
        %v2484 = vsel %vm2444, %v2339, -inf
        %2485 = vmax.xlane.f32.xlu0 %v2484
        %v2486 = vpop.xlane.xlu0 %2485
        %v2487 = vsel %vm2444, %v2342, -inf
        %2488 = vmax.xlane.f32.xlu0 %v2487
        %v2489 = vpop.xlane.xlu0 %2488
        %v2490 = vsel %vm2444, %v2344, -inf
        %2491 = vmax.xlane.f32.xlu0 %v2490
        %v2492 = vpop.xlane.xlu0 %2491
        %v2493 = vsel %vm2444, %v2396, -inf
        %2494 = vmax.xlane.f32.xlu0 %v2493
        %v2495 = vpop.xlane.xlu0 %2494
        %v2496 = vsel %vm2444, %v2398, -inf
        %2497 = vmax.xlane.f32.xlu0 %v2496
        %v2498 = vpop.xlane.xlu0 %2497
        %v2499 = vsel %vm2444, %v2401, -inf
        %2500 = vmax.xlane.f32.xlu0 %v2499
        %v2501 = vpop.xlane.xlu0 %2500
        %v2502 = vsel %vm2444, %v2403, -inf
        %2503 = vmax.xlane.f32.xlu0 %v2502
        %v2504 = vpop.xlane.xlu0 %2503
        %v2505 = vsel %vm2444, %v2435, -inf
        %2506 = vmax.xlane.f32.xlu0 %v2505
        %v2507 = vpop.xlane.xlu0 %2506
        %v2508 = vsel %vm2444, %v2437, -inf
        %2509 = vmax.xlane.f32.xlu0 %v2508
        %v2510 = vpop.xlane.xlu0 %2509
        %v2511 = vsel %vm2444, %v2440, -inf
        %2512 = vmax.xlane.f32.xlu0 %v2511
        %v2513 = vpop.xlane.xlu0 %2512
        %v2514 = vsel %vm2444, %v2442, -inf
        %2515 = vmax.xlane.f32.xlu0 %v2514
        %v2516 = vpop.xlane.xlu0 %2515
        %v2517 = vsub.f32 %v2200, %v2447
        %v2518 = vsub.f32 %v2202, %v2450
        %v2519 = vsub.f32 %v2205, %v2453
        %v2520 = vsub.f32 %v2207, %v2456
        %v2521 = vsub.f32 %v2239, %v2459
        %v2522 = vsub.f32 %v2241, %v2462
        %v2523 = vsub.f32 %v2244, %v2465
        %v2524 = vsub.f32 %v2246, %v2468
        %v2525 = vsub.f32 %v2298, %v2471
        %v2526 = vsub.f32 %v2300, %v2474
        %v2527 = vsub.f32 %v2303, %v2477
        %v2528 = vsub.f32 %v2305, %v2480
        %v2529 = vsub.f32 %v2337, %v2483
        %v2530 = vsub.f32 %v2339, %v2486
        %v2531 = vsub.f32 %v2342, %v2489
        %v2532 = vsub.f32 %v2344, %v2492
        %v2533 = vsub.f32 %v2396, %v2495
        %v2534 = vsub.f32 %v2398, %v2498
        %v2535 = vsub.f32 %v2401, %v2501
        %v2536 = vsub.f32 %v2403, %v2504
        %v2537 = vsub.f32 %v2435, %v2507
        %v2538 = vsub.f32 %v2437, %v2510
        %v2539 = vsub.f32 %v2440, %v2513
        %v2540 = vsub.f32 %v2442, %v2516
        %v2541 = vmul.f32 %v2517, 1.442695
        %v2542 = vpow.pop %v2541
        %v2543 = vmul.f32 %v2518, 1.442695
        %v2544 = vpow.pop %v2543
        %v2545 = vmul.f32 %v2519, 1.442695
        %v2546 = vpow.pop %v2545
        %v2547 = vmul.f32 %v2520, 1.442695
        %v2548 = vpow.pop %v2547
        %v2549 = vmul.f32 %v2521, 1.442695
        %v2550 = vpow.pop %v2549
        %v2551 = vmul.f32 %v2522, 1.442695
        %v2552 = vpow.pop %v2551
        %v2553 = vmul.f32 %v2523, 1.442695
        %v2554 = vpow.pop %v2553
        %v2555 = vmul.f32 %v2524, 1.442695
        %v2556 = vpow.pop %v2555
        %v2557 = vmul.f32 %v2525, 1.442695
        %v2558 = vpow.pop %v2557
        %v2559 = vmul.f32 %v2526, 1.442695
        %v2560 = vpow.pop %v2559
        %v2561 = vmul.f32 %v2527, 1.442695
        %v2562 = vpow.pop %v2561
        %v2563 = vmul.f32 %v2528, 1.442695
        %v2564 = vpow.pop %v2563
        %v2565 = vmul.f32 %v2529, 1.442695
        %v2566 = vpow.pop %v2565
        %v2567 = vmul.f32 %v2530, 1.442695
        %v2568 = vpow.pop %v2567
        %v2569 = vmul.f32 %v2531, 1.442695
        %v2570 = vpow.pop %v2569
        %v2571 = vmul.f32 %v2532, 1.442695
        %v2572 = vpow.pop %v2571
        %v2573 = vmul.f32 %v2533, 1.442695
        %v2574 = vpow.pop %v2573
        %v2575 = vmul.f32 %v2534, 1.442695
        %v2576 = vpow.pop %v2575
        %v2577 = vmul.f32 %v2535, 1.442695
        %v2578 = vpow.pop %v2577
        %v2579 = vmul.f32 %v2536, 1.442695
        %v2580 = vpow.pop %v2579
        %v2581 = vmul.f32 %v2537, 1.442695
        %v2582 = vpow.pop %v2581
        %v2583 = vmul.f32 %v2538, 1.442695
        %v2584 = vpow.pop %v2583
        %v2585 = vmul.f32 %v2539, 1.442695
        %v2586 = vpow.pop %v2585
        %v2587 = vmul.f32 %v2540, 1.442695
        %v2588 = vpow.pop %v2587
        %v2589 = vsel %vm2444, %v2542, 0.0
        %2590 = vadd.xlane.f32.xlu0 %v2589
        %v2591 = vpop.xlane.xlu0 %2590
        %v2592 = vsel %vm2444, %v2544, 0.0
        %2593 = vadd.xlane.f32.xlu0 %v2592
        %v2594 = vpop.xlane.xlu0 %2593
        %v2595 = vsel %vm2444, %v2546, 0.0
        %2596 = vadd.xlane.f32.xlu0 %v2595
        %v2597 = vpop.xlane.xlu0 %2596
        %v2598 = vsel %vm2444, %v2548, 0.0
        %2599 = vadd.xlane.f32.xlu0 %v2598
        %v2600 = vpop.xlane.xlu0 %2599
        %v2601 = vsel %vm2444, %v2550, 0.0
        %2602 = vadd.xlane.f32.xlu0 %v2601
        %v2603 = vpop.xlane.xlu0 %2602
        %v2604 = vsel %vm2444, %v2552, 0.0
        %2605 = vadd.xlane.f32.xlu0 %v2604
        %v2606 = vpop.xlane.xlu0 %2605
        %v2607 = vsel %vm2444, %v2554, 0.0
        %2608 = vadd.xlane.f32.xlu0 %v2607
        %v2609 = vpop.xlane.xlu0 %2608
        %v2610 = vsel %vm2444, %v2556, 0.0
        %2611 = vadd.xlane.f32.xlu0 %v2610
        %v2612 = vpop.xlane.xlu0 %2611
        %v2613 = vsel %vm2444, %v2558, 0.0
        %2614 = vadd.xlane.f32.xlu0 %v2613
        %v2615 = vpop.xlane.xlu0 %2614
        %v2616 = vsel %vm2444, %v2560, 0.0
        %2617 = vadd.xlane.f32.xlu0 %v2616
        %v2618 = vpop.xlane.xlu0 %2617
        %v2619 = vsel %vm2444, %v2562, 0.0
        %2620 = vadd.xlane.f32.xlu0 %v2619
        %v2621 = vpop.xlane.xlu0 %2620
        %v2622 = vsel %vm2444, %v2564, 0.0
        %2623 = vadd.xlane.f32.xlu0 %v2622
        %v2624 = vpop.xlane.xlu0 %2623
        %v2625 = vsel %vm2444, %v2566, 0.0
        %2626 = vadd.xlane.f32.xlu0 %v2625
        %v2627 = vpop.xlane.xlu0 %2626
        %v2628 = vsel %vm2444, %v2568, 0.0
        %2629 = vadd.xlane.f32.xlu0 %v2628
        %v2630 = vpop.xlane.xlu0 %2629
        %v2631 = vsel %vm2444, %v2570, 0.0
        %2632 = vadd.xlane.f32.xlu0 %v2631
        %v2633 = vpop.xlane.xlu0 %2632
        %v2634 = vsel %vm2444, %v2572, 0.0
        %2635 = vadd.xlane.f32.xlu0 %v2634
        %v2636 = vpop.xlane.xlu0 %2635
        %v2637 = vsel %vm2444, %v2574, 0.0
        %2638 = vadd.xlane.f32.xlu0 %v2637
        %v2639 = vpop.xlane.xlu0 %2638
        %v2640 = vsel %vm2444, %v2576, 0.0
        %2641 = vadd.xlane.f32.xlu0 %v2640
        %v2642 = vpop.xlane.xlu0 %2641
        %v2643 = vsel %vm2444, %v2578, 0.0
        %2644 = vadd.xlane.f32.xlu0 %v2643
        %v2645 = vpop.xlane.xlu0 %2644
        %v2646 = vsel %vm2444, %v2580, 0.0
        %2647 = vadd.xlane.f32.xlu0 %v2646
        %v2648 = vpop.xlane.xlu0 %2647
        %v2649 = vsel %vm2444, %v2582, 0.0
        %2650 = vadd.xlane.f32.xlu0 %v2649
        %v2651 = vpop.xlane.xlu0 %2650
        %v2652 = vsel %vm2444, %v2584, 0.0
        %2653 = vadd.xlane.f32.xlu0 %v2652
        %v2654 = vpop.xlane.xlu0 %2653
        %v2655 = vsel %vm2444, %v2586, 0.0
        %2656 = vadd.xlane.f32.xlu0 %v2655
        %v2657 = vpop.xlane.xlu0 %2656
        %v2658 = vsel %vm2444, %v2588, 0.0
        %2659 = vadd.xlane.f32.xlu0 %v2658
        %v2660 = vpop.xlane.xlu0 %2659
        %v2661 = vrcp.pop %v2591
        %v2662 = vrcp.pop %v2594
        %v2663 = vrcp.pop %v2597
        %v2664 = vrcp.pop %v2600
        %v2665 = vrcp.pop %v2603
        %v2666 = vrcp.pop %v2606
        %v2667 = vrcp.pop %v2609
        %v2668 = vrcp.pop %v2612
        %v2669 = vrcp.pop %v2615
        %v2670 = vrcp.pop %v2618
        %v2671 = vrcp.pop %v2621
        %v2672 = vrcp.pop %v2624
        %v2673 = vrcp.pop %v2627
        %v2674 = vrcp.pop %v2630
        %v2675 = vrcp.pop %v2633
        %v2676 = vrcp.pop %v2636
        %v2677 = vrcp.pop %v2639
        %v2678 = vrcp.pop %v2642
        %v2679 = vrcp.pop %v2645
        %v2680 = vrcp.pop %v2648
        %v2681 = vrcp.pop %v2651
        %v2682 = vrcp.pop %v2654
        %v2683 = vrcp.pop %v2657
        %v2684 = vrcp.pop %v2660
        %v2685 = vmul.f32 %v2542, %v2661
        %v2686 = vmul.f32 %v2544, %v2662
        %v2687 = vmul.f32 %v2546, %v2663
        %v2688 = vmul.f32 %v2548, %v2664
        %v2689 = vmul.f32 %v2550, %v2665
        %v2690 = vmul.f32 %v2552, %v2666
        %v2691 = vmul.f32 %v2554, %v2667
        %v2692 = vmul.f32 %v2556, %v2668
        %v2693 = vmul.f32 %v2558, %v2669
        %v2694 = vmul.f32 %v2560, %v2670
        %v2695 = vmul.f32 %v2562, %v2671
        %v2696 = vmul.f32 %v2564, %v2672
        %v2697 = vmul.f32 %v2566, %v2673
        %v2698 = vmul.f32 %v2568, %v2674
        %v2699 = vmul.f32 %v2570, %v2675
        %v2700 = vmul.f32 %v2572, %v2676
        %v2701 = vmul.f32 %v2574, %v2677
        %v2702 = vmul.f32 %v2576, %v2678
        %v2703 = vmul.f32 %v2578, %v2679
        %v2704 = vmul.f32 %v2580, %v2680
        %v2705 = vmul.f32 %v2582, %v2681
        %v2706 = vmul.f32 %v2584, %v2682
        %v2707 = vmul.f32 %v2586, %v2683
        %v2708 = vmul.f32 %v2588, %v2684
        %v2709 = vpack.c.bf16 %v2685, %v2685
        %v2710 = vpack.c.bf16 %v2686, %v2686
        %v2711 = vpack.c.bf16 %v2687, %v2687
        %v2712 = vpack.c.bf16 %v2688, %v2688
        %v2713 = vpack.c.bf16 %v2689, %v2689
        %v2714 = vpack.c.bf16 %v2690, %v2690
        %v2715 = vpack.c.bf16 %v2691, %v2691
        %v2716 = vpack.c.bf16 %v2692, %v2692
        %v2717 = vpack.c.bf16 %v2693, %v2693
        %v2718 = vpack.c.bf16 %v2694, %v2694
        %v2719 = vpack.c.bf16 %v2695, %v2695
        %v2720 = vpack.c.bf16 %v2696, %v2696
        %v2721 = vpack.c.bf16 %v2697, %v2697
        %v2722 = vpack.c.bf16 %v2698, %v2698
        %v2723 = vpack.c.bf16 %v2699, %v2699
        %v2724 = vpack.c.bf16 %v2700, %v2700
        %v2725 = vpack.c.bf16 %v2701, %v2701
        %v2726 = vpack.c.bf16 %v2702, %v2702
        %v2727 = vpack.c.bf16 %v2703, %v2703
        %v2728 = vpack.c.bf16 %v2704, %v2704
        %v2729 = vpack.c.bf16 %v2705, %v2705
        %v2730 = vpack.c.bf16 %v2706, %v2706
        %v2731 = vpack.c.bf16 %v2707, %v2707
        %v2732 = vpack.c.bf16 %v2708, %v2708
        %v2733 = vld [vmem:[#allocation2 + $0x18] sm:$0xf]
        %v2734 = vld [vmem:[#allocation2 + $0x3c] sm:$0xf]
        %v2735 = vld [vmem:[#allocation2 + $0x60] sm:$0xf]
        %v2736 = vld [vmem:[#allocation2 + $0x84] sm:$0xf]
        %v2741 = vunpack.c.l.b16 %v2709
        %v2742 = vunpack.c.l.b16 %v2710
        %v2743 = vunpack.c.l.b16 %v2711
        %v2744 = vunpack.c.l.b16 %v2712
        %v2745 = vpack.c.b16 %v2742, %v2741
        %v2746 = vpack.c.b16 %v2744, %v2743
        %v2751 = vunpack.c.l.b16 %v2733
        %v2752 = vunpack.c.l.b16 %v2734
        %v2753 = vunpack.c.l.b16 %v2735
        %v2754 = vunpack.c.l.b16 %v2736
        %v2755 = vpack.c.b16 %v2752, %v2751
        %v2756 = vpack.c.b16 %v2754, %v2753
        %v2760 = vsel %vm2444, %v2745, 0
        %v2763 = vsel %vm2444, %v2746, 0
        %2765 = vmatpush.bf16.msra.mxu0 0
        %2766 = vmatpush.bf16.msra.mxu0 0
        %2767 = vmatpush.bf16.msra.mxu0 0
        %2768 = vmatpush.bf16.msra.mxu0 0
        %2769 = vmatpush.bf16.msra.mxu0 0
        %2770 = vmatpush.bf16.msra.mxu0 0
        %2771 = vmatpush.bf16.msra.mxu0 %v2756
        %2772 = vmatpush.bf16.msra.mxu0 %v2755
        %2773 = vmatmul.bf16.gmra.mxu0 %v2760
        %v2774 = vpop.f32.mrf.mxu0
        %v2775 = vadd.f32 0.0, %v2774
        %v2776 = vpop.f32.mrf.mxu0
        %v2777 = vadd.f32 0.0, %v2776
        %2778 = vmatmul.bf16.gmra.mxu0 %v2763
        %v2779 = vpop.f32.mrf.mxu0
        %v2780 = vadd.f32 0.0, %v2779
        %v2781 = vpop.f32.mrf.mxu0
        %v2782 = vadd.f32 0.0, %v2781
        %2783 = vdwg.mxu0
        %v2784 = vpack.c.bf16 %v2777, %v2775
        %v2785 = vpack.c.bf16 %v2782, %v2780
        %v2786 = vld [vmem:[%s2] sm:$0xff]
        %v2787 = vld [vmem:[%s2 + $0x8] sm:$0xf]
        %v2788 = vld [vmem:[%s2 + $0xc] sm:$0xff]
        %v2789 = vld [vmem:[%s2 + $0x14] sm:$0xf]
        %v2790 = vld [vmem:[%s2 + $0x18] sm:$0xff]
        %v2791 = vld [vmem:[%s2 + $0x20] sm:$0xf]
        %v2792 = vld [vmem:[%s2 + $0x24] sm:$0xff]
        %v2793 = vld [vmem:[%s2 + $0x2c] sm:$0xf]
        %v2794 = vld [vmem:[%s2 + $0x30] sm:$0xff]
        %v2795 = vld [vmem:[%s2 + $0x38] sm:$0xf]
        %v2796 = vld [vmem:[%s2 + $0x3c] sm:$0xff]
        %v2797 = vld [vmem:[%s2 + $0x44] sm:$0xf]
        %v2798 = vld [vmem:[%s2 + $0x48] sm:$0xff]
        %v2799 = vld [vmem:[%s2 + $0x50] sm:$0xf]
        %v2800 = vld [vmem:[%s2 + $0x54] sm:$0xff]
        %v2801 = vld [vmem:[%s2 + $0x5c] sm:$0xf]
        %v2806 = vunpack.c.l.b16 %v2713
        %v2807 = vunpack.c.l.b16 %v2714
        %v2808 = vunpack.c.l.b16 %v2715
        %v2809 = vunpack.c.l.b16 %v2716
        %v2810 = vpack.c.b16 %v2807, %v2806
        %v2811 = vpack.c.b16 %v2809, %v2808
        %2812 = vrot.lane.b32.xlu0 %v2755, 64
        %v2813 = vpop.permute.xlu0 %2812
        %2814 = vrot.lane.b32.xlu0 %v2756, 64
        %v2815 = vpop.permute.xlu0 %2814
        %v2819 = vsel %vm2444, %v2810, 0
        %v2822 = vsel %vm2444, %v2811, 0
        %2824 = vmatpush.bf16.msra.mxu0 0
        %2825 = vmatpush.bf16.msra.mxu0 0
        %2826 = vmatpush.bf16.msra.mxu0 0
        %2827 = vmatpush.bf16.msra.mxu0 0
        %2828 = vmatpush.bf16.msra.mxu0 0
        %2829 = vmatpush.bf16.msra.mxu0 0
        %2830 = vmatpush.bf16.msra.mxu0 %v2815
        %2831 = vmatpush.bf16.msra.mxu0 %v2813
        %2832 = vmatmul.bf16.gmra.mxu0 %v2819
        %v2833 = vpop.f32.mrf.mxu0
        %v2834 = vadd.f32 0.0, %v2833
        %v2835 = vpop.f32.mrf.mxu0
        %v2836 = vadd.f32 0.0, %v2835
        %2837 = vmatmul.bf16.gmra.mxu0 %v2822
        %v2838 = vpop.f32.mrf.mxu0
        %v2839 = vadd.f32 0.0, %v2838
        %v2840 = vpop.f32.mrf.mxu0
        %v2841 = vadd.f32 0.0, %v2840
        %2842 = vdwg.mxu0
        %v2843 = vpack.c.bf16 %v2836, %v2834
        %v2844 = vpack.c.bf16 %v2841, %v2839
        %v2845 = vld [vmem:[%s2 + $0x60] sm:$0xff]
        %v2846 = vld [vmem:[%s2 + $0x68] sm:$0xf]
        %v2847 = vld [vmem:[%s2 + $0x6c] sm:$0xff]
        %v2848 = vld [vmem:[%s2 + $0x74] sm:$0xf]
        %v2849 = vld [vmem:[%s2 + $0x78] sm:$0xff]
        %v2850 = vld [vmem:[%s2 + $0x80] sm:$0xf]
        %v2851 = vld [vmem:[%s2 + $0x84] sm:$0xff]
        %v2852 = vld [vmem:[%s2 + $0x8c] sm:$0xf]
        %v2853 = vld [vmem:[%s2 + $0x90] sm:$0xff]
        %v2854 = vld [vmem:[%s2 + $0x98] sm:$0xf]
        %v2855 = vld [vmem:[%s2 + $0x9c] sm:$0xff]
        %v2856 = vld [vmem:[%s2 + $0xa4] sm:$0xf]
        %v2857 = vld [vmem:[%s2 + $0xa8] sm:$0xff]
        %v2858 = vld [vmem:[%s2 + $0xb0] sm:$0xf]
        %v2859 = vld [vmem:[%s2 + $0xb4] sm:$0xff]
        %v2860 = vld [vmem:[%s2 + $0xbc] sm:$0xf]
        %v2877 = vunpack.c.l.b16 %v2845
        %v2878 = vunpack.c.h.b16 %v2845
        %v2879 = vunpack.c.l.b16 %v2846
        %v2880 = vunpack.c.l.b16 %v2847
        %v2881 = vunpack.c.h.b16 %v2847
        %v2882 = vunpack.c.l.b16 %v2848
        %v2883 = vunpack.c.l.b16 %v2849
        %v2884 = vunpack.c.h.b16 %v2849
        %v2885 = vunpack.c.l.b16 %v2850
        %v2886 = vunpack.c.l.b16 %v2851
        %v2887 = vunpack.c.h.b16 %v2851
        %v2888 = vunpack.c.l.b16 %v2852
        %v2889 = vunpack.c.l.b16 %v2853
        %v2890 = vunpack.c.h.b16 %v2853
        %v2891 = vunpack.c.l.b16 %v2854
        %v2892 = vunpack.c.l.b16 %v2855
        %v2893 = vunpack.c.h.b16 %v2855
        %v2894 = vunpack.c.l.b16 %v2856
        %v2895 = vunpack.c.l.b16 %v2857
        %v2896 = vunpack.c.h.b16 %v2857
        %v2897 = vunpack.c.l.b16 %v2858
        %v2898 = vunpack.c.l.b16 %v2859
        %v2899 = vunpack.c.h.b16 %v2859
        %v2900 = vunpack.c.l.b16 %v2860
        %v2901 = vpack.c.b16 %v2880, %v2877
        %v2902 = vpack.c.b16 %v2881, %v2878
        %v2903 = vpack.c.b16 %v2882, %v2879
        %v2904 = vpack.c.b16 %v2886, %v2883
        %v2905 = vpack.c.b16 %v2887, %v2884
        %v2906 = vpack.c.b16 %v2888, %v2885
        %v2907 = vpack.c.b16 %v2892, %v2889
        %v2908 = vpack.c.b16 %v2893, %v2890
        %v2909 = vpack.c.b16 %v2894, %v2891
        %v2910 = vpack.c.b16 %v2898, %v2895
        %v2911 = vpack.c.b16 %v2899, %v2896
        %v2912 = vpack.c.b16 %v2900, %v2897
        %v2926 = vsel %vm2177, %v2843, 0
        %v2929 = vsel %vm2177, %v2844, 0
        %2931 = vmatpush.bf16.msra.mxu0 0
        %2932 = vmatpush.bf16.msra.mxu0 0
        %2933 = vmatpush.bf16.msra.mxu0 0
        %2934 = vmatpush.bf16.msra.mxu0 0
        %2935 = vmatpush.bf16.msra.mxu0 %v2910
        %2936 = vmatpush.bf16.msra.mxu0 %v2907
        %2937 = vmatpush.bf16.msra.mxu0 %v2904
        %2938 = vmatpush.bf16.msra.mxu0 %v2901
        %2939 = vmatmul.bf16.gmra.mxu0 %v2926
        %v2940 = vpop.f32.mrf.mxu0
        %v2941 = vadd.f32 0.0, %v2940
        %v2942 = vpop.f32.mrf.mxu0
        %v2943 = vadd.f32 0.0, %v2942
        %2944 = vmatmul.bf16.gmra.mxu0 %v2929
        %v2945 = vpop.f32.mrf.mxu0
        %v2946 = vadd.f32 0.0, %v2945
        %v2947 = vpop.f32.mrf.mxu0
        %v2948 = vadd.f32 0.0, %v2947
        %2949 = vdwg.mxu0
        %2950 = vmatpush.bf16.msra.mxu0 0
        %2951 = vmatpush.bf16.msra.mxu0 0
        %2952 = vmatpush.bf16.msra.mxu0 0
        %2953 = vmatpush.bf16.msra.mxu0 0
        %2954 = vmatpush.bf16.msra.mxu0 %v2911
        %2955 = vmatpush.bf16.msra.mxu0 %v2908
        %2956 = vmatpush.bf16.msra.mxu0 %v2905
        %2957 = vmatpush.bf16.msra.mxu0 %v2902
        %2958 = vmatmul.bf16.gmra.mxu0 %v2926
        %v2959 = vpop.f32.mrf.mxu0
        %v2960 = vadd.f32 0.0, %v2959
        %v2961 = vpop.f32.mrf.mxu0
        %v2962 = vadd.f32 0.0, %v2961
        %2963 = vmatmul.bf16.gmra.mxu0 %v2929
        %v2964 = vpop.f32.mrf.mxu0
        %v2965 = vadd.f32 0.0, %v2964
        %v2966 = vpop.f32.mrf.mxu0
        %v2967 = vadd.f32 0.0, %v2966
        %2968 = vdwg.mxu0
        %2969 = vmatpush.bf16.msra.mxu0 0
        %2970 = vmatpush.bf16.msra.mxu0 0
        %2971 = vmatpush.bf16.msra.mxu0 0
        %2972 = vmatpush.bf16.msra.mxu0 0
        %2973 = vmatpush.bf16.msra.mxu0 %v2912
        %2974 = vmatpush.bf16.msra.mxu0 %v2909
        %2975 = vmatpush.bf16.msra.mxu0 %v2906
        %2976 = vmatpush.bf16.msra.mxu0 %v2903
        %2977 = vmatmul.bf16.gmra.mxu0 %v2926
        %v2978 = vpop.f32.mrf.mxu0
        %v2979 = vadd.f32 0.0, %v2978
        %v2980 = vpop.f32.mrf.mxu0
        %v2981 = vadd.f32 0.0, %v2980
        %2982 = vmatmul.bf16.gmra.mxu0 %v2929
        %v2983 = vpop.f32.mrf.mxu0
        %v2984 = vadd.f32 0.0, %v2983
        %v2985 = vpop.f32.mrf.mxu0
        %v2986 = vadd.f32 0.0, %v2985
        %2987 = vdwg.mxu0
        %v3004 = vunpack.c.l.b16 %v2786
        %v3005 = vunpack.c.h.b16 %v2786
        %v3006 = vunpack.c.l.b16 %v2787
        %v3007 = vunpack.c.l.b16 %v2788
        %v3008 = vunpack.c.h.b16 %v2788
        %v3009 = vunpack.c.l.b16 %v2789
        %v3010 = vunpack.c.l.b16 %v2790
        %v3011 = vunpack.c.h.b16 %v2790
        %v3012 = vunpack.c.l.b16 %v2791
        %v3013 = vunpack.c.l.b16 %v2792
        %v3014 = vunpack.c.h.b16 %v2792
        %v3015 = vunpack.c.l.b16 %v2793
        %v3016 = vunpack.c.l.b16 %v2794
        %v3017 = vunpack.c.h.b16 %v2794
        %v3018 = vunpack.c.l.b16 %v2795
        %v3019 = vunpack.c.l.b16 %v2796
        %v3020 = vunpack.c.h.b16 %v2796
        %v3021 = vunpack.c.l.b16 %v2797
        %v3022 = vunpack.c.l.b16 %v2798
        %v3023 = vunpack.c.h.b16 %v2798
        %v3024 = vunpack.c.l.b16 %v2799
        %v3025 = vunpack.c.l.b16 %v2800
        %v3026 = vunpack.c.h.b16 %v2800
        %v3027 = vunpack.c.l.b16 %v2801
        %v3028 = vpack.c.b16 %v3007, %v3004
        %v3029 = vpack.c.b16 %v3008, %v3005
        %v3030 = vpack.c.b16 %v3009, %v3006
        %v3031 = vpack.c.b16 %v3013, %v3010
        %v3032 = vpack.c.b16 %v3014, %v3011
        %v3033 = vpack.c.b16 %v3015, %v3012
        %v3034 = vpack.c.b16 %v3019, %v3016
        %v3035 = vpack.c.b16 %v3020, %v3017
        %v3036 = vpack.c.b16 %v3021, %v3018
        %v3037 = vpack.c.b16 %v3025, %v3022
        %v3038 = vpack.c.b16 %v3026, %v3023
        %v3039 = vpack.c.b16 %v3027, %v3024
        %v3053 = vsel %vm2177, %v2784, 0
        %v3056 = vsel %vm2177, %v2785, 0
        %3058 = vmatpush.bf16.msra.mxu0 0
        %3059 = vmatpush.bf16.msra.mxu0 0
        %3060 = vmatpush.bf16.msra.mxu0 0
        %3061 = vmatpush.bf16.msra.mxu0 0
        %3062 = vmatpush.bf16.msra.mxu0 %v3037
        %3063 = vmatpush.bf16.msra.mxu0 %v3034
        %3064 = vmatpush.bf16.msra.mxu0 %v3031
        %3065 = vmatpush.bf16.msra.mxu0 %v3028
        %3066 = vmatmul.bf16.gmra.mxu0 %v3053
        %v3067 = vpop.f32.mrf.mxu0
        %v3068 = vadd.f32 %v2941, %v3067
        %v3069 = vpop.f32.mrf.mxu0
        %v3070 = vadd.f32 %v2943, %v3069
        %3071 = vmatmul.bf16.gmra.mxu0 %v3056
        %v3072 = vpop.f32.mrf.mxu0
        %v3073 = vadd.f32 %v2946, %v3072
        %v3074 = vpop.f32.mrf.mxu0
        %v3075 = vadd.f32 %v2948, %v3074
        %3076 = vdwg.mxu0
        %3077 = vmatpush.bf16.msra.mxu0 0
        %3078 = vmatpush.bf16.msra.mxu0 0
        %3079 = vmatpush.bf16.msra.mxu0 0
        %3080 = vmatpush.bf16.msra.mxu0 0
        %3081 = vmatpush.bf16.msra.mxu0 %v3038
        %3082 = vmatpush.bf16.msra.mxu0 %v3035
        %3083 = vmatpush.bf16.msra.mxu0 %v3032
        %3084 = vmatpush.bf16.msra.mxu0 %v3029
        %3085 = vmatmul.bf16.gmra.mxu0 %v3053
        %v3086 = vpop.f32.mrf.mxu0
        %v3087 = vadd.f32 %v2960, %v3086
        %v3088 = vpop.f32.mrf.mxu0
        %v3089 = vadd.f32 %v2962, %v3088
        %3090 = vmatmul.bf16.gmra.mxu0 %v3056
        %v3091 = vpop.f32.mrf.mxu0
        %v3092 = vadd.f32 %v2965, %v3091
        %v3093 = vpop.f32.mrf.mxu0
        %v3094 = vadd.f32 %v2967, %v3093
        %3095 = vdwg.mxu0
        %3096 = vmatpush.bf16.msra.mxu0 0
        %3097 = vmatpush.bf16.msra.mxu0 0
        %3098 = vmatpush.bf16.msra.mxu0 0
        %3099 = vmatpush.bf16.msra.mxu0 0
        %3100 = vmatpush.bf16.msra.mxu0 %v3039
        %3101 = vmatpush.bf16.msra.mxu0 %v3036
        %3102 = vmatpush.bf16.msra.mxu0 %v3033
        %3103 = vmatpush.bf16.msra.mxu0 %v3030
        %3104 = vmatmul.bf16.gmra.mxu0 %v3053
        %v3105 = vpop.f32.mrf.mxu0
        %v3106 = vadd.f32 %v2979, %v3105
        %v3107 = vpop.f32.mrf.mxu0
        %v3108 = vadd.f32 %v2981, %v3107
        %3109 = vmatmul.bf16.gmra.mxu0 %v3056
        %v3110 = vpop.f32.mrf.mxu0
        %v3111 = vadd.f32 %v2984, %v3110
        %v3112 = vpop.f32.mrf.mxu0
        %v3113 = vadd.f32 %v2986, %v3112
        %3114 = vdwg.mxu0
        %v3115 = vld [vmem:[#allocation2 + $0x1c] sm:$0xf]
        %v3116 = vld [vmem:[#allocation2 + $0x40] sm:$0xf]
        %v3117 = vld [vmem:[#allocation2 + $0x64] sm:$0xf]
        %v3118 = vld [vmem:[#allocation2 + $0x88] sm:$0xf]
        %v3123 = vunpack.c.l.b16 %v2717
        %v3124 = vunpack.c.l.b16 %v2718
        %v3125 = vunpack.c.l.b16 %v2719
        %v3126 = vunpack.c.l.b16 %v2720
        %v3127 = vpack.c.b16 %v3124, %v3123
        %v3128 = vpack.c.b16 %v3126, %v3125
        %v3133 = vunpack.c.l.b16 %v3115
        %v3134 = vunpack.c.l.b16 %v3116
        %v3135 = vunpack.c.l.b16 %v3117
        %v3136 = vunpack.c.l.b16 %v3118
        %v3137 = vpack.c.b16 %v3134, %v3133
        %v3138 = vpack.c.b16 %v3136, %v3135
        %v3142 = vsel %vm2444, %v3127, 0
        %v3145 = vsel %vm2444, %v3128, 0
        %3147 = vmatpush.bf16.msra.mxu0 0
        %3148 = vmatpush.bf16.msra.mxu0 0
        %3149 = vmatpush.bf16.msra.mxu0 0
        %3150 = vmatpush.bf16.msra.mxu0 0
        %3151 = vmatpush.bf16.msra.mxu0 0
        %3152 = vmatpush.bf16.msra.mxu0 0
        %3153 = vmatpush.bf16.msra.mxu0 %v3138
        %3154 = vmatpush.bf16.msra.mxu0 %v3137
        %3155 = vmatmul.bf16.gmra.mxu0 %v3142
        %v3156 = vpop.f32.mrf.mxu0
        %v3157 = vadd.f32 0.0, %v3156
        %v3158 = vpop.f32.mrf.mxu0
        %v3159 = vadd.f32 0.0, %v3158
        %3160 = vmatmul.bf16.gmra.mxu0 %v3145
        %v3161 = vpop.f32.mrf.mxu0
        %v3162 = vadd.f32 0.0, %v3161
        %v3163 = vpop.f32.mrf.mxu0
        %v3164 = vadd.f32 0.0, %v3163
        %3165 = vdwg.mxu0
        %v3166 = vpack.c.bf16 %v3159, %v3157
        %v3167 = vpack.c.bf16 %v3164, %v3162
        %v3168 = vld [vmem:[%s2 + $0xc0] sm:$0xff]
        %v3169 = vld [vmem:[%s2 + $0xc8] sm:$0xf]
        %v3170 = vld [vmem:[%s2 + $0xcc] sm:$0xff]
        %v3171 = vld [vmem:[%s2 + $0xd4] sm:$0xf]
        %v3172 = vld [vmem:[%s2 + $0xd8] sm:$0xff]
        %v3173 = vld [vmem:[%s2 + $0xe0] sm:$0xf]
        %v3174 = vld [vmem:[%s2 + $0xe4] sm:$0xff]
        %v3175 = vld [vmem:[%s2 + $0xec] sm:$0xf]
        %v3176 = vld [vmem:[%s2 + $0xf0] sm:$0xff]
        %v3177 = vld [vmem:[%s2 + $0xf8] sm:$0xf]
        %v3178 = vld [vmem:[%s2 + $0xfc] sm:$0xff]
        %v3179 = vld [vmem:[%s2 + $0x104] sm:$0xf]
        %v3180 = vld [vmem:[%s2 + $0x108] sm:$0xff]
        %v3181 = vld [vmem:[%s2 + $0x110] sm:$0xf]
        %v3182 = vld [vmem:[%s2 + $0x114] sm:$0xff]
        %v3183 = vld [vmem:[%s2 + $0x11c] sm:$0xf]
        %v3200 = vunpack.c.l.b16 %v3168
        %v3201 = vunpack.c.h.b16 %v3168
        %v3202 = vunpack.c.l.b16 %v3169
        %v3203 = vunpack.c.l.b16 %v3170
        %v3204 = vunpack.c.h.b16 %v3170
        %v3205 = vunpack.c.l.b16 %v3171
        %v3206 = vunpack.c.l.b16 %v3172
        %v3207 = vunpack.c.h.b16 %v3172
        %v3208 = vunpack.c.l.b16 %v3173
        %v3209 = vunpack.c.l.b16 %v3174
        %v3210 = vunpack.c.h.b16 %v3174
        %v3211 = vunpack.c.l.b16 %v3175
        %v3212 = vunpack.c.l.b16 %v3176
        %v3213 = vunpack.c.h.b16 %v3176
        %v3214 = vunpack.c.l.b16 %v3177
        %v3215 = vunpack.c.l.b16 %v3178
        %v3216 = vunpack.c.h.b16 %v3178
        %v3217 = vunpack.c.l.b16 %v3179
        %v3218 = vunpack.c.l.b16 %v3180
        %v3219 = vunpack.c.h.b16 %v3180
        %v3220 = vunpack.c.l.b16 %v3181
        %v3221 = vunpack.c.l.b16 %v3182
        %v3222 = vunpack.c.h.b16 %v3182
        %v3223 = vunpack.c.l.b16 %v3183
        %v3224 = vpack.c.b16 %v3203, %v3200
        %v3225 = vpack.c.b16 %v3204, %v3201
        %v3226 = vpack.c.b16 %v3205, %v3202
        %v3227 = vpack.c.b16 %v3209, %v3206
        %v3228 = vpack.c.b16 %v3210, %v3207
        %v3229 = vpack.c.b16 %v3211, %v3208
        %v3230 = vpack.c.b16 %v3215, %v3212
        %v3231 = vpack.c.b16 %v3216, %v3213
        %v3232 = vpack.c.b16 %v3217, %v3214
        %v3233 = vpack.c.b16 %v3221, %v3218
        %v3234 = vpack.c.b16 %v3222, %v3219
        %v3235 = vpack.c.b16 %v3223, %v3220
        %v3249 = vsel %vm2177, %v3166, 0
        %v3252 = vsel %vm2177, %v3167, 0
        %3254 = vmatpush.bf16.msra.mxu0 0
        %3255 = vmatpush.bf16.msra.mxu0 0
        %3256 = vmatpush.bf16.msra.mxu0 0
        %3257 = vmatpush.bf16.msra.mxu0 0
        %3258 = vmatpush.bf16.msra.mxu0 %v3233
        %3259 = vmatpush.bf16.msra.mxu0 %v3230
        %3260 = vmatpush.bf16.msra.mxu0 %v3227
        %3261 = vmatpush.bf16.msra.mxu0 %v3224
        %3262 = vmatmul.bf16.gmra.mxu0 %v3249
        %v3263 = vpop.f32.mrf.mxu0
        %v3264 = vadd.f32 0.0, %v3263
        %v3265 = vpop.f32.mrf.mxu0
        %v3266 = vadd.f32 0.0, %v3265
        %3267 = vmatmul.bf16.gmra.mxu0 %v3252
        %v3268 = vpop.f32.mrf.mxu0
        %v3269 = vadd.f32 0.0, %v3268
        %v3270 = vpop.f32.mrf.mxu0
        %v3271 = vadd.f32 0.0, %v3270
        %3272 = vdwg.mxu0
        %3273 = vmatpush.bf16.msra.mxu0 0
        %3274 = vmatpush.bf16.msra.mxu0 0
        %3275 = vmatpush.bf16.msra.mxu0 0
        %3276 = vmatpush.bf16.msra.mxu0 0
        %3277 = vmatpush.bf16.msra.mxu0 %v3234
        %3278 = vmatpush.bf16.msra.mxu0 %v3231
        %3279 = vmatpush.bf16.msra.mxu0 %v3228
        %3280 = vmatpush.bf16.msra.mxu0 %v3225
        %3281 = vmatmul.bf16.gmra.mxu0 %v3249
        %v3282 = vpop.f32.mrf.mxu0
        %v3283 = vadd.f32 0.0, %v3282
        %v3284 = vpop.f32.mrf.mxu0
        %v3285 = vadd.f32 0.0, %v3284
        %3286 = vmatmul.bf16.gmra.mxu0 %v3252
        %v3287 = vpop.f32.mrf.mxu0
        %v3288 = vadd.f32 0.0, %v3287
        %v3289 = vpop.f32.mrf.mxu0
        %v3290 = vadd.f32 0.0, %v3289
        %3291 = vdwg.mxu0
        %3292 = vmatpush.bf16.msra.mxu0 0
        %3293 = vmatpush.bf16.msra.mxu0 0
        %3294 = vmatpush.bf16.msra.mxu0 0
        %3295 = vmatpush.bf16.msra.mxu0 0
        %3296 = vmatpush.bf16.msra.mxu0 %v3235
        %3297 = vmatpush.bf16.msra.mxu0 %v3232
        %3298 = vmatpush.bf16.msra.mxu0 %v3229
        %3299 = vmatpush.bf16.msra.mxu0 %v3226
        %3300 = vmatmul.bf16.gmra.mxu0 %v3249
        %v3301 = vpop.f32.mrf.mxu0
        %v3302 = vadd.f32 0.0, %v3301
        %v3303 = vpop.f32.mrf.mxu0
        %v3304 = vadd.f32 0.0, %v3303
        %3305 = vmatmul.bf16.gmra.mxu0 %v3252
        %v3306 = vpop.f32.mrf.mxu0
        %v3307 = vadd.f32 0.0, %v3306
        %v3308 = vpop.f32.mrf.mxu0
        %v3309 = vadd.f32 0.0, %v3308
        %3310 = vdwg.mxu0
        %v3311 = vadd.f32 %v3068, %v3264
        %v3312 = vadd.f32 %v3087, %v3283
        %v3313 = vadd.f32 %v3106, %v3302
        %v3314 = vadd.f32 %v3070, %v3266
        %v3315 = vadd.f32 %v3089, %v3285
        %v3316 = vadd.f32 %v3108, %v3304
        %v3317 = vadd.f32 %v3073, %v3269
        %v3318 = vadd.f32 %v3092, %v3288
        %v3319 = vadd.f32 %v3111, %v3307
        %v3320 = vadd.f32 %v3075, %v3271
        %v3321 = vadd.f32 %v3094, %v3290
        %v3322 = vadd.f32 %v3113, %v3309
        %v3327 = vunpack.c.l.b16 %v2721
        %v3328 = vunpack.c.l.b16 %v2722
        %v3329 = vunpack.c.l.b16 %v2723
        %v3330 = vunpack.c.l.b16 %v2724
        %v3331 = vpack.c.b16 %v3328, %v3327
        %v3332 = vpack.c.b16 %v3330, %v3329
        %3333 = vrot.lane.b32.xlu0 %v3137, 64
        %v3334 = vpop.permute.xlu0 %3333
        %3335 = vrot.lane.b32.xlu0 %v3138, 64
        %v3336 = vpop.permute.xlu0 %3335
        %v3340 = vsel %vm2444, %v3331, 0
        %v3343 = vsel %vm2444, %v3332, 0
        %3345 = vmatpush.bf16.msra.mxu0 0
        %3346 = vmatpush.bf16.msra.mxu0 0
        %3347 = vmatpush.bf16.msra.mxu0 0
        %3348 = vmatpush.bf16.msra.mxu0 0
        %3349 = vmatpush.bf16.msra.mxu0 0
        %3350 = vmatpush.bf16.msra.mxu0 0
        %3351 = vmatpush.bf16.msra.mxu0 %v3336
        %3352 = vmatpush.bf16.msra.mxu0 %v3334
        %3353 = vmatmul.bf16.gmra.mxu0 %v3340
        %v3354 = vpop.f32.mrf.mxu0
        %v3355 = vadd.f32 0.0, %v3354
        %v3356 = vpop.f32.mrf.mxu0
        %v3357 = vadd.f32 0.0, %v3356
        %3358 = vmatmul.bf16.gmra.mxu0 %v3343
        %v3359 = vpop.f32.mrf.mxu0
        %v3360 = vadd.f32 0.0, %v3359
        %v3361 = vpop.f32.mrf.mxu0
        %v3362 = vadd.f32 0.0, %v3361
        %3363 = vdwg.mxu0
        %v3364 = vpack.c.bf16 %v3357, %v3355
        %v3365 = vpack.c.bf16 %v3362, %v3360
        %v3366 = vld [vmem:[%s2 + $0x120] sm:$0xff]
        %v3367 = vld [vmem:[%s2 + $0x128] sm:$0xf]
        %v3368 = vld [vmem:[%s2 + $0x12c] sm:$0xff]
        %v3369 = vld [vmem:[%s2 + $0x134] sm:$0xf]
        %v3370 = vld [vmem:[%s2 + $0x138] sm:$0xff]
        %v3371 = vld [vmem:[%s2 + $0x140] sm:$0xf]
        %v3372 = vld [vmem:[%s2 + $0x144] sm:$0xff]
        %v3373 = vld [vmem:[%s2 + $0x14c] sm:$0xf]
        %v3374 = vld [vmem:[%s2 + $0x150] sm:$0xff]
        %v3375 = vld [vmem:[%s2 + $0x158] sm:$0xf]
        %v3376 = vld [vmem:[%s2 + $0x15c] sm:$0xff]
        %v3377 = vld [vmem:[%s2 + $0x164] sm:$0xf]
        %v3378 = vld [vmem:[%s2 + $0x168] sm:$0xff]
        %v3379 = vld [vmem:[%s2 + $0x170] sm:$0xf]
        %v3380 = vld [vmem:[%s2 + $0x174] sm:$0xff]
        %v3381 = vld [vmem:[%s2 + $0x17c] sm:$0xf]
        %v3398 = vunpack.c.l.b16 %v3366
        %v3399 = vunpack.c.h.b16 %v3366
        %v3400 = vunpack.c.l.b16 %v3367
        %v3401 = vunpack.c.l.b16 %v3368
        %v3402 = vunpack.c.h.b16 %v3368
        %v3403 = vunpack.c.l.b16 %v3369
        %v3404 = vunpack.c.l.b16 %v3370
        %v3405 = vunpack.c.h.b16 %v3370
        %v3406 = vunpack.c.l.b16 %v3371
        %v3407 = vunpack.c.l.b16 %v3372
        %v3408 = vunpack.c.h.b16 %v3372
        %v3409 = vunpack.c.l.b16 %v3373
        %v3410 = vunpack.c.l.b16 %v3374
        %v3411 = vunpack.c.h.b16 %v3374
        %v3412 = vunpack.c.l.b16 %v3375
        %v3413 = vunpack.c.l.b16 %v3376
        %v3414 = vunpack.c.h.b16 %v3376
        %v3415 = vunpack.c.l.b16 %v3377
        %v3416 = vunpack.c.l.b16 %v3378
        %v3417 = vunpack.c.h.b16 %v3378
        %v3418 = vunpack.c.l.b16 %v3379
        %v3419 = vunpack.c.l.b16 %v3380
        %v3420 = vunpack.c.h.b16 %v3380
        %v3421 = vunpack.c.l.b16 %v3381
        %v3422 = vpack.c.b16 %v3401, %v3398
        %v3423 = vpack.c.b16 %v3402, %v3399
        %v3424 = vpack.c.b16 %v3403, %v3400
        %v3425 = vpack.c.b16 %v3407, %v3404
        %v3426 = vpack.c.b16 %v3408, %v3405
        %v3427 = vpack.c.b16 %v3409, %v3406
        %v3428 = vpack.c.b16 %v3413, %v3410
        %v3429 = vpack.c.b16 %v3414, %v3411
        %v3430 = vpack.c.b16 %v3415, %v3412
        %v3431 = vpack.c.b16 %v3419, %v3416
        %v3432 = vpack.c.b16 %v3420, %v3417
        %v3433 = vpack.c.b16 %v3421, %v3418
        %v3447 = vsel %vm2177, %v3364, 0
        %v3450 = vsel %vm2177, %v3365, 0
        %3452 = vmatpush.bf16.msra.mxu0 0
        %3453 = vmatpush.bf16.msra.mxu0 0
        %3454 = vmatpush.bf16.msra.mxu0 0
        %3455 = vmatpush.bf16.msra.mxu0 0
        %3456 = vmatpush.bf16.msra.mxu0 %v3431
        %3457 = vmatpush.bf16.msra.mxu0 %v3428
        %3458 = vmatpush.bf16.msra.mxu0 %v3425
        %3459 = vmatpush.bf16.msra.mxu0 %v3422
        %3460 = vmatmul.bf16.gmra.mxu0 %v3447
        %v3461 = vpop.f32.mrf.mxu0
        %v3462 = vadd.f32 0.0, %v3461
        %v3463 = vpop.f32.mrf.mxu0
        %v3464 = vadd.f32 0.0, %v3463
        %3465 = vmatmul.bf16.gmra.mxu0 %v3450
        %v3466 = vpop.f32.mrf.mxu0
        %v3467 = vadd.f32 0.0, %v3466
        %v3468 = vpop.f32.mrf.mxu0
        %v3469 = vadd.f32 0.0, %v3468
        %3470 = vdwg.mxu0
        %3471 = vmatpush.bf16.msra.mxu0 0
        %3472 = vmatpush.bf16.msra.mxu0 0
        %3473 = vmatpush.bf16.msra.mxu0 0
        %3474 = vmatpush.bf16.msra.mxu0 0
        %3475 = vmatpush.bf16.msra.mxu0 %v3432
        %3476 = vmatpush.bf16.msra.mxu0 %v3429
        %3477 = vmatpush.bf16.msra.mxu0 %v3426
        %3478 = vmatpush.bf16.msra.mxu0 %v3423
        %3479 = vmatmul.bf16.gmra.mxu0 %v3447
        %v3480 = vpop.f32.mrf.mxu0
        %v3481 = vadd.f32 0.0, %v3480
        %v3482 = vpop.f32.mrf.mxu0
        %v3483 = vadd.f32 0.0, %v3482
        %3484 = vmatmul.bf16.gmra.mxu0 %v3450
        %v3485 = vpop.f32.mrf.mxu0
        %v3486 = vadd.f32 0.0, %v3485
        %v3487 = vpop.f32.mrf.mxu0
        %v3488 = vadd.f32 0.0, %v3487
        %3489 = vdwg.mxu0
        %3490 = vmatpush.bf16.msra.mxu0 0
        %3491 = vmatpush.bf16.msra.mxu0 0
        %3492 = vmatpush.bf16.msra.mxu0 0
        %3493 = vmatpush.bf16.msra.mxu0 0
        %3494 = vmatpush.bf16.msra.mxu0 %v3433
        %3495 = vmatpush.bf16.msra.mxu0 %v3430
        %3496 = vmatpush.bf16.msra.mxu0 %v3427
        %3497 = vmatpush.bf16.msra.mxu0 %v3424
        %3498 = vmatmul.bf16.gmra.mxu0 %v3447
        %v3499 = vpop.f32.mrf.mxu0
        %v3500 = vadd.f32 0.0, %v3499
        %v3501 = vpop.f32.mrf.mxu0
        %v3502 = vadd.f32 0.0, %v3501
        %3503 = vmatmul.bf16.gmra.mxu0 %v3450
        %v3504 = vpop.f32.mrf.mxu0
        %v3505 = vadd.f32 0.0, %v3504
        %v3506 = vpop.f32.mrf.mxu0
        %v3507 = vadd.f32 0.0, %v3506
        %3508 = vdwg.mxu0
        %v3509 = vadd.f32 %v3311, %v3462
        %v3510 = vadd.f32 %v3312, %v3481
        %v3511 = vadd.f32 %v3313, %v3500
        %v3512 = vadd.f32 %v3314, %v3464
        %v3513 = vadd.f32 %v3315, %v3483
        %v3514 = vadd.f32 %v3316, %v3502
        %v3515 = vadd.f32 %v3317, %v3467
        %v3516 = vadd.f32 %v3318, %v3486
        %v3517 = vadd.f32 %v3319, %v3505
        %v3518 = vadd.f32 %v3320, %v3469
        %v3519 = vadd.f32 %v3321, %v3488
        %v3520 = vadd.f32 %v3322, %v3507
        %v3521 = vld [vmem:[#allocation2 + $0x20] sm:$0xf]
        %v3522 = vld [vmem:[#allocation2 + $0x44] sm:$0xf]
        %v3523 = vld [vmem:[#allocation2 + $0x68] sm:$0xf]
        %v3524 = vld [vmem:[#allocation2 + $0x8c] sm:$0xf]
        %v3529 = vunpack.c.l.b16 %v2725
        %v3530 = vunpack.c.l.b16 %v2726
        %v3531 = vunpack.c.l.b16 %v2727
        %v3532 = vunpack.c.l.b16 %v2728
        %v3533 = vpack.c.b16 %v3530, %v3529
        %v3534 = vpack.c.b16 %v3532, %v3531
        %v3539 = vunpack.c.l.b16 %v3521
        %v3540 = vunpack.c.l.b16 %v3522
        %v3541 = vunpack.c.l.b16 %v3523
        %v3542 = vunpack.c.l.b16 %v3524
        %v3543 = vpack.c.b16 %v3540, %v3539
        %v3544 = vpack.c.b16 %v3542, %v3541
        %v3548 = vsel %vm2444, %v3533, 0
        %v3551 = vsel %vm2444, %v3534, 0
        %3553 = vmatpush.bf16.msra.mxu0 0
        %3554 = vmatpush.bf16.msra.mxu0 0
        %3555 = vmatpush.bf16.msra.mxu0 0
        %3556 = vmatpush.bf16.msra.mxu0 0
        %3557 = vmatpush.bf16.msra.mxu0 0
        %3558 = vmatpush.bf16.msra.mxu0 0
        %3559 = vmatpush.bf16.msra.mxu0 %v3544
        %3560 = vmatpush.bf16.msra.mxu0 %v3543
        %3561 = vmatmul.bf16.gmra.mxu0 %v3548
        %v3562 = vpop.f32.mrf.mxu0
        %v3563 = vadd.f32 0.0, %v3562
        %v3564 = vpop.f32.mrf.mxu0
        %v3565 = vadd.f32 0.0, %v3564
        %3566 = vmatmul.bf16.gmra.mxu0 %v3551
        %v3567 = vpop.f32.mrf.mxu0
        %v3568 = vadd.f32 0.0, %v3567
        %v3569 = vpop.f32.mrf.mxu0
        %v3570 = vadd.f32 0.0, %v3569
        %3571 = vdwg.mxu0
        %v3572 = vpack.c.bf16 %v3565, %v3563
        %v3573 = vpack.c.bf16 %v3570, %v3568
        %v3574 = vld [vmem:[%s2 + $0x180] sm:$0xff]
        %v3575 = vld [vmem:[%s2 + $0x188] sm:$0xf]
        %v3576 = vld [vmem:[%s2 + $0x18c] sm:$0xff]
        %v3577 = vld [vmem:[%s2 + $0x194] sm:$0xf]
        %v3578 = vld [vmem:[%s2 + $0x198] sm:$0xff]
        %v3579 = vld [vmem:[%s2 + $0x1a0] sm:$0xf]
        %v3580 = vld [vmem:[%s2 + $0x1a4] sm:$0xff]
        %v3581 = vld [vmem:[%s2 + $0x1ac] sm:$0xf]
        %v3582 = vld [vmem:[%s2 + $0x1b0] sm:$0xff]
        %v3583 = vld [vmem:[%s2 + $0x1b8] sm:$0xf]
        %v3584 = vld [vmem:[%s2 + $0x1bc] sm:$0xff]
        %v3585 = vld [vmem:[%s2 + $0x1c4] sm:$0xf]
        %v3586 = vld [vmem:[%s2 + $0x1c8] sm:$0xff]
        %v3587 = vld [vmem:[%s2 + $0x1d0] sm:$0xf]
        %v3588 = vld [vmem:[%s2 + $0x1d4] sm:$0xff]
        %v3589 = vld [vmem:[%s2 + $0x1dc] sm:$0xf]
        %v3606 = vunpack.c.l.b16 %v3574
        %v3607 = vunpack.c.h.b16 %v3574
        %v3608 = vunpack.c.l.b16 %v3575
        %v3609 = vunpack.c.l.b16 %v3576
        %v3610 = vunpack.c.h.b16 %v3576
        %v3611 = vunpack.c.l.b16 %v3577
        %v3612 = vunpack.c.l.b16 %v3578
        %v3613 = vunpack.c.h.b16 %v3578
        %v3614 = vunpack.c.l.b16 %v3579
        %v3615 = vunpack.c.l.b16 %v3580
        %v3616 = vunpack.c.h.b16 %v3580
        %v3617 = vunpack.c.l.b16 %v3581
        %v3618 = vunpack.c.l.b16 %v3582
        %v3619 = vunpack.c.h.b16 %v3582
        %v3620 = vunpack.c.l.b16 %v3583
        %v3621 = vunpack.c.l.b16 %v3584
        %v3622 = vunpack.c.h.b16 %v3584
        %v3623 = vunpack.c.l.b16 %v3585
        %v3624 = vunpack.c.l.b16 %v3586
        %v3625 = vunpack.c.h.b16 %v3586
        %v3626 = vunpack.c.l.b16 %v3587
        %v3627 = vunpack.c.l.b16 %v3588
        %v3628 = vunpack.c.h.b16 %v3588
        %v3629 = vunpack.c.l.b16 %v3589
        %v3630 = vpack.c.b16 %v3609, %v3606
        %v3631 = vpack.c.b16 %v3610, %v3607
        %v3632 = vpack.c.b16 %v3611, %v3608
        %v3633 = vpack.c.b16 %v3615, %v3612
        %v3634 = vpack.c.b16 %v3616, %v3613
        %v3635 = vpack.c.b16 %v3617, %v3614
        %v3636 = vpack.c.b16 %v3621, %v3618
        %v3637 = vpack.c.b16 %v3622, %v3619
        %v3638 = vpack.c.b16 %v3623, %v3620
        %v3639 = vpack.c.b16 %v3627, %v3624
        %v3640 = vpack.c.b16 %v3628, %v3625
        %v3641 = vpack.c.b16 %v3629, %v3626
        %v3655 = vsel %vm2177, %v3572, 0
        %v3658 = vsel %vm2177, %v3573, 0
        %3660 = vmatpush.bf16.msra.mxu0 0
        %3661 = vmatpush.bf16.msra.mxu0 0
        %3662 = vmatpush.bf16.msra.mxu0 0
        %3663 = vmatpush.bf16.msra.mxu0 0
        %3664 = vmatpush.bf16.msra.mxu0 %v3639
        %3665 = vmatpush.bf16.msra.mxu0 %v3636
        %3666 = vmatpush.bf16.msra.mxu0 %v3633
        %3667 = vmatpush.bf16.msra.mxu0 %v3630
        %3668 = vmatmul.bf16.gmra.mxu0 %v3655
        %v3669 = vpop.f32.mrf.mxu0
        %v3670 = vadd.f32 0.0, %v3669
        %v3671 = vpop.f32.mrf.mxu0
        %v3672 = vadd.f32 0.0, %v3671
        %3673 = vmatmul.bf16.gmra.mxu0 %v3658
        %v3674 = vpop.f32.mrf.mxu0
        %v3675 = vadd.f32 0.0, %v3674
        %v3676 = vpop.f32.mrf.mxu0
        %v3677 = vadd.f32 0.0, %v3676
        %3678 = vdwg.mxu0
        %3679 = vmatpush.bf16.msra.mxu0 0
        %3680 = vmatpush.bf16.msra.mxu0 0
        %3681 = vmatpush.bf16.msra.mxu0 0
        %3682 = vmatpush.bf16.msra.mxu0 0
        %3683 = vmatpush.bf16.msra.mxu0 %v3640
        %3684 = vmatpush.bf16.msra.mxu0 %v3637
        %3685 = vmatpush.bf16.msra.mxu0 %v3634
        %3686 = vmatpush.bf16.msra.mxu0 %v3631
        %3687 = vmatmul.bf16.gmra.mxu0 %v3655
        %v3688 = vpop.f32.mrf.mxu0
        %v3689 = vadd.f32 0.0, %v3688
        %v3690 = vpop.f32.mrf.mxu0
        %v3691 = vadd.f32 0.0, %v3690
        %3692 = vmatmul.bf16.gmra.mxu0 %v3658
        %v3693 = vpop.f32.mrf.mxu0
        %v3694 = vadd.f32 0.0, %v3693
        %v3695 = vpop.f32.mrf.mxu0
        %v3696 = vadd.f32 0.0, %v3695
        %3697 = vdwg.mxu0
        %3698 = vmatpush.bf16.msra.mxu0 0
        %3699 = vmatpush.bf16.msra.mxu0 0
        %3700 = vmatpush.bf16.msra.mxu0 0
        %3701 = vmatpush.bf16.msra.mxu0 0
        %3702 = vmatpush.bf16.msra.mxu0 %v3641
        %3703 = vmatpush.bf16.msra.mxu0 %v3638
        %3704 = vmatpush.bf16.msra.mxu0 %v3635
        %3705 = vmatpush.bf16.msra.mxu0 %v3632
        %3706 = vmatmul.bf16.gmra.mxu0 %v3655
        %v3707 = vpop.f32.mrf.mxu0
        %v3708 = vadd.f32 0.0, %v3707
        %v3709 = vpop.f32.mrf.mxu0
        %v3710 = vadd.f32 0.0, %v3709
        %3711 = vmatmul.bf16.gmra.mxu0 %v3658
        %v3712 = vpop.f32.mrf.mxu0
        %v3713 = vadd.f32 0.0, %v3712
        %v3714 = vpop.f32.mrf.mxu0
        %v3715 = vadd.f32 0.0, %v3714
        %3716 = vdwg.mxu0
        %v3717 = vadd.f32 %v3509, %v3670
        %v3718 = vadd.f32 %v3510, %v3689
        %v3719 = vadd.f32 %v3511, %v3708
        %v3720 = vadd.f32 %v3512, %v3672
        %v3721 = vadd.f32 %v3513, %v3691
        %v3722 = vadd.f32 %v3514, %v3710
        %v3723 = vadd.f32 %v3515, %v3675
        %v3724 = vadd.f32 %v3516, %v3694
        %v3725 = vadd.f32 %v3517, %v3713
        %v3726 = vadd.f32 %v3518, %v3677
        %v3727 = vadd.f32 %v3519, %v3696
        %v3728 = vadd.f32 %v3520, %v3715
        %v3733 = vunpack.c.l.b16 %v2729
        %v3734 = vunpack.c.l.b16 %v2730
        %v3735 = vunpack.c.l.b16 %v2731
        %v3736 = vunpack.c.l.b16 %v2732
        %v3737 = vpack.c.b16 %v3734, %v3733
        %v3738 = vpack.c.b16 %v3736, %v3735
        %3739 = vrot.lane.b32.xlu0 %v3543, 64
        %v3740 = vpop.permute.xlu0 %3739
        %3741 = vrot.lane.b32.xlu0 %v3544, 64
        %v3742 = vpop.permute.xlu0 %3741
        %v3746 = vsel %vm2444, %v3737, 0
        %v3749 = vsel %vm2444, %v3738, 0
        %3751 = vmatpush.bf16.msra.mxu0 0
        %3752 = vmatpush.bf16.msra.mxu0 0
        %3753 = vmatpush.bf16.msra.mxu0 0
        %3754 = vmatpush.bf16.msra.mxu0 0
        %3755 = vmatpush.bf16.msra.mxu0 0
        %3756 = vmatpush.bf16.msra.mxu0 0
        %3757 = vmatpush.bf16.msra.mxu0 %v3742
        %3758 = vmatpush.bf16.msra.mxu0 %v3740
        %3759 = vmatmul.bf16.gmra.mxu0 %v3746
        %v3760 = vpop.f32.mrf.mxu0
        %v3761 = vadd.f32 0.0, %v3760
        %v3762 = vpop.f32.mrf.mxu0
        %v3763 = vadd.f32 0.0, %v3762
        %3764 = vmatmul.bf16.gmra.mxu0 %v3749
        %v3765 = vpop.f32.mrf.mxu0
        %v3766 = vadd.f32 0.0, %v3765
        %v3767 = vpop.f32.mrf.mxu0
        %v3768 = vadd.f32 0.0, %v3767
        %3769 = vdwg.mxu0
        %v3770 = vpack.c.bf16 %v3763, %v3761
        %v3771 = vpack.c.bf16 %v3768, %v3766
        %v3772 = vld [vmem:[%s2 + $0x1e0] sm:$0xff]
        %v3773 = vld [vmem:[%s2 + $0x1e8] sm:$0xf]
        %v3774 = vld [vmem:[%s2 + $0x1ec] sm:$0xff]
        %v3775 = vld [vmem:[%s2 + $0x1f4] sm:$0xf]
        %v3776 = vld [vmem:[%s2 + $0x1f8] sm:$0xff]
        %v3777 = vld [vmem:[%s2 + $0x200] sm:$0xf]
        %v3778 = vld [vmem:[%s2 + $0x204] sm:$0xff]
        %v3779 = vld [vmem:[%s2 + $0x20c] sm:$0xf]
        %v3780 = vld [vmem:[%s2 + $0x210] sm:$0xff]
        %v3781 = vld [vmem:[%s2 + $0x218] sm:$0xf]
        %v3782 = vld [vmem:[%s2 + $0x21c] sm:$0xff]
        %v3783 = vld [vmem:[%s2 + $0x224] sm:$0xf]
        %v3784 = vld [vmem:[%s2 + $0x228] sm:$0xff]
        %v3785 = vld [vmem:[%s2 + $0x230] sm:$0xf]
        %v3786 = vld [vmem:[%s2 + $0x234] sm:$0xff]
        %v3787 = vld [vmem:[%s2 + $0x23c] sm:$0xf]
        %v3804 = vunpack.c.l.b16 %v3772
        %v3805 = vunpack.c.h.b16 %v3772
        %v3806 = vunpack.c.l.b16 %v3773
        %v3807 = vunpack.c.l.b16 %v3774
        %v3808 = vunpack.c.h.b16 %v3774
        %v3809 = vunpack.c.l.b16 %v3775
        %v3810 = vunpack.c.l.b16 %v3776
        %v3811 = vunpack.c.h.b16 %v3776
        %v3812 = vunpack.c.l.b16 %v3777
        %v3813 = vunpack.c.l.b16 %v3778
        %v3814 = vunpack.c.h.b16 %v3778
        %v3815 = vunpack.c.l.b16 %v3779
        %v3816 = vunpack.c.l.b16 %v3780
        %v3817 = vunpack.c.h.b16 %v3780
        %v3818 = vunpack.c.l.b16 %v3781
        %v3819 = vunpack.c.l.b16 %v3782
        %v3820 = vunpack.c.h.b16 %v3782
        %v3821 = vunpack.c.l.b16 %v3783
        %v3822 = vunpack.c.l.b16 %v3784
        %v3823 = vunpack.c.h.b16 %v3784
        %v3824 = vunpack.c.l.b16 %v3785
        %v3825 = vunpack.c.l.b16 %v3786
        %v3826 = vunpack.c.h.b16 %v3786
        %v3827 = vunpack.c.l.b16 %v3787
        %v3828 = vpack.c.b16 %v3807, %v3804
        %v3829 = vpack.c.b16 %v3808, %v3805
        %v3830 = vpack.c.b16 %v3809, %v3806
        %v3831 = vpack.c.b16 %v3813, %v3810
        %v3832 = vpack.c.b16 %v3814, %v3811
        %v3833 = vpack.c.b16 %v3815, %v3812
        %v3834 = vpack.c.b16 %v3819, %v3816
        %v3835 = vpack.c.b16 %v3820, %v3817
        %v3836 = vpack.c.b16 %v3821, %v3818
        %v3837 = vpack.c.b16 %v3825, %v3822
        %v3838 = vpack.c.b16 %v3826, %v3823
        %v3839 = vpack.c.b16 %v3827, %v3824
        %v3853 = vsel %vm2177, %v3770, 0
        %v3856 = vsel %vm2177, %v3771, 0
        %3858 = vmatpush.bf16.msra.mxu0 0
        %3859 = vmatpush.bf16.msra.mxu0 0
        %3860 = vmatpush.bf16.msra.mxu0 0
        %3861 = vmatpush.bf16.msra.mxu0 0
        %3862 = vmatpush.bf16.msra.mxu0 %v3837
        %3863 = vmatpush.bf16.msra.mxu0 %v3834
        %3864 = vmatpush.bf16.msra.mxu0 %v3831
        %3865 = vmatpush.bf16.msra.mxu0 %v3828
        %3866 = vmatmul.bf16.gmra.mxu0 %v3853
        %v3867 = vpop.f32.mrf.mxu0
        %v3868 = vadd.f32 0.0, %v3867
        %v3869 = vpop.f32.mrf.mxu0
        %v3870 = vadd.f32 0.0, %v3869
        %3871 = vmatmul.bf16.gmra.mxu0 %v3856
        %v3872 = vpop.f32.mrf.mxu0
        %v3873 = vadd.f32 0.0, %v3872
        %v3874 = vpop.f32.mrf.mxu0
        %v3875 = vadd.f32 0.0, %v3874
        %3876 = vdwg.mxu0
        %3877 = vmatpush.bf16.msra.mxu0 0
        %3878 = vmatpush.bf16.msra.mxu0 0
        %3879 = vmatpush.bf16.msra.mxu0 0
        %3880 = vmatpush.bf16.msra.mxu0 0
        %3881 = vmatpush.bf16.msra.mxu0 %v3838
        %3882 = vmatpush.bf16.msra.mxu0 %v3835
        %3883 = vmatpush.bf16.msra.mxu0 %v3832
        %3884 = vmatpush.bf16.msra.mxu0 %v3829
        %3885 = vmatmul.bf16.gmra.mxu0 %v3853
        %v3886 = vpop.f32.mrf.mxu0
        %v3887 = vadd.f32 0.0, %v3886
        %v3888 = vpop.f32.mrf.mxu0
        %v3889 = vadd.f32 0.0, %v3888
        %3890 = vmatmul.bf16.gmra.mxu0 %v3856
        %v3891 = vpop.f32.mrf.mxu0
        %v3892 = vadd.f32 0.0, %v3891
        %v3893 = vpop.f32.mrf.mxu0
        %v3894 = vadd.f32 0.0, %v3893
        %3895 = vdwg.mxu0
        %3896 = vmatpush.bf16.msra.mxu0 0
        %3897 = vmatpush.bf16.msra.mxu0 0
        %3898 = vmatpush.bf16.msra.mxu0 0
        %3899 = vmatpush.bf16.msra.mxu0 0
        %3900 = vmatpush.bf16.msra.mxu0 %v3839
        %3901 = vmatpush.bf16.msra.mxu0 %v3836
        %3902 = vmatpush.bf16.msra.mxu0 %v3833
        %3903 = vmatpush.bf16.msra.mxu0 %v3830
        %3904 = vmatmul.bf16.gmra.mxu0 %v3853
        %v3905 = vpop.f32.mrf.mxu0
        %v3906 = vadd.f32 0.0, %v3905
        %v3907 = vpop.f32.mrf.mxu0
        %v3908 = vadd.f32 0.0, %v3907
        %3909 = vmatmul.bf16.gmra.mxu0 %v3856
        %v3910 = vpop.f32.mrf.mxu0
        %v3911 = vadd.f32 0.0, %v3910
        %v3912 = vpop.f32.mrf.mxu0
        %v3913 = vadd.f32 0.0, %v3912
        %3914 = vdwg.mxu0
        %v3915 = vadd.f32 %v3717, %v3868
        %v3916 = vadd.f32 %v3718, %v3887
        %v3917 = vadd.f32 %v3719, %v3906
        %v3918 = vadd.f32 %v3720, %v3870
        %v3919 = vadd.f32 %v3721, %v3889
        %v3920 = vadd.f32 %v3722, %v3908
        %v3921 = vadd.f32 %v3723, %v3873
        %v3922 = vadd.f32 %v3724, %v3892
        %v3923 = vadd.f32 %v3725, %v3911
        %v3924 = vadd.f32 %v3726, %v3875
        %v3925 = vadd.f32 %v3727, %v3894
        %v3926 = vadd.f32 %v3728, %v3913
        %v3927 = vld [vmem:[%s3] sm:$0x7]
        %v3929 = vperm.slane %v3927, 0
        %v3930 = vperm.slane %v3927, 1
        %v3931 = vperm.slane %v3927, 2
        %v3935 = vadd.f32 %v3915, %v3929
        %v3936 = vadd.f32 %v3916, %v3930
        %v3937 = vadd.f32 %v3917, %v3931
        %v3938 = vadd.f32 %v3918, %v3929
        %v3939 = vadd.f32 %v3919, %v3930
        %v3940 = vadd.f32 %v3920, %v3931
        %v3941 = vadd.f32 %v3921, %v3929
        %v3942 = vadd.f32 %v3922, %v3930
        %v3943 = vadd.f32 %v3923, %v3931
        %v3944 = vadd.f32 %v3924, %v3929
        %v3945 = vadd.f32 %v3925, %v3930
        %v3946 = vadd.f32 %v3926, %v3931
        %3947 = vst [vmem:[%s190] sm:$0xff] %v3935
        %3948 = vst [vmem:[%s190 + $0x8] sm:$0xff] %v3936
        %3949 = vst [vmem:[%s190 + $0x10] sm:$0xff] %v3937
        %3950 = vst [vmem:[%s190 + $0x18] sm:$0xff] %v3938
        %3951 = vst [vmem:[%s190 + $0x20] sm:$0xff] %v3939
        %3952 = vst [vmem:[%s190 + $0x28] sm:$0xff] %v3940
        %3953 = vst [vmem:[%s190 + $0x30] sm:$0xff] %v3941
        %3954 = vst [vmem:[%s190 + $0x38] sm:$0xff] %v3942
        %3955 = vst [vmem:[%s190 + $0x40] sm:$0xff] %v3943
        %3956 = vst [vmem:[%s190 + $0x48] sm:$0xff] %v3944
        %3957 = vst [vmem:[%s190 + $0x50] sm:$0xff] %v3945
        %3958 = vst [vmem:[%s190 + $0x58] sm:$0xff] %v3946
        %s3959 = sand.u32 %s115, 1
        %s3960 = scalar_lea.sflag [#allocation4], %s3959
        %s3961 = sand.u32 %s115, 1
        %s3962 = smul.addr %s3961, 96
        %s3963 = scalar_lea.vmem [#allocation3], %s3962
        // Predicated region
        $region37: #{multi_head_attention.1} parent=35 // pred_check
          %p3964 = pneg %p125
        $region38: #{multi_head_attention.1} parent=35 // pred_check_branch
          %3966 = sbr.rel (%p3964) target = $region40
        $region39: #{multi_head_attention.1} parent=35 // pred_region
          %3968 = vsyncadd %s3960, 0
          %s3969 = smul.addr %s18, 12
          %s3970 = smul.addr %s3969, 8
          %s3971 = scalar_lea.hbm %s4, %s3970
          %s3972 = sshll.u32 %s3963, 4
          %s3973 = int_to_ptr.vmem [resolvable:$true] %s3972
          %s3974 = sshll.u32 %s3971, 4
          %s3975 = int_to_ptr.hbm [resolvable:$true] %s3974
          %3980 = dma.vmem_to_hbm [thread:$0]  %s3973, 1536, %s3975, %s3960, 384, 384, 24
        $region40: #{multi_head_attention.1} parent=35 // pred_fallthru
          _
      $region36: #{multi_head_attention.1} parent=5 // pred_fallthru
        _
      %p3981 = scmp.le.s32.totalorder 2, %s13
      // Predicated region
      $region41: #{multi_head_attention.1} parent=5 // pred_check
        %p3982 = pneg %p3981
      $region42: #{multi_head_attention.1} parent=5 // pred_check_branch
        %3984 = sbr.rel (%p3982) target = $region44
      $region43: #{multi_head_attention.1} parent=5 // pred_region
        %s3985 = ssub.s32 %s13, 2
        // Predicated region
        $region45: #{multi_head_attention.1} parent=43 // pred_check
          %p3986 = pneg %p131
        $region46: #{multi_head_attention.1} parent=43 // pred_check_branch
          %3988 = sbr.rel (%p3986) target = $region48
        $region47: #{multi_head_attention.1} parent=43 // pred_region
          %s3989 = sand.u32 %s116, 1
          %s3990 = scalar_lea.sflag [#allocation4], %s3989
          %s3991 = sand.u32 %s116, 1
          %s3992 = smul.addr %s3991, 96
          %s3993 = scalar_lea.vmem [#allocation3], %s3992
          %3995 = dma.done %s3990, 1536
        $region48: #{multi_head_attention.1} parent=43 // pred_fallthru
          _
      $region44: #{multi_head_attention.1} parent=5 // pred_fallthru
        _
    $region6: #{multi_head_attention.1} parent=1 // loop_footer
      %s17 = sadd.s32 1, %s13
    $region7: #{multi_head_attention.1} parent=1 // loop_footer_branch
      %12 = sbr.rel target = $region3
    $region8: #{multi_head_attention.1} parent=1 // loop_exit
      _
    %3996 = vsyncpa [#allocation4], 1
    %s3997 = scalar_lea.sflag [#allocation4], 1
    %3998 = vsyncpa %s3997, 1

</llo_original>
